<compile_context>
chip_gen: v5e
topology: v5e:2x2
jax: 0.10.0
libtpu: 0.0.40
codegen_flags: <defaults>
</compile_context>

<pallas_src>
import functools

import jax
import jax.numpy as jnp
from jax.experimental import pallas as pl
from jax.experimental.pallas import tpu as pltpu


# ----------------------------- in-kernel helpers -----------------------------

def _pad_cols_zero(a):
    """Zero-pad one column on each side of axis 1.  a: (R, C, K) -> (R, C+2, K)."""
    z = jnp.zeros((a.shape[0], 1, a.shape[2]), a.dtype)
    return jnp.concatenate([z, a, z], axis=1)


def _conv3x3_bias_relu(xpad, w_flat, bias, out_rows, out_cols):
    """3x3 conv (stride 1) + bias + ReLU on a pre-padded window as ONE MXU matmul.

    xpad   : (out_rows + 2, out_cols + 2, C)  spatially padded input window
    w_flat : (9 * C, K)                       HWIO weights flattened (dy-major, dx, ci)
    bias   : (1, K)
    returns: (out_rows, out_cols, K) float32
    """
    c = xpad.shape[-1]
    patches = jnp.concatenate(
        [xpad[dy:dy + out_rows, dx:dx + out_cols, :]
         for dy in range(3) for dx in range(3)],
        axis=-1).reshape(out_rows * out_cols, 9 * c)
    acc = jnp.dot(patches, w_flat, preferred_element_type=jnp.float32)
    y = jnp.maximum(acc + bias.astype(jnp.float32), 0.0)
    return y.reshape(out_rows, out_cols, w_flat.shape[-1])


# ----------------------------- fused Pallas kernel -----------------------------

def up2_doubleconv_kernel(xc_ref, xt2_ref, xt1_ref, xb1_ref, xb2_ref,
                          w1_ref, bias1_ref, w2_ref, bias2_ref, o_ref):
    """bilinear x2 (align_corners=False) -> conv3x3(pad=1)+bias+ReLU -> conv3x3(pad=1)+bias+ReLU.

    xc_ref  : (1, BR, W, Cin)  input rows [r*BR, r*BR + BR)
    xt2/xt1 : (1, 1,  W, Cin)  input rows max(r*BR-2, 0), max(r*BR-1, 0)   (bilinear edge clamp)
    xb1/xb2 : (1, 1,  W, Cin)  input rows min(r*BR+BR, H-1), min(r*BR+BR+1, H-1)
    w1_ref  : (9*Cin, Mid)     conv1 weights (BN1 scale folded), im2col order (dy, dx, ci)
    bias1   : (1, Mid)         folded BN1 bias
    w2_ref  : (9*Mid, Cout)    conv2 weights (BN2 scale folded)
    bias2   : (1, Cout)
    o_ref   : (1, 2*BR, 2*W, Cout)  final output rows [2*r*BR, 2*r*BR + 2*BR)
    """
    r = pl.program_id(1)
    R = pl.num_programs(1)
    _, BR, W, Cin = xc_ref.shape
    f32 = jnp.float32

    # (BR+4)-row, (W+2)-col edge-clamped window of the ORIGINAL input (bilinear mixing in f32).
    xw = jnp.concatenate([xt2_ref[0], xt1_ref[0], xc_ref[0], xb1_ref[0], xb2_ref[0]],
                         axis=0).astype(f32)                                # (BR+4, W, Cin)
    xw = jnp.concatenate([xw[:, 0:1], xw, xw[:, W - 1:W]], axis=1)          # (BR+4, W+2, Cin)

    # Separable bilinear x2 taps (align_corners=False):
    #   up[2g]   = 0.25*in[g-1] + 0.75*in[g]
    #   up[2g+1] = 0.75*in[g]   + 0.25*in[g+1]
    lo, mi, hi = xw[0:BR + 2], xw[1:BR + 3], xw[2:BR + 4]
    ev = 0.25 * lo + 0.75 * mi        # up rows 2*(r*BR - 1 + k),     k = 0..BR+1
    od = 0.75 * mi + 0.25 * hi        # up rows 2*(r*BR - 1 + k) + 1

    # conv1 zero-pads the UPSAMPLED image: up rows -2/-1 (only at r==0) and 2H/2H+1 (only at
    # r==R-1) must read as zero.
    keep_f = jnp.where(r == 0, 0.0, 1.0).astype(f32)
    keep_l = jnp.where(r == R - 1, 0.0, 1.0).astype(f32)
    ev = jnp.concatenate([ev[0:1] * keep_f, ev[1:BR + 1], ev[BR + 1:] * keep_l], axis=0)
    od = jnp.concatenate([od[0:1] * keep_f, od[1:BR + 1], od[BR + 1:] * keep_l], axis=0)

    def col_mix(p):                    # p is column edge-padded to W+2
        return (0.25 * p[:, 0:W] + 0.75 * p[:, 1:W + 1],
                0.75 * p[:, 1:W + 1] + 0.25 * p[:, 2:W + 2])

    def ileave(a0, a1, axis):          # a0 at even positions, a1 at odd positions
        s = jnp.stack([a0, a1], axis=axis + 1)
        shp = list(a0.shape)
        shp[axis] *= 2
        return s.reshape(shp)

    ev_e, ev_o = col_mix(ev)
    od_e, od_o = col_mix(od)
    # up rows 2*r*BR-2 .. 2*r*BR+2*BR+1 (even rows from `ev`, odd rows from `od`).
    up = ileave(ileave(ev_e, ev_o, 1), ileave(od_e, od_o, 1), 0)            # (2BR+4, 2W, Cin)

    NY, OH, OW = 2 * BR + 2, 2 * BR, 2 * W
    up = up.astype(w1_ref.dtype)

    # conv1 + BN1(bias) + ReLU -> intermediate rows 2*r*BR-1 .. 2*r*BR+2*BR (f32 accumulation).
    y1 = _conv3x3_bias_relu(_pad_cols_zero(up), w1_ref[...], bias1_ref[...], NY, OW)
    # conv2 zero-pads the intermediate image: its rows -1 (r==0) and 2H (r==R-1) are pad rows.
    y1 = jnp.concatenate([y1[0:1] * keep_f, y1[1:NY - 1], y1[NY - 1:] * keep_l], axis=0)
    y1 = y1.astype(w2_ref.dtype)

    # conv2 + BN2(bias) + ReLU -> final output rows 2*r*BR .. 2*r*BR+2*BR-1.
    y2 = _conv3x3_bias_relu(_pad_cols_zero(y1), w2_ref[...], bias2_ref[...], OH, OW)
    o_ref[0] = y2.astype(o_ref.dtype)


# ----------------------------- generation-aware sizing -----------------------------

def _vmem_limit_bytes():
    """Scoped-VMEM limit: ~96 MiB on 128-MiB parts (v5e/v6e), ~48 MiB on 64-MiB v7x."""
    cap = 128 * 1024 * 1024
    try:
        cap = int(pltpu.get_tpu_info().vmem_capacity_bytes)
    except Exception:
        pass
    return max(32 * 1024 * 1024, min((cap * 3) // 4, 96 * 1024 * 1024))


def _est_step_vmem_bytes(br, w, cin, mid, cout, itemsize=4):
    """Rough per-grid-step VMEM footprint of the fused kernel (drives BR selection)."""
    nu, ny, oh, ow = 2 * br + 4, 2 * br + 2, 2 * br, 2 * w
    in_blocks = 2 * (br + 4) * w * cin                   # main + 4 halo rows, double-buffered
    weights = 9 * cin * mid + mid + 9 * mid * cout + cout
    window = (br + 4) * (w + 2) * cin                    # clamped input window
    mix = 3 * (br + 2) * (w + 2) * cin                   # ev/od taps + transients
    up = 2 * nu * (ow + 2) * cin                         # interleaved + zero-padded up window
    p1 = ny * ow * 9 * cin                               # conv1 im2col matrix
    y1 = 2 * ny * (ow + 2) * mid                         # intermediate + padded copy
    p2 = oh * ow * 9 * mid                               # conv2 im2col matrix
    out = 2 * oh * ow * cout                             # double-buffered output block
    return itemsize * (in_blocks + weights + window + mix + up + p1 + y1 + p2 + out)


def _pick_row_block(h, w, cin, mid, cout, target, budget, itemsize=4):
    """Largest divisor of H that fits the VMEM budget without exceeding `target`.

    If H only has tiny divisors below `target` (e.g. prime H), take the largest fitting divisor
    instead so we do not fall into the step-overhead-dominated regime.
    """
    divisors = [d for d in range(1, h + 1) if h % d == 0]
    fits = [d for d in divisors
            if _est_step_vmem_bytes(d, w, cin, mid, cout, itemsize) <= budget]
    if not fits:
        return 1
    under = [d for d in fits if d <= target]
    best = max(under) if under else min(fits)
    if best < min(target, 8, h):
        best = max(fits)
    return best


# ----------------------------- wrapper -----------------------------

def up2_doubleconv(x, w1f, bias1, w2f, bias2, *, row_block=32):
    """Fused UpSample block.  x: (N, H, W, Cin) NHWC -> (N, 2H, 2W, Cout)."""
    N, H, W, Cin = x.shape
    Mid = w1f.shape[-1]
    Cout = w2f.shape[-1]

    vmem_limit = _vmem_limit_bytes()
    itemsize = jnp.dtype(x.dtype).itemsize
    BR = _pick_row_block(H, W, Cin, Mid, Cout, row_block,
                         budget=int(vmem_limit * 0.7), itemsize=itemsize)
    R = H // BR
    grid = (N, R)

    flops = 2 * N * (2 * H) * (2 * W) * 9 * (Cin * Mid + Mid * Cout)
    bytes_accessed = itemsize * (
        N * (H + 4 * R) * W * Cin                        # input incl. per-step halo re-reads
        + w1f.size + w2f.size + Mid + Cout
        + N * 4 * H * W * Cout)                          # single fused HBM write of the output

    return pl.pallas_call(
        up2_doubleconv_kernel,
        out_shape=jax.ShapeDtypeStruct((N, 2 * H, 2 * W, Cout), x.dtype),
        grid=grid,
        in_specs=[
            pl.BlockSpec((1, BR, W, Cin), lambda n, r: (n, r, 0, 0)),
            pl.BlockSpec((1, 1, W, Cin),
                         lambda n, r: (n, jnp.maximum(r * BR - 2, 0), 0, 0)),
            pl.BlockSpec((1, 1, W, Cin),
                         lambda n, r: (n, jnp.maximum(r * BR - 1, 0), 0, 0)),
            pl.BlockSpec((1, 1, W, Cin),
                         lambda n, r: (n, jnp.minimum(r * BR + BR, H - 1), 0, 0)),
            pl.BlockSpec((1, 1, W, Cin),
                         lambda n, r: (n, jnp.minimum(r * BR + BR + 1, H - 1), 0, 0)),
            pl.BlockSpec((9 * Cin, Mid), lambda n, r: (0, 0)),
            pl.BlockSpec((1, Mid), lambda n, r: (0, 0)),
            pl.BlockSpec((9 * Mid, Cout), lambda n, r: (0, 0)),
            pl.BlockSpec((1, Cout), lambda n, r: (0, 0)),
        ],
        out_specs=pl.BlockSpec((1, 2 * BR, 2 * W, Cout), lambda n, r: (n, r, 0, 0)),
        compiler_params=pltpu.CompilerParams(
            dimension_semantics=("parallel", "parallel"),
            vmem_limit_bytes=vmem_limit),
        cost_estimate=pl.CostEstimate(flops=flops, transcendentals=0,
                                      bytes_accessed=bytes_accessed),
    )(x, x, x, x, x, w1f, bias1.reshape(1, Mid), w2f, bias2.reshape(1, Cout))


def fold_bn(gamma, beta, mean, var, eps=1e-5):
    scale = gamma * jax.lax.rsqrt(var + eps)
    bias = beta - mean * scale
    return scale, bias


def upsample_forward(x_nchw, params, *, row_block=32, operand_dtype=None):
    """UpSample(bilinear=True).forward: bilinear x2 -> DoubleConv(in, out, in // 2).

    operand_dtype: optionally cast activations/weights (e.g. jnp.bfloat16) for MXU-rated
    throughput and halved HBM/VMEM traffic; bilinear mixing and matmul accumulation stay f32.
    """
    x = jnp.transpose(x_nchw, (0, 2, 3, 1))               # NCHW -> NHWC (C on the 128-lane axis)
    Cin = x.shape[-1]
    s1, b1 = fold_bn(*params["bn1"])
    s2, b2 = fold_bn(*params["bn2"])
    w1 = params["w1"] * s1[None, None, None, :]            # fold eval-mode BN scale into conv
    w2 = params["w2"] * s2[None, None, None, :]
    Mid, Cout = w1.shape[-1], w2.shape[-1]
    w1f = w1.reshape(9 * Cin, Mid)                         # (dy, dx, ci) order matches im2col
    w2f = w2.reshape(9 * Mid, Cout)
    if operand_dtype is not None:
        x = x.astype(operand_dtype)
        w1f = w1f.astype(operand_dtype)
        w2f = w2f.astype(operand_dtype)
    y = up2_doubleconv(x, w1f, b1, w2f, b2, row_block=row_block)
    return jnp.transpose(y, (0, 3, 1, 2))                  # NHWC -> NCHW


# ----------------------------- params -----------------------------

def init_upsample_params(key, in_ch, out_ch, dtype=jnp.float32):
    mid_ch = in_ch // 2
    k = jax.random.split(key, 10)

    def conv_w(kk, cin, cout):  # HWIO
        bound = 1.0 / ((cin * 9) ** 0.5)
        return jax.random.uniform(kk, (3, 3, cin, cout), dtype, -bound, bound)

    def bn(k1, k2, k3, k4, c):
        gamma = 1.0 + 0.1 * jax.random.normal(k1, (c,), dtype)
        beta = 0.1 * jax.random.normal(k2, (c,), dtype)
        mean = 0.1 * jax.random.normal(k3, (c,), dtype)
        var = jax.random.uniform(k4, (c,), dtype, 0.5, 1.5)
        return gamma, beta, mean, var

    return {
        "w1": conv_w(k[0], in_ch, mid_ch),
        "bn1": bn(k[1], k[2], k[3], k[4], mid_ch),
        "w2": conv_w(k[5], mid_ch, out_ch),
        "bn2": bn(k[6], k[7], k[8], k[9], out_ch),
    }


# ----------------------------- pure-JAX reference -----------------------------

def ref_forward(x_nchw, params):
    x = jnp.transpose(x_nchw, (0, 2, 3, 1))

    def up(x):
        N, H, W, C = x.shape

        def idx(out_size, in_size):
            o = jnp.arange(out_size, dtype=jnp.float32)
            src = jnp.maximum((o + 0.5) / 2.0 - 0.5, 0.0)   # PyTorch align_corners=False
            i0 = jnp.floor(src).astype(jnp.int32)
            lam = src - i0.astype(jnp.float32)
            i0 = jnp.clip(i0, 0, in_size - 1)
            i1 = jnp.clip(i0 + 1, 0, in_size - 1)
            return i0, i1, lam

        r0, r1, lr = idx(2 * H, H)
        c0, c1, lc = idx(2 * W, W)
        xr = (x[:, r0] * (1.0 - lr)[None, :, None, None]
              + x[:, r1] * lr[None, :, None, None])
        return (xr[:, :, c0] * (1.0 - lc)[None, None, :, None]
                + xr[:, :, c1] * lc[None, None, :, None])

    def conv(x, w, scale, bias):
        y = jax.lax.conv_general_dilated(
            x, w, (1, 1), "SAME",
            dimension_numbers=("NHWC", "HWIO", "NHWC"),
            precision=jax.lax.Precision.HIGHEST)
        return jnp.maximum(y * scale + bias, 0.0)

    x = up(x)
    s1, b1 = fold_bn(*params["bn1"])
    x = conv(x, params["w1"], s1, b1)
    s2, b2 = fold_bn(*params["bn2"])
    x = conv(x, params["w2"], s2, b2)
    return jnp.transpose(x, (0, 3, 1, 2))


# ----------------------------- main -----------------------------

if __name__ == "__main__":
    key = jax.random.PRNGKey(0)
    kx, kp = jax.random.split(key)

    N, C_IN, H, W = 2, 4, 16, 16
    C_OUT = 8

    x = jax.random.normal(kx, (N, C_IN, H, W), jnp.float32)
    params = init_upsample_params(kp, C_IN, C_OUT)

    # row_block=4 at these tiny test shapes so the run exercises the row-tiled grid
    # (top-edge, interior and bottom-edge blocks); the production default is 32.
    fwd = jax.jit(functools.partial(upsample_forward, row_block=4))
    y = jax.block_until_ready(fwd(x, params))
    assert y.shape == (N, C_OUT, 2 * H, 2 * W), y.shape

    y_ref = ref_forward(x, params)
    err = float(jnp.max(jnp.abs(y - y_ref)))
    if err > 1e-3:
        raise AssertionError(f"mismatch vs reference: max|diff|={err}")

    print("KERNEL_OK")
</pallas_src>

<mosaic_0001>
module attributes {stable_mosaic.version = 11 : i64} {
  func.func @up2_doubleconv_kernel(%arg0: i32, %arg1: i32, %arg2: memref<1x4x16x4xf32, #tpu.memory_space<vmem>>, %arg3: memref<1x1x16x4xf32, #tpu.memory_space<vmem>>, %arg4: memref<1x1x16x4xf32, #tpu.memory_space<vmem>>, %arg5: memref<1x1x16x4xf32, #tpu.memory_space<vmem>>, %arg6: memref<1x1x16x4xf32, #tpu.memory_space<vmem>>, %arg7: memref<36x2xf32, #tpu.memory_space<vmem>>, %arg8: memref<1x2xf32, #tpu.memory_space<vmem>>, %arg9: memref<18x8xf32, #tpu.memory_space<vmem>>, %arg10: memref<1x8xf32, #tpu.memory_space<vmem>>, %arg11: memref<1x8x32x8xf32, #tpu.memory_space<vmem>>) attributes {dimension_semantics = [#tpu.dimension_semantics<parallel>, #tpu.dimension_semantics<parallel>], iteration_bounds = array<i64: 2, 4>, scalar_prefetch = 0 : i64, scratch_operands = 0 : i64, tpu.core_type = #tpu.core_type<tc>, window_params = [{transform_indices = @transform_0, window_bounds = array<i64: 1, 4, 16, 4>}, {transform_indices = @transform_1, window_bounds = array<i64: 1, 1, 16, 4>}, {transform_indices = @transform_2, window_bounds = array<i64: 1, 1, 16, 4>}, {transform_indices = @transform_3, window_bounds = array<i64: 1, 1, 16, 4>}, {transform_indices = @transform_4, window_bounds = array<i64: 1, 1, 16, 4>}, {pipeline_mode = #tpu.pipeline_mode<synchronous>, transform_indices = @transform_5, window_bounds = array<i64: 36, 2>}, {pipeline_mode = #tpu.pipeline_mode<synchronous>, transform_indices = @transform_6, window_bounds = array<i64: 1, 2>}, {pipeline_mode = #tpu.pipeline_mode<synchronous>, transform_indices = @transform_7, window_bounds = array<i64: 18, 8>}, {pipeline_mode = #tpu.pipeline_mode<synchronous>, transform_indices = @transform_8, window_bounds = array<i64: 1, 8>}, {transform_indices = @transform_9, window_bounds = array<i64: 1, 8, 32, 8>}]} {
    %c0 = arith.constant 0 : index
    %c0_0 = arith.constant 0 : index
    %c0_1 = arith.constant 0 : index
    %c0_2 = arith.constant 0 : index
    %0 = vector.load %arg3[%c0, %c0_0, %c0_1, %c0_2] : memref<1x1x16x4xf32, #tpu.memory_space<vmem>>, vector<1x1x16x4xf32>
    %1 = vector.shape_cast %0 : vector<1x1x16x4xf32> to vector<1x16x4xf32>
    %c0_3 = arith.constant 0 : index
    %c0_4 = arith.constant 0 : index
    %c0_5 = arith.constant 0 : index
    %c0_6 = arith.constant 0 : index
    %2 = vector.load %arg4[%c0_3, %c0_4, %c0_5, %c0_6] : memref<1x1x16x4xf32, #tpu.memory_space<vmem>>, vector<1x1x16x4xf32>
    %3 = vector.shape_cast %2 : vector<1x1x16x4xf32> to vector<1x16x4xf32>
    %c0_7 = arith.constant 0 : index
    %c0_8 = arith.constant 0 : index
    %c0_9 = arith.constant 0 : index
    %c0_10 = arith.constant 0 : index
    %4 = vector.load %arg2[%c0_7, %c0_8, %c0_9, %c0_10] : memref<1x4x16x4xf32, #tpu.memory_space<vmem>>, vector<1x4x16x4xf32>
    %5 = vector.shape_cast %4 : vector<1x4x16x4xf32> to vector<4x16x4xf32>
    %c0_11 = arith.constant 0 : index
    %c0_12 = arith.constant 0 : index
    %c0_13 = arith.constant 0 : index
    %c0_14 = arith.constant 0 : index
    %6 = vector.load %arg5[%c0_11, %c0_12, %c0_13, %c0_14] : memref<1x1x16x4xf32, #tpu.memory_space<vmem>>, vector<1x1x16x4xf32>
    %7 = vector.shape_cast %6 : vector<1x1x16x4xf32> to vector<1x16x4xf32>
    %c0_15 = arith.constant 0 : index
    %c0_16 = arith.constant 0 : index
    %c0_17 = arith.constant 0 : index
    %c0_18 = arith.constant 0 : index
    %8 = vector.load %arg6[%c0_15, %c0_16, %c0_17, %c0_18] : memref<1x1x16x4xf32, #tpu.memory_space<vmem>>, vector<1x1x16x4xf32>
    %9 = vector.shape_cast %8 : vector<1x1x16x4xf32> to vector<1x16x4xf32>
    %10 = tpu.concatenate %1, %3, %5, %7, %9 in 0 : vector<1x16x4xf32>, vector<1x16x4xf32>, vector<4x16x4xf32>, vector<1x16x4xf32>, vector<1x16x4xf32> -> vector<8x16x4xf32>
    %11 = vector.extract_strided_slice %10 {offsets = [0, 0, 0], sizes = [8, 1, 4], strides = [1, 1, 1]} : vector<8x16x4xf32> to vector<8x1x4xf32>
    %12 = vector.extract_strided_slice %10 {offsets = [0, 15, 0], sizes = [8, 1, 4], strides = [1, 1, 1]} : vector<8x16x4xf32> to vector<8x1x4xf32>
    %13 = tpu.concatenate %11, %10, %12 in 1 : vector<8x1x4xf32>, vector<8x16x4xf32>, vector<8x1x4xf32> -> vector<8x18x4xf32>
    %14 = vector.extract_strided_slice %13 {offsets = [0, 0, 0], sizes = [6, 18, 4], strides = [1, 1, 1]} : vector<8x18x4xf32> to vector<6x18x4xf32>
    %15 = vector.extract_strided_slice %13 {offsets = [1, 0, 0], sizes = [6, 18, 4], strides = [1, 1, 1]} : vector<8x18x4xf32> to vector<6x18x4xf32>
    %16 = vector.extract_strided_slice %13 {offsets = [2, 0, 0], sizes = [6, 18, 4], strides = [1, 1, 1]} : vector<8x18x4xf32> to vector<6x18x4xf32>
    %cst = arith.constant 2.500000e-01 : f32
    %17 = vector.broadcast %cst : f32 to vector<6x18x4xf32>
    %18 = arith.mulf %17, %14 : vector<6x18x4xf32>
    %cst_19 = arith.constant 7.500000e-01 : f32
    %19 = vector.broadcast %cst_19 : f32 to vector<6x18x4xf32>
    %20 = arith.mulf %19, %15 : vector<6x18x4xf32>
    %21 = arith.addf %18, %20 : vector<6x18x4xf32>
    %cst_20 = arith.constant 7.500000e-01 : f32
    %22 = vector.broadcast %cst_20 : f32 to vector<6x18x4xf32>
    %23 = arith.mulf %22, %15 : vector<6x18x4xf32>
    %cst_21 = arith.constant 2.500000e-01 : f32
    %24 = vector.broadcast %cst_21 : f32 to vector<6x18x4xf32>
    %25 = arith.mulf %24, %16 : vector<6x18x4xf32>
    %26 = arith.addf %23, %25 : vector<6x18x4xf32>
    %c0_i32 = arith.constant 0 : i32
    %27 = arith.cmpi eq, %arg1, %c0_i32 : i32
    %cst_22 = arith.constant 0.000000e+00 : f32
    %cst_23 = arith.constant 1.000000e+00 : f32
    %28 = arith.select %27, %cst_22, %cst_23 : f32
    %c3_i32 = arith.constant 3 : i32
    %29 = arith.cmpi eq, %arg1, %c3_i32 : i32
    %cst_24 = arith.constant 0.000000e+00 : f32
    %cst_25 = arith.constant 1.000000e+00 : f32
    %30 = arith.select %29, %cst_24, %cst_25 : f32
    %31 = vector.extract_strided_slice %21 {offsets = [0, 0, 0], sizes = [1, 18, 4], strides = [1, 1, 1]} : vector<6x18x4xf32> to vector<1x18x4xf32>
    %32 = vector.broadcast %28 : f32 to vector<1x18x4xf32>
    %33 = arith.mulf %31, %32 : vector<1x18x4xf32>
    %34 = vector.extract_strided_slice %21 {offsets = [1, 0, 0], sizes = [4, 18, 4], strides = [1, 1, 1]} : vector<6x18x4xf32> to vector<4x18x4xf32>
    %35 = vector.extract_strided_slice %21 {offsets = [5, 0, 0], sizes = [1, 18, 4], strides = [1, 1, 1]} : vector<6x18x4xf32> to vector<1x18x4xf32>
    %36 = vector.broadcast %30 : f32 to vector<1x18x4xf32>
    %37 = arith.mulf %35, %36 : vector<1x18x4xf32>
    %38 = tpu.concatenate %33, %34, %37 in 0 : vector<1x18x4xf32>, vector<4x18x4xf32>, vector<1x18x4xf32> -> vector<6x18x4xf32>
    %39 = vector.extract_strided_slice %26 {offsets = [0, 0, 0], sizes = [1, 18, 4], strides = [1, 1, 1]} : vector<6x18x4xf32> to vector<1x18x4xf32>
    %40 = vector.broadcast %28 : f32 to vector<1x18x4xf32>
    %41 = arith.mulf %39, %40 : vector<1x18x4xf32>
    %42 = vector.extract_strided_slice %26 {offsets = [1, 0, 0], sizes = [4, 18, 4], strides = [1, 1, 1]} : vector<6x18x4xf32> to vector<4x18x4xf32>
    %43 = vector.extract_strided_slice %26 {offsets = [5, 0, 0], sizes = [1, 18, 4], strides = [1, 1, 1]} : vector<6x18x4xf32> to vector<1x18x4xf32>
    %44 = vector.broadcast %30 : f32 to vector<1x18x4xf32>
    %45 = arith.mulf %43, %44 : vector<1x18x4xf32>
    %46 = tpu.concatenate %41, %42, %45 in 0 : vector<1x18x4xf32>, vector<4x18x4xf32>, vector<1x18x4xf32> -> vector<6x18x4xf32>
    %47 = vector.extract_strided_slice %38 {offsets = [0, 0, 0], sizes = [6, 16, 4], strides = [1, 1, 1]} : vector<6x18x4xf32> to vector<6x16x4xf32>
    %cst_26 = arith.constant 2.500000e-01 : f32
    %48 = vector.broadcast %cst_26 : f32 to vector<6x16x4xf32>
    %49 = arith.mulf %48, %47 : vector<6x16x4xf32>
    %50 = vector.extract_strided_slice %38 {offsets = [0, 1, 0], sizes = [6, 16, 4], strides = [1, 1, 1]} : vector<6x18x4xf32> to vector<6x16x4xf32>
    %cst_27 = arith.constant 7.500000e-01 : f32
    %51 = vector.broadcast %cst_27 : f32 to vector<6x16x4xf32>
    %52 = arith.mulf %51, %50 : vector<6x16x4xf32>
    %53 = arith.addf %49, %52 : vector<6x16x4xf32>
    %54 = vector.extract_strided_slice %38 {offsets = [0, 1, 0], sizes = [6, 16, 4], strides = [1, 1, 1]} : vector<6x18x4xf32> to vector<6x16x4xf32>
    %cst_28 = arith.constant 7.500000e-01 : f32
    %55 = vector.broadcast %cst_28 : f32 to vector<6x16x4xf32>
    %56 = arith.mulf %55, %54 : vector<6x16x4xf32>
    %57 = vector.extract_strided_slice %38 {offsets = [0, 2, 0], sizes = [6, 16, 4], strides = [1, 1, 1]} : vector<6x18x4xf32> to vector<6x16x4xf32>
    %cst_29 = arith.constant 2.500000e-01 : f32
    %58 = vector.broadcast %cst_29 : f32 to vector<6x16x4xf32>
    %59 = arith.mulf %58, %57 : vector<6x16x4xf32>
    %60 = arith.addf %56, %59 : vector<6x16x4xf32>
    %61 = vector.extract_strided_slice %46 {offsets = [0, 0, 0], sizes = [6, 16, 4], strides = [1, 1, 1]} : vector<6x18x4xf32> to vector<6x16x4xf32>
    %cst_30 = arith.constant 2.500000e-01 : f32
    %62 = vector.broadcast %cst_30 : f32 to vector<6x16x4xf32>
    %63 = arith.mulf %62, %61 : vector<6x16x4xf32>
    %64 = vector.extract_strided_slice %46 {offsets = [0, 1, 0], sizes = [6, 16, 4], strides = [1, 1, 1]} : vector<6x18x4xf32> to vector<6x16x4xf32>
    %cst_31 = arith.constant 7.500000e-01 : f32
    %65 = vector.broadcast %cst_31 : f32 to vector<6x16x4xf32>
    %66 = arith.mulf %65, %64 : vector<6x16x4xf32>
    %67 = arith.addf %63, %66 : vector<6x16x4xf32>
    %68 = vector.extract_strided_slice %46 {offsets = [0, 1, 0], sizes = [6, 16, 4], strides = [1, 1, 1]} : vector<6x18x4xf32> to vector<6x16x4xf32>
    %cst_32 = arith.constant 7.500000e-01 : f32
    %69 = vector.broadcast %cst_32 : f32 to vector<6x16x4xf32>
    %70 = arith.mulf %69, %68 : vector<6x16x4xf32>
    %71 = vector.extract_strided_slice %46 {offsets = [0, 2, 0], sizes = [6, 16, 4], strides = [1, 1, 1]} : vector<6x18x4xf32> to vector<6x16x4xf32>
    %cst_33 = arith.constant 2.500000e-01 : f32
    %72 = vector.broadcast %cst_33 : f32 to vector<6x16x4xf32>
    %73 = arith.mulf %72, %71 : vector<6x16x4xf32>
    %74 = arith.addf %70, %73 : vector<6x16x4xf32>
    %75 = vector.shape_cast %53 : vector<6x16x4xf32> to vector<6x16x1x4xf32>
    %76 = vector.shape_cast %60 : vector<6x16x4xf32> to vector<6x16x1x4xf32>
    %77 = tpu.concatenate %75, %76 in 2 : vector<6x16x1x4xf32>, vector<6x16x1x4xf32> -> vector<6x16x2x4xf32>
    %78 = vector.shape_cast %77 : vector<6x16x2x4xf32> to vector<6x32x4xf32>
    %79 = vector.shape_cast %67 : vector<6x16x4xf32> to vector<6x16x1x4xf32>
    %80 = vector.shape_cast %74 : vector<6x16x4xf32> to vector<6x16x1x4xf32>
    %81 = tpu.concatenate %79, %80 in 2 : vector<6x16x1x4xf32>, vector<6x16x1x4xf32> -> vector<6x16x2x4xf32>
    %82 = vector.shape_cast %81 : vector<6x16x2x4xf32> to vector<6x32x4xf32>
    %83 = vector.shape_cast %78 : vector<6x32x4xf32> to vector<6x1x32x4xf32>
    %84 = vector.shape_cast %82 : vector<6x32x4xf32> to vector<6x1x32x4xf32>
    %85 = tpu.concatenate %83, %84 in 1 : vector<6x1x32x4xf32>, vector<6x1x32x4xf32> -> vector<6x2x32x4xf32>
    %86 = vector.shape_cast %85 : vector<6x2x32x4xf32> to vector<12x32x4xf32>
    %cst_34 = arith.constant 0.000000e+00 : f32
    %87 = vector.broadcast %cst_34 : f32 to vector<12x1x4xf32>
    %88 = tpu.concatenate %87, %86, %87 in 1 : vector<12x1x4xf32>, vector<12x32x4xf32>, vector<12x1x4xf32> -> vector<12x34x4xf32>
    %c0_35 = arith.constant 0 : index
    %c0_36 = arith.constant 0 : index
    %89 = vector.load %arg7[%c0_35, %c0_36] : memref<36x2xf32, #tpu.memory_space<vmem>>, vector<36x2xf32>
    %c0_37 = arith.constant 0 : index
    %c0_38 = arith.constant 0 : index
    %90 = vector.load %arg8[%c0_37, %c0_38] : memref<1x2xf32, #tpu.memory_space<vmem>>, vector<1x2xf32>
    %91 = vector.extract_strided_slice %88 {offsets = [0, 0, 0], sizes = [10, 32, 4], strides = [1, 1, 1]} : vector<12x34x4xf32> to vector<10x32x4xf32>
    %92 = vector.extract_strided_slice %88 {offsets = [0, 1, 0], sizes = [10, 32, 4], strides = [1, 1, 1]} : vector<12x34x4xf32> to vector<10x32x4xf32>
    %93 = vector.extract_strided_slice %88 {offsets = [0, 2, 0], sizes = [10, 32, 4], strides = [1, 1, 1]} : vector<12x34x4xf32> to vector<10x32x4xf32>
    %94 = vector.extract_strided_slice %88 {offsets = [1, 0, 0], sizes = [10, 32, 4], strides = [1, 1, 1]} : vector<12x34x4xf32> to vector<10x32x4xf32>
    %95 = vector.extract_strided_slice %88 {offsets = [1, 1, 0], sizes = [10, 32, 4], strides = [1, 1, 1]} : vector<12x34x4xf32> to vector<10x32x4xf32>
    %96 = vector.extract_strided_slice %88 {offsets = [1, 2, 0], sizes = [10, 32, 4], strides = [1, 1, 1]} : vector<12x34x4xf32> to vector<10x32x4xf32>
    %97 = vector.extract_strided_slice %88 {offsets = [2, 0, 0], sizes = [10, 32, 4], strides = [1, 1, 1]} : vector<12x34x4xf32> to vector<10x32x4xf32>
    %98 = vector.extract_strided_slice %88 {offsets = [2, 1, 0], sizes = [10, 32, 4], strides = [1, 1, 1]} : vector<12x34x4xf32> to vector<10x32x4xf32>
    %99 = vector.extract_strided_slice %88 {offsets = [2, 2, 0], sizes = [10, 32, 4], strides = [1, 1, 1]} : vector<12x34x4xf32> to vector<10x32x4xf32>
    %100 = tpu.concatenate %91, %92, %93, %94, %95, %96, %97, %98, %99 in 2 : vector<10x32x4xf32>, vector<10x32x4xf32>, vector<10x32x4xf32>, vector<10x32x4xf32>, vector<10x32x4xf32>, vector<10x32x4xf32>, vector<10x32x4xf32>, vector<10x32x4xf32>, vector<10x32x4xf32> -> vector<10x32x36xf32>
    %101 = vector.shape_cast %100 : vector<10x32x36xf32> to vector<320x36xf32>
    %cst_39 = arith.constant dense<0.000000e+00> : vector<320x2xf32>
    %102 = tpu.matmul %101, %89, %cst_39 {dimension_numbers = #tpu.dot_dimension_numbers<[1], [0], [0], [1], [0, 0, 1, 1], [], []>} : vector<320x36xf32>, vector<36x2xf32>, vector<320x2xf32> -> vector<320x2xf32>
    %103 = vector.broadcast %90 : vector<1x2xf32> to vector<320x2xf32>
    %104 = arith.addf %102, %103 : vector<320x2xf32>
    %cst_40 = arith.constant 0.000000e+00 : f32
    %105 = vector.broadcast %cst_40 : f32 to vector<320x2xf32>
    %106 = arith.maximumf %104, %105 : vector<320x2xf32>
    %107 = vector.shape_cast %106 : vector<320x2xf32> to vector<10x32x2xf32>
    %108 = vector.extract_strided_slice %107 {offsets = [0, 0, 0], sizes = [1, 32, 2], strides = [1, 1, 1]} : vector<10x32x2xf32> to vector<1x32x2xf32>
    %109 = vector.broadcast %28 : f32 to vector<1x32x2xf32>
    %110 = arith.mulf %108, %109 : vector<1x32x2xf32>
    %111 = vector.extract_strided_slice %107 {offsets = [1, 0, 0], sizes = [8, 32, 2], strides = [1, 1, 1]} : vector<10x32x2xf32> to vector<8x32x2xf32>
    %112 = vector.extract_strided_slice %107 {offsets = [9, 0, 0], sizes = [1, 32, 2], strides = [1, 1, 1]} : vector<10x32x2xf32> to vector<1x32x2xf32>
    %113 = vector.broadcast %30 : f32 to vector<1x32x2xf32>
    %114 = arith.mulf %112, %113 : vector<1x32x2xf32>
    %115 = tpu.concatenate %110, %111, %114 in 0 : vector<1x32x2xf32>, vector<8x32x2xf32>, vector<1x32x2xf32> -> vector<10x32x2xf32>
    %cst_41 = arith.constant 0.000000e+00 : f32
    %116 = vector.broadcast %cst_41 : f32 to vector<10x1x2xf32>
    %117 = tpu.concatenate %116, %115, %116 in 1 : vector<10x1x2xf32>, vector<10x32x2xf32>, vector<10x1x2xf32> -> vector<10x34x2xf32>
    %c0_42 = arith.constant 0 : index
    %c0_43 = arith.constant 0 : index
    %118 = vector.load %arg9[%c0_42, %c0_43] : memref<18x8xf32, #tpu.memory_space<vmem>>, vector<18x8xf32>
    %c0_44 = arith.constant 0 : index
    %c0_45 = arith.constant 0 : index
    %119 = vector.load %arg10[%c0_44, %c0_45] : memref<1x8xf32, #tpu.memory_space<vmem>>, vector<1x8xf32>
    %120 = vector.extract_strided_slice %117 {offsets = [0, 0, 0], sizes = [8, 32, 2], strides = [1, 1, 1]} : vector<10x34x2xf32> to vector<8x32x2xf32>
    %121 = vector.extract_strided_slice %117 {offsets = [0, 1, 0], sizes = [8, 32, 2], strides = [1, 1, 1]} : vector<10x34x2xf32> to vector<8x32x2xf32>
    %122 = vector.extract_strided_slice %117 {offsets = [0, 2, 0], sizes = [8, 32, 2], strides = [1, 1, 1]} : vector<10x34x2xf32> to vector<8x32x2xf32>
    %123 = vector.extract_strided_slice %117 {offsets = [1, 0, 0], sizes = [8, 32, 2], strides = [1, 1, 1]} : vector<10x34x2xf32> to vector<8x32x2xf32>
    %124 = vector.extract_strided_slice %117 {offsets = [1, 1, 0], sizes = [8, 32, 2], strides = [1, 1, 1]} : vector<10x34x2xf32> to vector<8x32x2xf32>
    %125 = vector.extract_strided_slice %117 {offsets = [1, 2, 0], sizes = [8, 32, 2], strides = [1, 1, 1]} : vector<10x34x2xf32> to vector<8x32x2xf32>
    %126 = vector.extract_strided_slice %117 {offsets = [2, 0, 0], sizes = [8, 32, 2], strides = [1, 1, 1]} : vector<10x34x2xf32> to vector<8x32x2xf32>
    %127 = vector.extract_strided_slice %117 {offsets = [2, 1, 0], sizes = [8, 32, 2], strides = [1, 1, 1]} : vector<10x34x2xf32> to vector<8x32x2xf32>
    %128 = vector.extract_strided_slice %117 {offsets = [2, 2, 0], sizes = [8, 32, 2], strides = [1, 1, 1]} : vector<10x34x2xf32> to vector<8x32x2xf32>
    %129 = tpu.concatenate %120, %121, %122, %123, %124, %125, %126, %127, %128 in 2 : vector<8x32x2xf32>, vector<8x32x2xf32>, vector<8x32x2xf32>, vector<8x32x2xf32>, vector<8x32x2xf32>, vector<8x32x2xf32>, vector<8x32x2xf32>, vector<8x32x2xf32>, vector<8x32x2xf32> -> vector<8x32x18xf32>
    %130 = vector.shape_cast %129 : vector<8x32x18xf32> to vector<256x18xf32>
    %cst_46 = arith.constant dense<0.000000e+00> : vector<256x8xf32>
    %131 = tpu.matmul %130, %118, %cst_46 {dimension_numbers = #tpu.dot_dimension_numbers<[1], [0], [0], [1], [0, 0, 1, 1], [], []>} : vector<256x18xf32>, vector<18x8xf32>, vector<256x8xf32> -> vector<256x8xf32>
    %132 = vector.broadcast %119 : vector<1x8xf32> to vector<256x8xf32>
    %133 = arith.addf %131, %132 : vector<256x8xf32>
    %cst_47 = arith.constant 0.000000e+00 : f32
    %134 = vector.broadcast %cst_47 : f32 to vector<256x8xf32>
    %135 = arith.maximumf %133, %134 : vector<256x8xf32>
    %136 = vector.shape_cast %135 : vector<256x8xf32> to vector<8x32x8xf32>
    %c0_48 = arith.constant 0 : index
    %c0_49 = arith.constant 0 : index
    %c0_50 = arith.constant 0 : index
    %c0_51 = arith.constant 0 : index
    %137 = vector.load %arg11[%c0_48, %c0_49, %c0_50, %c0_51] : memref<1x8x32x8xf32, #tpu.memory_space<vmem>>, vector<1x8x32x8xf32>
    %138 = vector.shape_cast %137 : vector<1x8x32x8xf32> to vector<8x32x8xf32>
    %139 = vector.shape_cast %136 : vector<8x32x8xf32> to vector<1x8x32x8xf32>
    tpu.vector_store %arg11[%c0_48, %c0_49, %c0_50, %c0_51], %139 {strides = array<i32>} : memref<1x8x32x8xf32, #tpu.memory_space<vmem>>, vector<1x8x32x8xf32>,
    return
  }
  func.func @transform_0(%arg0: i32, %arg1: i32) -> (i32, i32, i32, i32) {
    %c0_i32 = arith.constant 0 : i32
    %c0_i32_0 = arith.constant 0 : i32
    %c0_i32_1 = arith.constant 0 : i32
    return %arg0, %arg1, %c0_i32, %c0_i32_0 : i32, i32, i32, i32
  }
  func.func @transform_1(%arg0: i32, %arg1: i32) -> (i32, i32, i32, i32) {
    %c4_i32 = arith.constant 4 : i32
    %0 = arith.muli %arg1, %c4_i32 : i32
    %c2_i32 = arith.constant 2 : i32
    %1 = arith.subi %0, %c2_i32 : i32
    %c0_i32 = arith.constant 0 : i32
    %2 = arith.maxsi %1, %c0_i32 : i32
    %c0_i32_0 = arith.constant 0 : i32
    %c0_i32_1 = arith.constant 0 : i32
    %c0_i32_2 = arith.constant 0 : i32
    return %arg0, %2, %c0_i32_0, %c0_i32_1 : i32, i32, i32, i32
  }
  func.func @transform_2(%arg0: i32, %arg1: i32) -> (i32, i32, i32, i32) {
    %c4_i32 = arith.constant 4 : i32
    %0 = arith.muli %arg1, %c4_i32 : i32
    %c1_i32 = arith.constant 1 : i32
    %1 = arith.subi %0, %c1_i32 : i32
    %c0_i32 = arith.constant 0 : i32
    %2 = arith.maxsi %1, %c0_i32 : i32
    %c0_i32_0 = arith.constant 0 : i32
    %c0_i32_1 = arith.constant 0 : i32
    %c0_i32_2 = arith.constant 0 : i32
    return %arg0, %2, %c0_i32_0, %c0_i32_1 : i32, i32, i32, i32
  }
  func.func @transform_3(%arg0: i32, %arg1: i32) -> (i32, i32, i32, i32) {
    %c4_i32 = arith.constant 4 : i32
    %0 = arith.muli %arg1, %c4_i32 : i32
    %c4_i32_0 = arith.constant 4 : i32
    %1 = arith.addi %0, %c4_i32_0 : i32
    %c15_i32 = arith.constant 15 : i32
    %2 = arith.minsi %1, %c15_i32 : i32
    %c0_i32 = arith.constant 0 : i32
    %c0_i32_1 = arith.constant 0 : i32
    %c0_i32_2 = arith.constant 0 : i32
    return %arg0, %2, %c0_i32, %c0_i32_1 : i32, i32, i32, i32
  }
  func.func @transform_4(%arg0: i32, %arg1: i32) -> (i32, i32, i32, i32) {
    %c4_i32 = arith.constant 4 : i32
    %0 = arith.muli %arg1, %c4_i32 : i32
    %c4_i32_0 = arith.constant 4 : i32
    %1 = arith.addi %0, %c4_i32_0 : i32
    %c1_i32 = arith.constant 1 : i32
    %2 = arith.addi %1, %c1_i32 : i32
    %c15_i32 = arith.constant 15 : i32
    %3 = arith.minsi %2, %c15_i32 : i32
    %c0_i32 = arith.constant 0 : i32
    %c0_i32_1 = arith.constant 0 : i32
    %c0_i32_2 = arith.constant 0 : i32
    return %arg0, %3, %c0_i32, %c0_i32_1 : i32, i32, i32, i32
  }
  func.func @transform_5(%arg0: i32, %arg1: i32) -> (i32, i32) {
    %c0_i32 = arith.constant 0 : i32
    %c0_i32_0 = arith.constant 0 : i32
    %c0_i32_1 = arith.constant 0 : i32
    return %c0_i32, %c0_i32_0 : i32, i32
  }
  func.func @transform_6(%arg0: i32, %arg1: i32) -> (i32, i32) {
    %c0_i32 = arith.constant 0 : i32
    %c0_i32_0 = arith.constant 0 : i32
    %c0_i32_1 = arith.constant 0 : i32
    return %c0_i32, %c0_i32_0 : i32, i32
  }
  func.func @transform_7(%arg0: i32, %arg1: i32) -> (i32, i32) {
    %c0_i32 = arith.constant 0 : i32
    %c0_i32_0 = arith.constant 0 : i32
    %c0_i32_1 = arith.constant 0 : i32
    return %c0_i32, %c0_i32_0 : i32, i32
  }
  func.func @transform_8(%arg0: i32, %arg1: i32) -> (i32, i32) {
    %c0_i32 = arith.constant 0 : i32
    %c0_i32_0 = arith.constant 0 : i32
    %c0_i32_1 = arith.constant 0 : i32
    return %c0_i32, %c0_i32_0 : i32, i32
  }
  func.func @transform_9(%arg0: i32, %arg1: i32) -> (i32, i32, i32, i32) {
    %c0_i32 = arith.constant 0 : i32
    %c0_i32_0 = arith.constant 0 : i32
    %c0_i32_1 = arith.constant 0 : i32
    return %arg0, %arg1, %c0_i32, %c0_i32_0 : i32, i32, i32, i32
  }
}

</mosaic_0001>

<llo_original>
// kernel: upsample_forward.1
$region0: #{upsample_forward.1}
  #allocation0 [shape = 'u32[]', space=smem, size = 0x4, offset = 0x4, fixed_abs, tag = 'smem constant byte address 0x4 - core index']
  #allocation1 [shape = 'u32[72,128]{1,0:T(1,128)}', space=vmem, size = 0x9000, scoped, tag = 'internal scratch']
  %s0 = inlined_call_operand.vmem [shape: f32[2,16,16,4], index: 0, kind: input, shape index: {}, may-alias: {0,1,2,3,4}]
  %s1 = inlined_call_operand.vmem [shape: f32[2,16,16,4], index: 1, kind: input, shape index: {}, may-alias: {0,1,2,3,4}]
  %s2 = inlined_call_operand.vmem [shape: f32[2,16,16,4], index: 2, kind: input, shape index: {}, may-alias: {0,1,2,3,4}]
  %s3 = inlined_call_operand.vmem [shape: f32[2,16,16,4], index: 3, kind: input, shape index: {}, may-alias: {0,1,2,3,4}]
  %s4 = inlined_call_operand.vmem [shape: f32[2,16,16,4], index: 4, kind: input, shape index: {}, may-alias: {0,1,2,3,4}]
  %s5 = inlined_call_operand.vmem [shape: f32[36,2], index: 5, kind: input, shape index: {}]
  %s6 = inlined_call_operand.vmem [shape: f32[1,2], index: 6, kind: input, shape index: {}]
  %s7 = inlined_call_operand.vmem [shape: f32[18,8], index: 7, kind: input, shape index: {}]
  %s8 = inlined_call_operand.vmem [shape: f32[1,8], index: 8, kind: input, shape index: {}]
  %s9 = inlined_call_operand.vmem [shape: f32[2,32,32,8], index: 9, kind: output, shape index: {}]
  %s10 = sld [smem:[#allocation0]]
  $region69: #{upsample_forward.1} parent=0
    _
  %s12 = ssub.s32 1, %s10
  %s13 = scalar_select 0, %s12, %s10
  loop: start=0, step=1, limit=10
  $region2: #{upsample_forward.1} parent=0 // loop_pre_header
    _
  $region3: #{upsample_forward.1} parent=0 // loop_header
    %s15 = sphi 0, %s19
    %p16 = scmp.ge.s32.totalorder %s15, 10
    %s22 = sphi 0, %s34
    %s23 = sphi 0, %s30
    %s24 = sphi 0, %s22
    %s25 = sphi 0, %s23
    %s26 = sphi 0, %s24
    %s27 = sphi 0, %s25
    %s39 = sphi 0, %s41
    %s42 = sphi 0, %s39
    %s43 = sphi 0, %s42
    %s59 = sphi 0, %s43
    %s75 = sphi 0, %s77
    %s78 = sphi 0, %s75
    %s79 = sphi 0, %s78
    %s95 = sphi 0, %s79
    %s111 = sphi 0, %s113
    %s114 = sphi 0, %s111
    %s115 = sphi 0, %s114
    %s131 = sphi 0, %s115
    %s147 = sphi 0, %s149
    %s150 = sphi 0, %s147
    %s151 = sphi 0, %s150
    %s167 = sphi 0, %s151
    %s183 = sphi 0, %s185
    %s186 = sphi 0, %s183
    %s187 = sphi 0, %s186
    %s203 = sphi 0, %s187
    %s207 = sphi 0, %s207
    %s209 = sphi 0, %s207
    %s210 = sphi 0, %s209
    %s224 = sphi 0, %s210
    %s228 = sphi 0, %s228
    %s230 = sphi 0, %s228
    %s231 = sphi 0, %s230
    %s245 = sphi 0, %s231
    %s249 = sphi 0, %s249
    %s251 = sphi 0, %s249
    %s252 = sphi 0, %s251
    %s266 = sphi 0, %s252
    %s270 = sphi 0, %s270
    %s272 = sphi 0, %s270
    %s273 = sphi 0, %s272
    %s287 = sphi 0, %s273
    %s295 = sphi 0, %s297
    %s298 = sphi 0, %s295
    %s299 = sphi 0, %s298
    %s315 = sphi 0, %s299
  $region4: #{upsample_forward.1} parent=0 // loop_header_branch
    %18 = sbr.rel (%p16) target = $region8
  $region5: #{upsample_forward.1} parent=0 // loop_body
    %s20 = ssub.s32 %s15, 1
    %s21 = ssub.s32 %s15, 2
    %s28 = sadd.s32 1, %s23
    %p29 = scmp.ge.s32.totalorder %s28, 4
    %s30 = scalar_select %p29, 0, %s28
    %s31 = sadd.s32 1, %s22
    %s32 = scalar_select %p29, %s31, %s22
    %p33 = scmp.ge.s32.totalorder %s32, 2
    %s34 = scalar_select %p33, 0, %s32
    %s35 = ssub.s32 %s22, %s34
    %s36 = ssub.s32 %s23, %s30
    %s37 = sor.u32 %s35, %s36
    %p38 = scmp.eq.s32.totalorder %s37, 0
    %s40 = sadd.s32 %s39, 1
    %s41 = scalar_select %p38, %s39, %s40
    %p44 = pneg %p38
    %p45 = scmp.eq.s32.totalorder %s15, 7
    %p46 = por %p44, %p45
    %p47 = scmp.ne.s32.totalorder %s39, %s42
    %p48 = scmp.eq.s32.totalorder %s15, 0
    %p49 = por %p47, %p48
    %p50 = scmp.ne.s32.totalorder %s39, %s42
    %p51 = scmp.eq.s32.totalorder %s20, 7
    %p52 = por %p50, %p51
    %p53 = scmp.ne.s32.totalorder %s42, %s43
    %p54 = scmp.eq.s32.totalorder %s20, 0
    %p55 = por %p53, %p54
    %p56 = scmp.ne.s32.totalorder %s42, %s43
    %p57 = scmp.eq.s32.totalorder %s21, 7
    %p58 = por %p56, %p57
    %p60 = scmp.ne.s32.totalorder %s43, %s59
    %p61 = scmp.eq.s32.totalorder %s21, 0
    %p62 = por %p60, %p61
    %s63 = smul.u32 %s23, 4
    %s64 = ssub.s32 %s63, 2
    %p65 = scmp.gt.s32.totalorder %s64, 0
    %s66 = scalar_select %p65, %s64, 0
    %s67 = smul.u32 %s30, 4
    %s68 = ssub.s32 %s67, 2
    %p69 = scmp.gt.s32.totalorder %s68, 0
    %s70 = scalar_select %p69, %s68, 0
    %s71 = ssub.s32 %s22, %s34
    %s72 = ssub.s32 %s66, %s70
    %s73 = sor.u32 %s71, %s72
    %p74 = scmp.eq.s32.totalorder %s73, 0
    %s76 = sadd.s32 %s75, 1
    %s77 = scalar_select %p74, %s75, %s76
    %p80 = pneg %p74
    %p81 = scmp.eq.s32.totalorder %s15, 7
    %p82 = por %p80, %p81
    %p83 = scmp.ne.s32.totalorder %s75, %s78
    %p84 = scmp.eq.s32.totalorder %s15, 0
    %p85 = por %p83, %p84
    %p86 = scmp.ne.s32.totalorder %s75, %s78
    %p87 = scmp.eq.s32.totalorder %s20, 7
    %p88 = por %p86, %p87
    %p89 = scmp.ne.s32.totalorder %s78, %s79
    %p90 = scmp.eq.s32.totalorder %s20, 0
    %p91 = por %p89, %p90
    %p92 = scmp.ne.s32.totalorder %s78, %s79
    %p93 = scmp.eq.s32.totalorder %s21, 7
    %p94 = por %p92, %p93
    %p96 = scmp.ne.s32.totalorder %s79, %s95
    %p97 = scmp.eq.s32.totalorder %s21, 0
    %p98 = por %p96, %p97
    %s99 = smul.u32 %s23, 4
    %s100 = ssub.s32 %s99, 1
    %p101 = scmp.gt.s32.totalorder %s100, 0
    %s102 = scalar_select %p101, %s100, 0
    %s103 = smul.u32 %s30, 4
    %s104 = ssub.s32 %s103, 1
    %p105 = scmp.gt.s32.totalorder %s104, 0
    %s106 = scalar_select %p105, %s104, 0
    %s107 = ssub.s32 %s22, %s34
    %s108 = ssub.s32 %s102, %s106
    %s109 = sor.u32 %s107, %s108
    %p110 = scmp.eq.s32.totalorder %s109, 0
    %s112 = sadd.s32 %s111, 1
    %s113 = scalar_select %p110, %s111, %s112
    %p116 = pneg %p110
    %p117 = scmp.eq.s32.totalorder %s15, 7
    %p118 = por %p116, %p117
    %p119 = scmp.ne.s32.totalorder %s111, %s114
    %p120 = scmp.eq.s32.totalorder %s15, 0
    %p121 = por %p119, %p120
    %p122 = scmp.ne.s32.totalorder %s111, %s114
    %p123 = scmp.eq.s32.totalorder %s20, 7
    %p124 = por %p122, %p123
    %p125 = scmp.ne.s32.totalorder %s114, %s115
    %p126 = scmp.eq.s32.totalorder %s20, 0
    %p127 = por %p125, %p126
    %p128 = scmp.ne.s32.totalorder %s114, %s115
    %p129 = scmp.eq.s32.totalorder %s21, 7
    %p130 = por %p128, %p129
    %p132 = scmp.ne.s32.totalorder %s115, %s131
    %p133 = scmp.eq.s32.totalorder %s21, 0
    %p134 = por %p132, %p133
    %s135 = smul.u32 %s23, 4
    %s136 = sadd.s32 %s135, 4
    %p137 = scmp.lt.s32.totalorder %s136, 15
    %s138 = scalar_select %p137, %s136, 15
    %s139 = smul.u32 %s30, 4
    %s140 = sadd.s32 %s139, 4
    %p141 = scmp.lt.s32.totalorder %s140, 15
    %s142 = scalar_select %p141, %s140, 15
    %s143 = ssub.s32 %s22, %s34
    %s144 = ssub.s32 %s138, %s142
    %s145 = sor.u32 %s143, %s144
    %p146 = scmp.eq.s32.totalorder %s145, 0
    %s148 = sadd.s32 %s147, 1
    %s149 = scalar_select %p146, %s147, %s148
    %p152 = pneg %p146
    %p153 = scmp.eq.s32.totalorder %s15, 7
    %p154 = por %p152, %p153
    %p155 = scmp.ne.s32.totalorder %s147, %s150
    %p156 = scmp.eq.s32.totalorder %s15, 0
    %p157 = por %p155, %p156
    %p158 = scmp.ne.s32.totalorder %s147, %s150
    %p159 = scmp.eq.s32.totalorder %s20, 7
    %p160 = por %p158, %p159
    %p161 = scmp.ne.s32.totalorder %s150, %s151
    %p162 = scmp.eq.s32.totalorder %s20, 0
    %p163 = por %p161, %p162
    %p164 = scmp.ne.s32.totalorder %s150, %s151
    %p165 = scmp.eq.s32.totalorder %s21, 7
    %p166 = por %p164, %p165
    %p168 = scmp.ne.s32.totalorder %s151, %s167
    %p169 = scmp.eq.s32.totalorder %s21, 0
    %p170 = por %p168, %p169
    %s171 = smul.u32 %s23, 4
    %s172 = sadd.s32 %s171, 5
    %p173 = scmp.lt.s32.totalorder %s172, 15
    %s174 = scalar_select %p173, %s172, 15
    %s175 = smul.u32 %s30, 4
    %s176 = sadd.s32 %s175, 5
    %p177 = scmp.lt.s32.totalorder %s176, 15
    %s178 = scalar_select %p177, %s176, 15
    %s179 = ssub.s32 %s22, %s34
    %s180 = ssub.s32 %s174, %s178
    %s181 = sor.u32 %s179, %s180
    %p182 = scmp.eq.s32.totalorder %s181, 0
    %s184 = sadd.s32 %s183, 1
    %s185 = scalar_select %p182, %s183, %s184
    %p188 = pneg %p182
    %p189 = scmp.eq.s32.totalorder %s15, 7
    %p190 = por %p188, %p189
    %p191 = scmp.ne.s32.totalorder %s183, %s186
    %p192 = scmp.eq.s32.totalorder %s15, 0
    %p193 = por %p191, %p192
    %p194 = scmp.ne.s32.totalorder %s183, %s186
    %p195 = scmp.eq.s32.totalorder %s20, 7
    %p196 = por %p194, %p195
    %p197 = scmp.ne.s32.totalorder %s186, %s187
    %p198 = scmp.eq.s32.totalorder %s20, 0
    %p199 = por %p197, %p198
    %p200 = scmp.ne.s32.totalorder %s186, %s187
    %p201 = scmp.eq.s32.totalorder %s21, 7
    %p202 = por %p200, %p201
    %p204 = scmp.ne.s32.totalorder %s187, %s203
    %p205 = scmp.eq.s32.totalorder %s21, 0
    %p206 = por %p204, %p205
    %s208 = sadd.s32 %s207, 1
    %p211 = scmp.eq.s32.totalorder %s15, 7
    %p212 = scmp.ne.s32.totalorder %s207, %s209
    %p213 = scmp.eq.s32.totalorder %s15, 0
    %p214 = por %p212, %p213
    %p215 = scmp.ne.s32.totalorder %s207, %s209
    %p216 = scmp.eq.s32.totalorder %s20, 7
    %p217 = por %p215, %p216
    %p218 = scmp.ne.s32.totalorder %s209, %s210
    %p219 = scmp.eq.s32.totalorder %s20, 0
    %p220 = por %p218, %p219
    %p221 = scmp.ne.s32.totalorder %s209, %s210
    %p222 = scmp.eq.s32.totalorder %s21, 7
    %p223 = por %p221, %p222
    %p225 = scmp.ne.s32.totalorder %s210, %s224
    %p226 = scmp.eq.s32.totalorder %s21, 0
    %p227 = por %p225, %p226
    %s229 = sadd.s32 %s228, 1
    %p232 = scmp.eq.s32.totalorder %s15, 7
    %p233 = scmp.ne.s32.totalorder %s228, %s230
    %p234 = scmp.eq.s32.totalorder %s15, 0
    %p235 = por %p233, %p234
    %p236 = scmp.ne.s32.totalorder %s228, %s230
    %p237 = scmp.eq.s32.totalorder %s20, 7
    %p238 = por %p236, %p237
    %p239 = scmp.ne.s32.totalorder %s230, %s231
    %p240 = scmp.eq.s32.totalorder %s20, 0
    %p241 = por %p239, %p240
    %p242 = scmp.ne.s32.totalorder %s230, %s231
    %p243 = scmp.eq.s32.totalorder %s21, 7
    %p244 = por %p242, %p243
    %p246 = scmp.ne.s32.totalorder %s231, %s245
    %p247 = scmp.eq.s32.totalorder %s21, 0
    %p248 = por %p246, %p247
    %s250 = sadd.s32 %s249, 1
    %p253 = scmp.eq.s32.totalorder %s15, 7
    %p254 = scmp.ne.s32.totalorder %s249, %s251
    %p255 = scmp.eq.s32.totalorder %s15, 0
    %p256 = por %p254, %p255
    %p257 = scmp.ne.s32.totalorder %s249, %s251
    %p258 = scmp.eq.s32.totalorder %s20, 7
    %p259 = por %p257, %p258
    %p260 = scmp.ne.s32.totalorder %s251, %s252
    %p261 = scmp.eq.s32.totalorder %s20, 0
    %p262 = por %p260, %p261
    %p263 = scmp.ne.s32.totalorder %s251, %s252
    %p264 = scmp.eq.s32.totalorder %s21, 7
    %p265 = por %p263, %p264
    %p267 = scmp.ne.s32.totalorder %s252, %s266
    %p268 = scmp.eq.s32.totalorder %s21, 0
    %p269 = por %p267, %p268
    %s271 = sadd.s32 %s270, 1
    %p274 = scmp.eq.s32.totalorder %s15, 7
    %p275 = scmp.ne.s32.totalorder %s270, %s272
    %p276 = scmp.eq.s32.totalorder %s15, 0
    %p277 = por %p275, %p276
    %p278 = scmp.ne.s32.totalorder %s270, %s272
    %p279 = scmp.eq.s32.totalorder %s20, 7
    %p280 = por %p278, %p279
    %p281 = scmp.ne.s32.totalorder %s272, %s273
    %p282 = scmp.eq.s32.totalorder %s20, 0
    %p283 = por %p281, %p282
    %p284 = scmp.ne.s32.totalorder %s272, %s273
    %p285 = scmp.eq.s32.totalorder %s21, 7
    %p286 = por %p284, %p285
    %p288 = scmp.ne.s32.totalorder %s273, %s287
    %p289 = scmp.eq.s32.totalorder %s21, 0
    %p290 = por %p288, %p289
    %s291 = ssub.s32 %s22, %s34
    %s292 = ssub.s32 %s23, %s30
    %s293 = sor.u32 %s291, %s292
    %p294 = scmp.eq.s32.totalorder %s293, 0
    %s296 = sadd.s32 %s295, 1
    %s297 = scalar_select %p294, %s295, %s296
    %p300 = pneg %p294
    %p301 = scmp.eq.s32.totalorder %s15, 7
    %p302 = por %p300, %p301
    %p303 = scmp.ne.s32.totalorder %s295, %s298
    %p304 = scmp.eq.s32.totalorder %s15, 0
    %p305 = por %p303, %p304
    %p306 = scmp.ne.s32.totalorder %s295, %s298
    %p307 = scmp.eq.s32.totalorder %s20, 7
    %p308 = por %p306, %p307
    %p309 = scmp.ne.s32.totalorder %s298, %s299
    %p310 = scmp.eq.s32.totalorder %s20, 0
    %p311 = por %p309, %p310
    %p312 = scmp.ne.s32.totalorder %s298, %s299
    %p313 = scmp.eq.s32.totalorder %s21, 7
    %p314 = por %p312, %p313
    %p316 = scmp.ne.s32.totalorder %s299, %s315
    %p317 = scmp.eq.s32.totalorder %s21, 0
    %p318 = por %p316, %p317
    %p319 = scmp.le.s32.totalorder 1, %s15
    %p320 = scmp.lt.s32.totalorder %s15, 9
    %p321 = pnand %p319, %p320
    %p322 = pneg %p321
    // Predicated region
    $region9: #{upsample_forward.1} parent=5 // pred_check
      _
    $region10: #{upsample_forward.1} parent=5 // pred_check_branch
      %324 = sbr.rel (%p321) target = $region12
    $region11: #{upsample_forward.1} parent=5 // pred_region
      %s325 = ssub.s32 %s15, 1
      // Predicated region
      $region13: #{upsample_forward.1} parent=11 // pred_check
        %p326 = pneg %p220
      $region14: #{upsample_forward.1} parent=11 // pred_check_branch
        %328 = sbr.rel (%p326) target = $region16
      $region15: #{upsample_forward.1} parent=11 // pred_region
        _
      $region16: #{upsample_forward.1} parent=11 // pred_fallthru
        _
      // Predicated region
      $region17: #{upsample_forward.1} parent=11 // pred_check
        %p329 = pneg %p241
      $region18: #{upsample_forward.1} parent=11 // pred_check_branch
        %331 = sbr.rel (%p329) target = $region20
      $region19: #{upsample_forward.1} parent=11 // pred_region
        _
      $region20: #{upsample_forward.1} parent=11 // pred_fallthru
        _
      // Predicated region
      $region21: #{upsample_forward.1} parent=11 // pred_check
        %p332 = pneg %p262
      $region22: #{upsample_forward.1} parent=11 // pred_check_branch
        %334 = sbr.rel (%p332) target = $region24
      $region23: #{upsample_forward.1} parent=11 // pred_region
        _
      $region24: #{upsample_forward.1} parent=11 // pred_fallthru
        _
      // Predicated region
      $region25: #{upsample_forward.1} parent=11 // pred_check
        %p335 = pneg %p283
      $region26: #{upsample_forward.1} parent=11 // pred_check_branch
        %337 = sbr.rel (%p335) target = $region28
      $region27: #{upsample_forward.1} parent=11 // pred_region
        _
      $region28: #{upsample_forward.1} parent=11 // pred_fallthru
        _
    $region12: #{upsample_forward.1} parent=5 // pred_fallthru
      _
    %p338 = scmp.lt.s32.totalorder %s15, 8
    // Predicated region
    $region29: #{upsample_forward.1} parent=5 // pred_check
      %p339 = pneg %p338
    $region30: #{upsample_forward.1} parent=5 // pred_check_branch
      %341 = sbr.rel (%p339) target = $region32
    $region31: #{upsample_forward.1} parent=5 // pred_region
      // Predicated region
      $region33: #{upsample_forward.1} parent=31 // pred_check
        %p342 = pneg %p49
      $region34: #{upsample_forward.1} parent=31 // pred_check_branch
        %344 = sbr.rel (%p342) target = $region36
      $region35: #{upsample_forward.1} parent=31 // pred_region
        %s345 = smul.u32 4, %s23
        %p346 = scmp.lt.s32.totalorder %s22, 1
        %s347 = scalar_select %p346, %s22, 1
        %p348 = scmp.lt.s32.totalorder %s345, 15
        %s349 = scalar_select %p348, %s345, 15
        %s350 = smul.addr %s349, 2
        %s351 = smul.addr %s347, 32
        %s352 = sadd.s32 %s350, %s351
        %s353 = smul.addr %s352, 8
        %s354 = scalar_lea.vmem %s0, %s353
        %s355 = smul.u32 4, %s23
      $region36: #{upsample_forward.1} parent=31 // pred_fallthru
        _
      // Predicated region
      $region37: #{upsample_forward.1} parent=31 // pred_check
        %p356 = pneg %p85
      $region38: #{upsample_forward.1} parent=31 // pred_check_branch
        %358 = sbr.rel (%p356) target = $region40
      $region39: #{upsample_forward.1} parent=31 // pred_region
        %s359 = smul.u32 %s23, 4
        %s360 = ssub.s32 %s359, 2
        %p361 = scmp.gt.s32.totalorder %s360, 0
        %s362 = scalar_select %p361, %s360, 0
        %p363 = scmp.lt.s32.totalorder %s22, 1
        %s364 = scalar_select %p363, %s22, 1
        %p365 = scmp.lt.s32.totalorder %s362, 15
        %s366 = scalar_select %p365, %s362, 15
        %s367 = smul.addr %s366, 2
        %s368 = smul.addr %s364, 32
        %s369 = sadd.s32 %s367, %s368
        %s370 = smul.addr %s369, 8
        %s371 = scalar_lea.vmem %s1, %s370
        %s372 = smul.u32 %s23, 4
        %s373 = ssub.s32 %s372, 2
        %p374 = scmp.gt.s32.totalorder %s373, 0
        %s375 = scalar_select %p374, %s373, 0
      $region40: #{upsample_forward.1} parent=31 // pred_fallthru
        _
      // Predicated region
      $region41: #{upsample_forward.1} parent=31 // pred_check
        %p376 = pneg %p121
      $region42: #{upsample_forward.1} parent=31 // pred_check_branch
        %378 = sbr.rel (%p376) target = $region44
      $region43: #{upsample_forward.1} parent=31 // pred_region
        %s379 = smul.u32 %s23, 4
        %s380 = ssub.s32 %s379, 1
        %p381 = scmp.gt.s32.totalorder %s380, 0
        %s382 = scalar_select %p381, %s380, 0
        %p383 = scmp.lt.s32.totalorder %s22, 1
        %s384 = scalar_select %p383, %s22, 1
        %p385 = scmp.lt.s32.totalorder %s382, 15
        %s386 = scalar_select %p385, %s382, 15
        %s387 = smul.addr %s386, 2
        %s388 = smul.addr %s384, 32
        %s389 = sadd.s32 %s387, %s388
        %s390 = smul.addr %s389, 8
        %s391 = scalar_lea.vmem %s2, %s390
        %s392 = smul.u32 %s23, 4
        %s393 = ssub.s32 %s392, 1
        %p394 = scmp.gt.s32.totalorder %s393, 0
        %s395 = scalar_select %p394, %s393, 0
      $region44: #{upsample_forward.1} parent=31 // pred_fallthru
        _
      // Predicated region
      $region45: #{upsample_forward.1} parent=31 // pred_check
        %p396 = pneg %p157
      $region46: #{upsample_forward.1} parent=31 // pred_check_branch
        %398 = sbr.rel (%p396) target = $region48
      $region47: #{upsample_forward.1} parent=31 // pred_region
        %s399 = smul.u32 %s23, 4
        %s400 = sadd.s32 %s399, 4
        %p401 = scmp.lt.s32.totalorder %s400, 15
        %s402 = scalar_select %p401, %s400, 15
        %p403 = scmp.lt.s32.totalorder %s22, 1
        %s404 = scalar_select %p403, %s22, 1
        %p405 = scmp.lt.s32.totalorder %s402, 15
        %s406 = scalar_select %p405, %s402, 15
        %s407 = smul.addr %s406, 2
        %s408 = smul.addr %s404, 32
        %s409 = sadd.s32 %s407, %s408
        %s410 = smul.addr %s409, 8
        %s411 = scalar_lea.vmem %s3, %s410
        %s412 = smul.u32 %s23, 4
        %s413 = sadd.s32 %s412, 4
        %p414 = scmp.lt.s32.totalorder %s413, 15
        %s415 = scalar_select %p414, %s413, 15
      $region48: #{upsample_forward.1} parent=31 // pred_fallthru
        _
      // Predicated region
      $region49: #{upsample_forward.1} parent=31 // pred_check
        %p416 = pneg %p193
      $region50: #{upsample_forward.1} parent=31 // pred_check_branch
        %418 = sbr.rel (%p416) target = $region52
      $region51: #{upsample_forward.1} parent=31 // pred_region
        %s419 = smul.u32 %s23, 4
        %s420 = sadd.s32 %s419, 5
        %p421 = scmp.lt.s32.totalorder %s420, 15
        %s422 = scalar_select %p421, %s420, 15
        %p423 = scmp.lt.s32.totalorder %s22, 1
        %s424 = scalar_select %p423, %s22, 1
        %p425 = scmp.lt.s32.totalorder %s422, 15
        %s426 = scalar_select %p425, %s422, 15
        %s427 = smul.addr %s426, 2
        %s428 = smul.addr %s424, 32
        %s429 = sadd.s32 %s427, %s428
        %s430 = smul.addr %s429, 8
        %s431 = scalar_lea.vmem %s4, %s430
        %s432 = smul.u32 %s23, 4
        %s433 = sadd.s32 %s432, 5
        %p434 = scmp.lt.s32.totalorder %s433, 15
        %s435 = scalar_select %p434, %s433, 15
      $region52: #{upsample_forward.1} parent=31 // pred_fallthru
        _
    $region32: #{upsample_forward.1} parent=5 // pred_fallthru
      _
    %p436 = scmp.le.s32.totalorder 1, %s15
    %p437 = scmp.lt.s32.totalorder %s15, 9
    %p438 = pnand %p436, %p437
    %p439 = pneg %p438
    // Predicated region
    $region53: #{upsample_forward.1} parent=5 // pred_check
      _
    $region54: #{upsample_forward.1} parent=5 // pred_check_branch
      %441 = sbr.rel (%p438) target = $region56
    $region55: #{upsample_forward.1} parent=5 // pred_region
      %s442 = ssub.s32 %s15, 1
      %s443 = smul.u32 4, %s25
      %p444 = scmp.lt.s32.totalorder %s24, 1
      %s445 = scalar_select %p444, %s24, 1
      %p446 = scmp.lt.s32.totalorder %s443, 15
      %s447 = scalar_select %p446, %s443, 15
      %s448 = smul.addr %s447, 2
      %s449 = smul.addr %s445, 32
      %s450 = sadd.s32 %s448, %s449
      %s451 = smul.addr %s450, 8
      %s452 = scalar_lea.vmem %s0, %s451
      %p453 = pneg %p55
      %p454 = pneg %p52
      %s455 = smul.u32 %s25, 4
      %s456 = ssub.s32 %s455, 2
      %p457 = scmp.gt.s32.totalorder %s456, 0
      %s458 = scalar_select %p457, %s456, 0
      %p459 = scmp.lt.s32.totalorder %s24, 1
      %s460 = scalar_select %p459, %s24, 1
      %p461 = scmp.lt.s32.totalorder %s458, 15
      %s462 = scalar_select %p461, %s458, 15
      %s463 = smul.addr %s462, 2
      %s464 = smul.addr %s460, 32
      %s465 = sadd.s32 %s463, %s464
      %s466 = smul.addr %s465, 8
      %s467 = scalar_lea.vmem %s1, %s466
      %p468 = pneg %p91
      %p469 = pneg %p88
      %s470 = smul.u32 %s25, 4
      %s471 = ssub.s32 %s470, 1
      %p472 = scmp.gt.s32.totalorder %s471, 0
      %s473 = scalar_select %p472, %s471, 0
      %p474 = scmp.lt.s32.totalorder %s24, 1
      %s475 = scalar_select %p474, %s24, 1
      %p476 = scmp.lt.s32.totalorder %s473, 15
      %s477 = scalar_select %p476, %s473, 15
      %s478 = smul.addr %s477, 2
      %s479 = smul.addr %s475, 32
      %s480 = sadd.s32 %s478, %s479
      %s481 = smul.addr %s480, 8
      %s482 = scalar_lea.vmem %s2, %s481
      %p483 = pneg %p127
      %p484 = pneg %p124
      %s485 = smul.u32 %s25, 4
      %s486 = sadd.s32 %s485, 4
      %p487 = scmp.lt.s32.totalorder %s486, 15
      %s488 = scalar_select %p487, %s486, 15
      %p489 = scmp.lt.s32.totalorder %s24, 1
      %s490 = scalar_select %p489, %s24, 1
      %p491 = scmp.lt.s32.totalorder %s488, 15
      %s492 = scalar_select %p491, %s488, 15
      %s493 = smul.addr %s492, 2
      %s494 = smul.addr %s490, 32
      %s495 = sadd.s32 %s493, %s494
      %s496 = smul.addr %s495, 8
      %s497 = scalar_lea.vmem %s3, %s496
      %p498 = pneg %p163
      %p499 = pneg %p160
      %s500 = smul.u32 %s25, 4
      %s501 = sadd.s32 %s500, 5
      %p502 = scmp.lt.s32.totalorder %s501, 15
      %s503 = scalar_select %p502, %s501, 15
      %p504 = scmp.lt.s32.totalorder %s24, 1
      %s505 = scalar_select %p504, %s24, 1
      %p506 = scmp.lt.s32.totalorder %s503, 15
      %s507 = scalar_select %p506, %s503, 15
      %s508 = smul.addr %s507, 2
      %s509 = smul.addr %s505, 32
      %s510 = sadd.s32 %s508, %s509
      %s511 = smul.addr %s510, 8
      %s512 = scalar_lea.vmem %s4, %s511
      %p513 = pneg %p199
      %p514 = pneg %p196
      %p515 = pneg %p220
      %p516 = pneg %p217
      %p517 = pneg %p241
      %p518 = pneg %p238
      %p519 = pneg %p262
      %p520 = pneg %p259
      %p521 = pneg %p283
      %p522 = pneg %p280
      %p523 = pneg %p311
      %p524 = pneg %p308
      %s525 = smul.u32 8, %s25
      %p526 = scmp.lt.s32.totalorder %s24, 1
      %s527 = scalar_select %p526, %s24, 1
      %p528 = scmp.lt.s32.totalorder %s525, 31
      %s529 = scalar_select %p528, %s525, 31
      %s530 = smul.addr %s529, 4
      %s531 = smul.addr %s527, 128
      %s532 = sadd.s32 %s530, %s531
      %s533 = smul.addr %s532, 8
      %s534 = scalar_lea.vmem %s9, %s533
      %s535 = smul.u32 4, %s25
      %p536 = scmp.lt.s32.totalorder %s24, 1
      %s537 = scalar_select %p536, %s24, 1
      %p538 = scmp.lt.s32.totalorder %s535, 15
      %s539 = scalar_select %p538, %s535, 15
      %s540 = smul.addr %s539, 2
      %s541 = smul.addr %s537, 32
      %s542 = sadd.s32 %s540, %s541
      %s543 = smul.addr %s542, 8
      %s544 = scalar_lea.vmem %s0, %s543
      %s545 = smul.u32 4, %s25
      %s546 = smul.u32 %s25, 4
      %s547 = ssub.s32 %s546, 2
      %p548 = scmp.gt.s32.totalorder %s547, 0
      %s549 = scalar_select %p548, %s547, 0
      %p550 = scmp.lt.s32.totalorder %s24, 1
      %s551 = scalar_select %p550, %s24, 1
      %p552 = scmp.lt.s32.totalorder %s549, 15
      %s553 = scalar_select %p552, %s549, 15
      %s554 = smul.addr %s553, 2
      %s555 = smul.addr %s551, 32
      %s556 = sadd.s32 %s554, %s555
      %s557 = smul.addr %s556, 8
      %s558 = scalar_lea.vmem %s1, %s557
      %s559 = smul.u32 %s25, 4
      %s560 = ssub.s32 %s559, 2
      %p561 = scmp.gt.s32.totalorder %s560, 0
      %s562 = scalar_select %p561, %s560, 0
      %s563 = smul.u32 %s25, 4
      %s564 = ssub.s32 %s563, 1
      %p565 = scmp.gt.s32.totalorder %s564, 0
      %s566 = scalar_select %p565, %s564, 0
      %p567 = scmp.lt.s32.totalorder %s24, 1
      %s568 = scalar_select %p567, %s24, 1
      %p569 = scmp.lt.s32.totalorder %s566, 15
      %s570 = scalar_select %p569, %s566, 15
      %s571 = smul.addr %s570, 2
      %s572 = smul.addr %s568, 32
      %s573 = sadd.s32 %s571, %s572
      %s574 = smul.addr %s573, 8
      %s575 = scalar_lea.vmem %s2, %s574
      %s576 = smul.u32 %s25, 4
      %s577 = ssub.s32 %s576, 1
      %p578 = scmp.gt.s32.totalorder %s577, 0
      %s579 = scalar_select %p578, %s577, 0
      %s580 = smul.u32 %s25, 4
      %s581 = sadd.s32 %s580, 4
      %p582 = scmp.lt.s32.totalorder %s581, 15
      %s583 = scalar_select %p582, %s581, 15
      %p584 = scmp.lt.s32.totalorder %s24, 1
      %s585 = scalar_select %p584, %s24, 1
      %p586 = scmp.lt.s32.totalorder %s583, 15
      %s587 = scalar_select %p586, %s583, 15
      %s588 = smul.addr %s587, 2
      %s589 = smul.addr %s585, 32
      %s590 = sadd.s32 %s588, %s589
      %s591 = smul.addr %s590, 8
      %s592 = scalar_lea.vmem %s3, %s591
      %s593 = smul.u32 %s25, 4
      %s594 = sadd.s32 %s593, 4
      %p595 = scmp.lt.s32.totalorder %s594, 15
      %s596 = scalar_select %p595, %s594, 15
      %s597 = smul.u32 %s25, 4
      %s598 = sadd.s32 %s597, 5
      %p599 = scmp.lt.s32.totalorder %s598, 15
      %s600 = scalar_select %p599, %s598, 15
      %p601 = scmp.lt.s32.totalorder %s24, 1
      %s602 = scalar_select %p601, %s24, 1
      %p603 = scmp.lt.s32.totalorder %s600, 15
      %s604 = scalar_select %p603, %s600, 15
      %s605 = smul.addr %s604, 2
      %s606 = smul.addr %s602, 32
      %s607 = sadd.s32 %s605, %s606
      %s608 = smul.addr %s607, 8
      %s609 = scalar_lea.vmem %s4, %s608
      %s610 = smul.u32 %s25, 4
      %s611 = sadd.s32 %s610, 5
      %p612 = scmp.lt.s32.totalorder %s611, 15
      %s613 = scalar_select %p612, %s611, 15
      %s614 = smul.u32 8, %s25
      %p615 = scmp.lt.s32.totalorder %s24, 1
      %s616 = scalar_select %p615, %s24, 1
      %p617 = scmp.lt.s32.totalorder %s614, 31
      %s618 = scalar_select %p617, %s614, 31
      %s619 = smul.addr %s618, 4
      %s620 = smul.addr %s616, 128
      %s621 = sadd.s32 %s619, %s620
      %s622 = smul.addr %s621, 8
      %s623 = scalar_lea.vmem %s9, %s622
      %s624 = smul.u32 8, %s25
      %v625 = vld [vmem:[%s558] sm:$0xff]
      %v626 = vld [vmem:[%s558 + $0x8] sm:$0xff]
      %v627 = vld [vmem:[%s575] sm:$0xff]
      %v628 = vld [vmem:[%s575 + $0x8] sm:$0xff]
      %v629 = vld [vmem:[%s544] sm:$0xff]
      %v630 = vld [vmem:[%s544 + $0x8] sm:$0xff]
      %v631 = vld [vmem:[%s544 + $0x10] sm:$0xff]
      %v632 = vld [vmem:[%s544 + $0x18] sm:$0xff]
      %v633 = vld [vmem:[%s544 + $0x20] sm:$0xff]
      %v634 = vld [vmem:[%s544 + $0x28] sm:$0xff]
      %v635 = vld [vmem:[%s544 + $0x30] sm:$0xff]
      %v636 = vld [vmem:[%s544 + $0x38] sm:$0xff]
      %v637 = vld [vmem:[%s592] sm:$0xff]
      %v638 = vld [vmem:[%s592 + $0x8] sm:$0xff]
      %v639 = vld [vmem:[%s609] sm:$0xff]
      %v640 = vld [vmem:[%s609 + $0x8] sm:$0xff]
      %vm657 = vcmask 1040384
      %v658 = vrot.slane %v625, 7
      %v659 = vrot.slane %v626, 7
      %v660 = vsel %vm657, %v658, %v659
      %v661 = vrot.slane %v627, 7
      %v662 = vrot.slane %v628, 7
      %v663 = vsel %vm657, %v661, %v662
      %v664 = vrot.slane %v629, 7
      %v665 = vrot.slane %v630, 7
      %v666 = vsel %vm657, %v664, %v665
      %v667 = vrot.slane %v631, 7
      %v668 = vrot.slane %v632, 7
      %v669 = vsel %vm657, %v667, %v668
      %v670 = vrot.slane %v633, 7
      %v671 = vrot.slane %v634, 7
      %v672 = vsel %vm657, %v670, %v671
      %v673 = vrot.slane %v635, 7
      %v674 = vrot.slane %v636, 7
      %v675 = vsel %vm657, %v673, %v674
      %v676 = vrot.slane %v637, 7
      %v677 = vrot.slane %v638, 7
      %v678 = vsel %vm657, %v676, %v677
      %v679 = vrot.slane %v639, 7
      %v680 = vrot.slane %v640, 7
      %v681 = vsel %vm657, %v679, %v680
      %v706 = vrot.slane %v626, 6
      %v707 = vrot.slane %v628, 6
      %v708 = vrot.slane %v630, 6
      %v709 = vrot.slane %v632, 6
      %v710 = vrot.slane %v634, 6
      %v711 = vrot.slane %v636, 6
      %v712 = vrot.slane %v638, 6
      %v713 = vrot.slane %v640, 6
      %v722 = vsel %vm657, %v625, %v658
      %v723 = vsel %vm657, %v627, %v661
      %v724 = vsel %vm657, %v629, %v664
      %v725 = vsel %vm657, %v631, %v667
      %v726 = vsel %vm657, %v633, %v670
      %v727 = vsel %vm657, %v635, %v673
      %v728 = vsel %vm657, %v637, %v676
      %v729 = vsel %vm657, %v639, %v679
      %v730 = vsel %vm657, %v659, %v706
      %v731 = vsel %vm657, %v662, %v707
      %v732 = vsel %vm657, %v665, %v708
      %v733 = vsel %vm657, %v668, %v709
      %v734 = vsel %vm657, %v671, %v710
      %v735 = vsel %vm657, %v674, %v711
      %v736 = vsel %vm657, %v677, %v712
      %v737 = vsel %vm657, %v680, %v713
      %v738 = vmul.f32 %v722, 0.25
      %v739 = vmul.f32 %v660, 0.25
      %v740 = vmul.f32 %v730, 0.25
      %v741 = vmul.f32 %v723, 0.25
      %v742 = vmul.f32 %v663, 0.25
      %v743 = vmul.f32 %v731, 0.25
      %v744 = vmul.f32 %v724, 0.25
      %v745 = vmul.f32 %v666, 0.25
      %v746 = vmul.f32 %v732, 0.25
      %v747 = vmul.f32 %v725, 0.25
      %v748 = vmul.f32 %v669, 0.25
      %v749 = vmul.f32 %v733, 0.25
      %v750 = vmul.f32 %v726, 0.25
      %v751 = vmul.f32 %v672, 0.25
      %v752 = vmul.f32 %v734, 0.25
      %v753 = vmul.f32 %v727, 0.25
      %v754 = vmul.f32 %v675, 0.25
      %v755 = vmul.f32 %v735, 0.25
      %v756 = vmul.f32 %v723, 0.75
      %v757 = vmul.f32 %v663, 0.75
      %v758 = vmul.f32 %v731, 0.75
      %v759 = vmul.f32 %v724, 0.75
      %v760 = vmul.f32 %v666, 0.75
      %v761 = vmul.f32 %v732, 0.75
      %v762 = vmul.f32 %v725, 0.75
      %v763 = vmul.f32 %v669, 0.75
      %v764 = vmul.f32 %v733, 0.75
      %v765 = vmul.f32 %v726, 0.75
      %v766 = vmul.f32 %v672, 0.75
      %v767 = vmul.f32 %v734, 0.75
      %v768 = vmul.f32 %v727, 0.75
      %v769 = vmul.f32 %v675, 0.75
      %v770 = vmul.f32 %v735, 0.75
      %v771 = vmul.f32 %v728, 0.75
      %v772 = vmul.f32 %v678, 0.75
      %v773 = vmul.f32 %v736, 0.75
      %v774 = vadd.f32 %v738, %v756
      %v775 = vadd.f32 %v739, %v757
      %v776 = vadd.f32 %v740, %v758
      %v777 = vadd.f32 %v741, %v759
      %v778 = vadd.f32 %v742, %v760
      %v779 = vadd.f32 %v743, %v761
      %v780 = vadd.f32 %v744, %v762
      %v781 = vadd.f32 %v745, %v763
      %v782 = vadd.f32 %v746, %v764
      %v783 = vadd.f32 %v747, %v765
      %v784 = vadd.f32 %v748, %v766
      %v785 = vadd.f32 %v749, %v767
      %v786 = vadd.f32 %v750, %v768
      %v787 = vadd.f32 %v751, %v769
      %v788 = vadd.f32 %v752, %v770
      %v789 = vadd.f32 %v753, %v771
      %v790 = vadd.f32 %v754, %v772
      %v791 = vadd.f32 %v755, %v773
      %v792 = vmul.f32 %v728, 0.25
      %v793 = vmul.f32 %v678, 0.25
      %v794 = vmul.f32 %v736, 0.25
      %v795 = vmul.f32 %v729, 0.25
      %v796 = vmul.f32 %v681, 0.25
      %v797 = vmul.f32 %v737, 0.25
      %v798 = vadd.f32 %v756, %v744
      %v799 = vadd.f32 %v757, %v745
      %v800 = vadd.f32 %v758, %v746
      %v801 = vadd.f32 %v759, %v747
      %v802 = vadd.f32 %v760, %v748
      %v803 = vadd.f32 %v761, %v749
      %v804 = vadd.f32 %v762, %v750
      %v805 = vadd.f32 %v763, %v751
      %v806 = vadd.f32 %v764, %v752
      %v807 = vadd.f32 %v765, %v753
      %v808 = vadd.f32 %v766, %v754
      %v809 = vadd.f32 %v767, %v755
      %v810 = vadd.f32 %v768, %v792
      %v811 = vadd.f32 %v769, %v793
      %v812 = vadd.f32 %v770, %v794
      %v813 = vadd.f32 %v771, %v795
      %v814 = vadd.f32 %v772, %v796
      %v815 = vadd.f32 %v773, %v797
      %p816 = scmp.eq.s32.totalorder %s25, 0
      %s817 = scalar_select %p816, 0.0, 1.0
      %p818 = scmp.eq.s32.totalorder %s25, 3
      %s819 = scalar_select %p818, 0.0, 1.0
      %v820 = vstv %s817
      %v821 = vmul.f32 %v774, %v820
      %v822 = vmul.f32 %v775, %v820
      %v823 = vmul.f32 %v776, %v820
      %v824 = vstv %s819
      %v825 = vmul.f32 %v789, %v824
      %v826 = vmul.f32 %v790, %v824
      %v827 = vmul.f32 %v791, %v824
      %v828 = vmul.f32 %v798, %v820
      %v829 = vmul.f32 %v799, %v820
      %v830 = vmul.f32 %v800, %v820
      %v831 = vmul.f32 %v813, %v824
      %v832 = vmul.f32 %v814, %v824
      %v833 = vmul.f32 %v815, %v824
      %v834 = vmul.f32 %v821, 0.25
      %v835 = vmul.f32 %v822, 0.25
      %v836 = vmul.f32 %v777, 0.25
      %v837 = vmul.f32 %v778, 0.25
      %v838 = vmul.f32 %v780, 0.25
      %v839 = vmul.f32 %v781, 0.25
      %v840 = vmul.f32 %v783, 0.25
      %v841 = vmul.f32 %v784, 0.25
      %v842 = vmul.f32 %v786, 0.25
      %v843 = vmul.f32 %v787, 0.25
      %v844 = vmul.f32 %v825, 0.25
      %v845 = vmul.f32 %v826, 0.25
      %v846 = vmul.f32 %v821, 0.75
      %v847 = vmul.f32 %v822, 0.75
      %v848 = vmul.f32 %v823, 0.75
      %v849 = vmul.f32 %v777, 0.75
      %v850 = vmul.f32 %v778, 0.75
      %v851 = vmul.f32 %v779, 0.75
      %v852 = vmul.f32 %v780, 0.75
      %v853 = vmul.f32 %v781, 0.75
      %v854 = vmul.f32 %v782, 0.75
      %v855 = vmul.f32 %v783, 0.75
      %v856 = vmul.f32 %v784, 0.75
      %v857 = vmul.f32 %v785, 0.75
      %v858 = vmul.f32 %v786, 0.75
      %v859 = vmul.f32 %v787, 0.75
      %v860 = vmul.f32 %v788, 0.75
      %v861 = vmul.f32 %v825, 0.75
      %v862 = vmul.f32 %v826, 0.75
      %v863 = vmul.f32 %v827, 0.75
      %vm882 = vcmask 1046528
      %v883 = vrot.slane %v846, 1
      %v884 = vrot.slane %v847, 1
      %v885 = vsel %vm882, %v883, %v884
      %v886 = vrot.slane %v848, 1
      %v887 = vsel %vm882, %v884, %v886
      %v888 = vrot.slane %v849, 1
      %v889 = vrot.slane %v850, 1
      %v890 = vsel %vm882, %v888, %v889
      %v891 = vrot.slane %v851, 1
      %v892 = vsel %vm882, %v889, %v891
      %v893 = vrot.slane %v852, 1
      %v894 = vrot.slane %v853, 1
      %v895 = vsel %vm882, %v893, %v894
      %v896 = vrot.slane %v854, 1
      %v897 = vsel %vm882, %v894, %v896
      %v898 = vrot.slane %v855, 1
      %v899 = vrot.slane %v856, 1
      %v900 = vsel %vm882, %v898, %v899
      %v901 = vrot.slane %v857, 1
      %v902 = vsel %vm882, %v899, %v901
      %v903 = vrot.slane %v858, 1
      %v904 = vrot.slane %v859, 1
      %v905 = vsel %vm882, %v903, %v904
      %v906 = vrot.slane %v860, 1
      %v907 = vsel %vm882, %v904, %v906
      %v908 = vrot.slane %v861, 1
      %v909 = vrot.slane %v862, 1
      %v910 = vsel %vm882, %v908, %v909
      %v911 = vrot.slane %v863, 1
      %v912 = vsel %vm882, %v909, %v911
      %v925 = vadd.f32 %v834, %v885
      %v926 = vadd.f32 %v835, %v887
      %v927 = vadd.f32 %v836, %v890
      %v928 = vadd.f32 %v837, %v892
      %v929 = vadd.f32 %v838, %v895
      %v930 = vadd.f32 %v839, %v897
      %v931 = vadd.f32 %v840, %v900
      %v932 = vadd.f32 %v841, %v902
      %v933 = vadd.f32 %v842, %v905
      %v934 = vadd.f32 %v843, %v907
      %v935 = vadd.f32 %v844, %v910
      %v936 = vadd.f32 %v845, %v912
      %v937 = vmul.f32 %v823, 0.25
      %v938 = vmul.f32 %v779, 0.25
      %v939 = vmul.f32 %v782, 0.25
      %v940 = vmul.f32 %v785, 0.25
      %v941 = vmul.f32 %v788, 0.25
      %v942 = vmul.f32 %v827, 0.25
      %v961 = vrot.slane %v834, 1
      %v962 = vrot.slane %v835, 1
      %v963 = vsel %vm882, %v961, %v962
      %v964 = vrot.slane %v937, 1
      %v965 = vsel %vm882, %v962, %v964
      %v966 = vrot.slane %v836, 1
      %v967 = vrot.slane %v837, 1
      %v968 = vsel %vm882, %v966, %v967
      %v969 = vrot.slane %v938, 1
      %v970 = vsel %vm882, %v967, %v969
      %v971 = vrot.slane %v838, 1
      %v972 = vrot.slane %v839, 1
      %v973 = vsel %vm882, %v971, %v972
      %v974 = vrot.slane %v939, 1
      %v975 = vsel %vm882, %v972, %v974
      %v976 = vrot.slane %v840, 1
      %v977 = vrot.slane %v841, 1
      %v978 = vsel %vm882, %v976, %v977
      %v979 = vrot.slane %v940, 1
      %v980 = vsel %vm882, %v977, %v979
      %v981 = vrot.slane %v842, 1
      %v982 = vrot.slane %v843, 1
      %v983 = vsel %vm882, %v981, %v982
      %v984 = vrot.slane %v941, 1
      %v985 = vsel %vm882, %v982, %v984
      %v986 = vrot.slane %v844, 1
      %v987 = vrot.slane %v845, 1
      %v988 = vsel %vm882, %v986, %v987
      %v989 = vrot.slane %v942, 1
      %v990 = vsel %vm882, %v987, %v989
      %v1009 = vadd.f32 %v846, %v963
      %v1010 = vadd.f32 %v847, %v965
      %v1011 = vadd.f32 %v848, %v964
      %v1012 = vadd.f32 %v849, %v968
      %v1013 = vadd.f32 %v850, %v970
      %v1014 = vadd.f32 %v851, %v969
      %v1015 = vadd.f32 %v852, %v973
      %v1016 = vadd.f32 %v853, %v975
      %v1017 = vadd.f32 %v854, %v974
      %v1018 = vadd.f32 %v855, %v978
      %v1019 = vadd.f32 %v856, %v980
      %v1020 = vadd.f32 %v857, %v979
      %v1021 = vadd.f32 %v858, %v983
      %v1022 = vadd.f32 %v859, %v985
      %v1023 = vadd.f32 %v860, %v984
      %v1024 = vadd.f32 %v861, %v988
      %v1025 = vadd.f32 %v862, %v990
      %v1026 = vadd.f32 %v863, %v989
      %v1027 = vmul.f32 %v828, 0.25
      %v1028 = vmul.f32 %v829, 0.25
      %v1029 = vmul.f32 %v801, 0.25
      %v1030 = vmul.f32 %v802, 0.25
      %v1031 = vmul.f32 %v804, 0.25
      %v1032 = vmul.f32 %v805, 0.25
      %v1033 = vmul.f32 %v807, 0.25
      %v1034 = vmul.f32 %v808, 0.25
      %v1035 = vmul.f32 %v810, 0.25
      %v1036 = vmul.f32 %v811, 0.25
      %v1037 = vmul.f32 %v831, 0.25
      %v1038 = vmul.f32 %v832, 0.25
      %v1039 = vmul.f32 %v828, 0.75
      %v1040 = vmul.f32 %v829, 0.75
      %v1041 = vmul.f32 %v830, 0.75
      %v1042 = vmul.f32 %v801, 0.75
      %v1043 = vmul.f32 %v802, 0.75
      %v1044 = vmul.f32 %v803, 0.75
      %v1045 = vmul.f32 %v804, 0.75
      %v1046 = vmul.f32 %v805, 0.75
      %v1047 = vmul.f32 %v806, 0.75
      %v1048 = vmul.f32 %v807, 0.75
      %v1049 = vmul.f32 %v808, 0.75
      %v1050 = vmul.f32 %v809, 0.75
      %v1051 = vmul.f32 %v810, 0.75
      %v1052 = vmul.f32 %v811, 0.75
      %v1053 = vmul.f32 %v812, 0.75
      %v1054 = vmul.f32 %v831, 0.75
      %v1055 = vmul.f32 %v832, 0.75
      %v1056 = vmul.f32 %v833, 0.75
      %v1075 = vrot.slane %v1039, 1
      %v1076 = vrot.slane %v1040, 1
      %v1077 = vsel %vm882, %v1075, %v1076
      %v1078 = vrot.slane %v1041, 1
      %v1079 = vsel %vm882, %v1076, %v1078
      %v1080 = vrot.slane %v1042, 1
      %v1081 = vrot.slane %v1043, 1
      %v1082 = vsel %vm882, %v1080, %v1081
      %v1083 = vrot.slane %v1044, 1
      %v1084 = vsel %vm882, %v1081, %v1083
      %v1085 = vrot.slane %v1045, 1
      %v1086 = vrot.slane %v1046, 1
      %v1087 = vsel %vm882, %v1085, %v1086
      %v1088 = vrot.slane %v1047, 1
      %v1089 = vsel %vm882, %v1086, %v1088
      %v1090 = vrot.slane %v1048, 1
      %v1091 = vrot.slane %v1049, 1
      %v1092 = vsel %vm882, %v1090, %v1091
      %v1093 = vrot.slane %v1050, 1
      %v1094 = vsel %vm882, %v1091, %v1093
      %v1095 = vrot.slane %v1051, 1
      %v1096 = vrot.slane %v1052, 1
      %v1097 = vsel %vm882, %v1095, %v1096
      %v1098 = vrot.slane %v1053, 1
      %v1099 = vsel %vm882, %v1096, %v1098
      %v1100 = vrot.slane %v1054, 1
      %v1101 = vrot.slane %v1055, 1
      %v1102 = vsel %vm882, %v1100, %v1101
      %v1103 = vrot.slane %v1056, 1
      %v1104 = vsel %vm882, %v1101, %v1103
      %v1117 = vadd.f32 %v1027, %v1077
      %v1118 = vadd.f32 %v1028, %v1079
      %v1119 = vadd.f32 %v1029, %v1082
      %v1120 = vadd.f32 %v1030, %v1084
      %v1121 = vadd.f32 %v1031, %v1087
      %v1122 = vadd.f32 %v1032, %v1089
      %v1123 = vadd.f32 %v1033, %v1092
      %v1124 = vadd.f32 %v1034, %v1094
      %v1125 = vadd.f32 %v1035, %v1097
      %v1126 = vadd.f32 %v1036, %v1099
      %v1127 = vadd.f32 %v1037, %v1102
      %v1128 = vadd.f32 %v1038, %v1104
      %v1129 = vmul.f32 %v830, 0.25
      %v1130 = vmul.f32 %v803, 0.25
      %v1131 = vmul.f32 %v806, 0.25
      %v1132 = vmul.f32 %v809, 0.25
      %v1133 = vmul.f32 %v812, 0.25
      %v1134 = vmul.f32 %v833, 0.25
      %v1153 = vrot.slane %v1027, 1
      %v1154 = vrot.slane %v1028, 1
      %v1155 = vsel %vm882, %v1153, %v1154
      %v1156 = vrot.slane %v1129, 1
      %v1157 = vsel %vm882, %v1154, %v1156
      %v1158 = vrot.slane %v1029, 1
      %v1159 = vrot.slane %v1030, 1
      %v1160 = vsel %vm882, %v1158, %v1159
      %v1161 = vrot.slane %v1130, 1
      %v1162 = vsel %vm882, %v1159, %v1161
      %v1163 = vrot.slane %v1031, 1
      %v1164 = vrot.slane %v1032, 1
      %v1165 = vsel %vm882, %v1163, %v1164
      %v1166 = vrot.slane %v1131, 1
      %v1167 = vsel %vm882, %v1164, %v1166
      %v1168 = vrot.slane %v1033, 1
      %v1169 = vrot.slane %v1034, 1
      %v1170 = vsel %vm882, %v1168, %v1169
      %v1171 = vrot.slane %v1132, 1
      %v1172 = vsel %vm882, %v1169, %v1171
      %v1173 = vrot.slane %v1035, 1
      %v1174 = vrot.slane %v1036, 1
      %v1175 = vsel %vm882, %v1173, %v1174
      %v1176 = vrot.slane %v1133, 1
      %v1177 = vsel %vm882, %v1174, %v1176
      %v1178 = vrot.slane %v1037, 1
      %v1179 = vrot.slane %v1038, 1
      %v1180 = vsel %vm882, %v1178, %v1179
      %v1181 = vrot.slane %v1134, 1
      %v1182 = vsel %vm882, %v1179, %v1181
      %v1201 = vadd.f32 %v1039, %v1155
      %v1202 = vadd.f32 %v1040, %v1157
      %v1203 = vadd.f32 %v1041, %v1156
      %v1204 = vadd.f32 %v1042, %v1160
      %v1205 = vadd.f32 %v1043, %v1162
      %v1206 = vadd.f32 %v1044, %v1161
      %v1207 = vadd.f32 %v1045, %v1165
      %v1208 = vadd.f32 %v1046, %v1167
      %v1209 = vadd.f32 %v1047, %v1166
      %v1210 = vadd.f32 %v1048, %v1170
      %v1211 = vadd.f32 %v1049, %v1172
      %v1212 = vadd.f32 %v1050, %v1171
      %v1213 = vadd.f32 %v1051, %v1175
      %v1214 = vadd.f32 %v1052, %v1177
      %v1215 = vadd.f32 %v1053, %v1176
      %v1216 = vadd.f32 %v1054, %v1180
      %v1217 = vadd.f32 %v1055, %v1182
      %v1218 = vadd.f32 %v1056, %v1181
      %v1231 = vrot.slane %v925, 1
      %v1232 = vrot.slane %v925, 2
      %v1233 = vrot.slane %v925, 3
      %v1234 = vrot.slane %v925, 4
      %v1235 = vrot.slane %v925, 5
      %v1236 = vrot.slane %v925, 6
      %v1237 = vrot.slane %v925, 7
      %v1238 = vrot.slane %v926, 1
      %v1239 = vrot.slane %v926, 2
      %v1240 = vrot.slane %v926, 3
      %v1241 = vrot.slane %v926, 4
      %v1242 = vrot.slane %v926, 5
      %v1243 = vrot.slane %v926, 6
      %v1244 = vrot.slane %v926, 7
      %v1245 = vrot.slane %v927, 1
      %v1246 = vrot.slane %v927, 2
      %v1247 = vrot.slane %v927, 3
      %v1248 = vrot.slane %v927, 4
      %v1249 = vrot.slane %v927, 5
      %v1250 = vrot.slane %v927, 6
      %v1251 = vrot.slane %v927, 7
      %v1252 = vrot.slane %v928, 1
      %v1253 = vrot.slane %v928, 2
      %v1254 = vrot.slane %v928, 3
      %v1255 = vrot.slane %v928, 4
      %v1256 = vrot.slane %v928, 5
      %v1257 = vrot.slane %v928, 6
      %v1258 = vrot.slane %v928, 7
      %v1259 = vrot.slane %v929, 1
      %v1260 = vrot.slane %v929, 2
      %v1261 = vrot.slane %v929, 3
      %v1262 = vrot.slane %v929, 4
      %v1263 = vrot.slane %v929, 5
      %v1264 = vrot.slane %v929, 6
      %v1265 = vrot.slane %v929, 7
      %v1266 = vrot.slane %v930, 1
      %v1267 = vrot.slane %v930, 2
      %v1268 = vrot.slane %v930, 3
      %v1269 = vrot.slane %v930, 4
      %v1270 = vrot.slane %v930, 5
      %v1271 = vrot.slane %v930, 6
      %v1272 = vrot.slane %v930, 7
      %v1273 = vrot.slane %v931, 1
      %v1274 = vrot.slane %v931, 2
      %v1275 = vrot.slane %v931, 3
      %v1276 = vrot.slane %v931, 4
      %v1277 = vrot.slane %v931, 5
      %v1278 = vrot.slane %v931, 6
      %v1279 = vrot.slane %v931, 7
      %v1280 = vrot.slane %v932, 1
      %v1281 = vrot.slane %v932, 2
      %v1282 = vrot.slane %v932, 3
      %v1283 = vrot.slane %v932, 4
      %v1284 = vrot.slane %v932, 5
      %v1285 = vrot.slane %v932, 6
      %v1286 = vrot.slane %v932, 7
      %v1287 = vrot.slane %v933, 1
      %v1288 = vrot.slane %v933, 2
      %v1289 = vrot.slane %v933, 3
      %v1290 = vrot.slane %v933, 4
      %v1291 = vrot.slane %v933, 5
      %v1292 = vrot.slane %v933, 6
      %v1293 = vrot.slane %v933, 7
      %v1294 = vrot.slane %v934, 1
      %v1295 = vrot.slane %v934, 2
      %v1296 = vrot.slane %v934, 3
      %v1297 = vrot.slane %v934, 4
      %v1298 = vrot.slane %v934, 5
      %v1299 = vrot.slane %v934, 6
      %v1300 = vrot.slane %v934, 7
      %v1301 = vrot.slane %v935, 1
      %v1302 = vrot.slane %v935, 2
      %v1303 = vrot.slane %v935, 3
      %v1304 = vrot.slane %v935, 4
      %v1305 = vrot.slane %v935, 5
      %v1306 = vrot.slane %v935, 6
      %v1307 = vrot.slane %v935, 7
      %v1308 = vrot.slane %v936, 1
      %v1309 = vrot.slane %v936, 2
      %v1310 = vrot.slane %v936, 3
      %v1311 = vrot.slane %v936, 4
      %v1312 = vrot.slane %v936, 5
      %v1313 = vrot.slane %v936, 6
      %v1314 = vrot.slane %v936, 7
      %1417 = vst [vmem:[#allocation1] sm:$0xff] %v1009
      %s1418 = scalar_lea.vmem [#allocation1], 1
      %v1419 = vld [vmem:[%s1418] ss:$9 sm:$0xff]
      %s1420 = scalar_lea.vmem [#allocation1], 2
      %v1421 = vld [vmem:[%s1420] ss:$9 sm:$0xff]
      %s1422 = scalar_lea.vmem [#allocation1], 3
      %v1423 = vld [vmem:[%s1422] ss:$9 sm:$0xff]
      %s1424 = scalar_lea.vmem [#allocation1], 4
      %v1425 = vld [vmem:[%s1424] ss:$9 sm:$0xff]
      %s1426 = scalar_lea.vmem [#allocation1], 5
      %v1427 = vld [vmem:[%s1426] ss:$9 sm:$0xff]
      %s1428 = scalar_lea.vmem [#allocation1], 6
      %v1429 = vld [vmem:[%s1428] ss:$9 sm:$0xff]
      %s1430 = scalar_lea.vmem [#allocation1], 7
      %v1431 = vld [vmem:[%s1430] ss:$9 sm:$0xff]
      %1432 = vst [vmem:[#allocation1] sm:$0xff] %v1010
      %v1433 = vld [vmem:[#allocation1] ss:$9 sm:$0xff]
      %v1434 = vld [vmem:[%s1418] ss:$9 sm:$0xff]
      %v1435 = vld [vmem:[%s1420] ss:$9 sm:$0xff]
      %v1436 = vld [vmem:[%s1422] ss:$9 sm:$0xff]
      %v1437 = vld [vmem:[%s1424] ss:$9 sm:$0xff]
      %v1438 = vld [vmem:[%s1426] ss:$9 sm:$0xff]
      %v1439 = vld [vmem:[%s1428] ss:$9 sm:$0xff]
      %v1440 = vld [vmem:[%s1430] ss:$9 sm:$0xff]
      %1441 = vst [vmem:[#allocation1] sm:$0xff] %v1011
      %v1442 = vld [vmem:[#allocation1] ss:$9 sm:$0xff]
      %1443 = vst [vmem:[#allocation1] sm:$0xff] %v1012
      %v1444 = vld [vmem:[%s1418] ss:$9 sm:$0xff]
      %v1445 = vld [vmem:[%s1420] ss:$9 sm:$0xff]
      %v1446 = vld [vmem:[%s1422] ss:$9 sm:$0xff]
      %v1447 = vld [vmem:[%s1424] ss:$9 sm:$0xff]
      %v1448 = vld [vmem:[%s1426] ss:$9 sm:$0xff]
      %v1449 = vld [vmem:[%s1428] ss:$9 sm:$0xff]
      %v1450 = vld [vmem:[%s1430] ss:$9 sm:$0xff]
      %1451 = vst [vmem:[#allocation1] sm:$0xff] %v1013
      %v1452 = vld [vmem:[#allocation1] ss:$9 sm:$0xff]
      %v1453 = vld [vmem:[%s1418] ss:$9 sm:$0xff]
      %v1454 = vld [vmem:[%s1420] ss:$9 sm:$0xff]
      %v1455 = vld [vmem:[%s1422] ss:$9 sm:$0xff]
      %v1456 = vld [vmem:[%s1424] ss:$9 sm:$0xff]
      %v1457 = vld [vmem:[%s1426] ss:$9 sm:$0xff]
      %v1458 = vld [vmem:[%s1428] ss:$9 sm:$0xff]
      %v1459 = vld [vmem:[%s1430] ss:$9 sm:$0xff]
      %1460 = vst [vmem:[#allocation1] sm:$0xff] %v1014
      %v1461 = vld [vmem:[#allocation1] ss:$9 sm:$0xff]
      %1462 = vst [vmem:[#allocation1] sm:$0xff] %v1015
      %v1463 = vld [vmem:[%s1418] ss:$9 sm:$0xff]
      %v1464 = vld [vmem:[%s1420] ss:$9 sm:$0xff]
      %v1465 = vld [vmem:[%s1422] ss:$9 sm:$0xff]
      %v1466 = vld [vmem:[%s1424] ss:$9 sm:$0xff]
      %v1467 = vld [vmem:[%s1426] ss:$9 sm:$0xff]
      %v1468 = vld [vmem:[%s1428] ss:$9 sm:$0xff]
      %v1469 = vld [vmem:[%s1430] ss:$9 sm:$0xff]
      %1470 = vst [vmem:[#allocation1] sm:$0xff] %v1016
      %v1471 = vld [vmem:[#allocation1] ss:$9 sm:$0xff]
      %v1472 = vld [vmem:[%s1418] ss:$9 sm:$0xff]
      %v1473 = vld [vmem:[%s1420] ss:$9 sm:$0xff]
      %v1474 = vld [vmem:[%s1422] ss:$9 sm:$0xff]
      %v1475 = vld [vmem:[%s1424] ss:$9 sm:$0xff]
      %v1476 = vld [vmem:[%s1426] ss:$9 sm:$0xff]
      %v1477 = vld [vmem:[%s1428] ss:$9 sm:$0xff]
      %v1478 = vld [vmem:[%s1430] ss:$9 sm:$0xff]
      %1479 = vst [vmem:[#allocation1] sm:$0xff] %v1017
      %v1480 = vld [vmem:[#allocation1] ss:$9 sm:$0xff]
      %1481 = vst [vmem:[#allocation1] sm:$0xff] %v1018
      %v1482 = vld [vmem:[%s1418] ss:$9 sm:$0xff]
      %v1483 = vld [vmem:[%s1420] ss:$9 sm:$0xff]
      %v1484 = vld [vmem:[%s1422] ss:$9 sm:$0xff]
      %v1485 = vld [vmem:[%s1424] ss:$9 sm:$0xff]
      %v1486 = vld [vmem:[%s1426] ss:$9 sm:$0xff]
      %v1487 = vld [vmem:[%s1428] ss:$9 sm:$0xff]
      %v1488 = vld [vmem:[%s1430] ss:$9 sm:$0xff]
      %1489 = vst [vmem:[#allocation1] sm:$0xff] %v1019
      %v1490 = vld [vmem:[#allocation1] ss:$9 sm:$0xff]
      %v1491 = vld [vmem:[%s1418] ss:$9 sm:$0xff]
      %v1492 = vld [vmem:[%s1420] ss:$9 sm:$0xff]
      %v1493 = vld [vmem:[%s1422] ss:$9 sm:$0xff]
      %v1494 = vld [vmem:[%s1424] ss:$9 sm:$0xff]
      %v1495 = vld [vmem:[%s1426] ss:$9 sm:$0xff]
      %v1496 = vld [vmem:[%s1428] ss:$9 sm:$0xff]
      %v1497 = vld [vmem:[%s1430] ss:$9 sm:$0xff]
      %1498 = vst [vmem:[#allocation1] sm:$0xff] %v1020
      %v1499 = vld [vmem:[#allocation1] ss:$9 sm:$0xff]
      %1500 = vst [vmem:[#allocation1] sm:$0xff] %v1021
      %v1501 = vld [vmem:[%s1418] ss:$9 sm:$0xff]
      %v1502 = vld [vmem:[%s1420] ss:$9 sm:$0xff]
      %v1503 = vld [vmem:[%s1422] ss:$9 sm:$0xff]
      %v1504 = vld [vmem:[%s1424] ss:$9 sm:$0xff]
      %v1505 = vld [vmem:[%s1426] ss:$9 sm:$0xff]
      %v1506 = vld [vmem:[%s1428] ss:$9 sm:$0xff]
      %v1507 = vld [vmem:[%s1430] ss:$9 sm:$0xff]
      %1508 = vst [vmem:[#allocation1] sm:$0xff] %v1022
      %v1509 = vld [vmem:[#allocation1] ss:$9 sm:$0xff]
      %v1510 = vld [vmem:[%s1418] ss:$9 sm:$0xff]
      %v1511 = vld [vmem:[%s1420] ss:$9 sm:$0xff]
      %v1512 = vld [vmem:[%s1422] ss:$9 sm:$0xff]
      %v1513 = vld [vmem:[%s1424] ss:$9 sm:$0xff]
      %v1514 = vld [vmem:[%s1426] ss:$9 sm:$0xff]
      %v1515 = vld [vmem:[%s1428] ss:$9 sm:$0xff]
      %v1516 = vld [vmem:[%s1430] ss:$9 sm:$0xff]
      %1517 = vst [vmem:[#allocation1] sm:$0xff] %v1023
      %v1518 = vld [vmem:[#allocation1] ss:$9 sm:$0xff]
      %1519 = vst [vmem:[#allocation1] sm:$0xff] %v1024
      %v1520 = vld [vmem:[%s1418] ss:$9 sm:$0xff]
      %v1521 = vld [vmem:[%s1420] ss:$9 sm:$0xff]
      %v1522 = vld [vmem:[%s1422] ss:$9 sm:$0xff]
      %v1523 = vld [vmem:[%s1424] ss:$9 sm:$0xff]
      %v1524 = vld [vmem:[%s1426] ss:$9 sm:$0xff]
      %v1525 = vld [vmem:[%s1428] ss:$9 sm:$0xff]
      %v1526 = vld [vmem:[%s1430] ss:$9 sm:$0xff]
      %1527 = vst [vmem:[#allocation1] sm:$0xff] %v1025
      %v1528 = vld [vmem:[#allocation1] ss:$9 sm:$0xff]
      %v1529 = vld [vmem:[%s1418] ss:$9 sm:$0xff]
      %v1530 = vld [vmem:[%s1420] ss:$9 sm:$0xff]
      %v1531 = vld [vmem:[%s1422] ss:$9 sm:$0xff]
      %v1532 = vld [vmem:[%s1424] ss:$9 sm:$0xff]
      %v1533 = vld [vmem:[%s1426] ss:$9 sm:$0xff]
      %v1534 = vld [vmem:[%s1428] ss:$9 sm:$0xff]
      %v1535 = vld [vmem:[%s1430] ss:$9 sm:$0xff]
      %1536 = vst [vmem:[#allocation1] sm:$0xff] %v1026
      %v1537 = vld [vmem:[#allocation1] ss:$9 sm:$0xff]
      %v1538 = vperm.slane %v1419, 0
      %v1539 = vperm.slane %v1421, 0
      %v1540 = vperm.slane %v1423, 0
      %v1541 = vperm.slane %v1425, 0
      %v1542 = vperm.slane %v1427, 0
      %v1543 = vperm.slane %v1429, 0
      %v1544 = vperm.slane %v1431, 0
      %v1545 = vperm.slane %v1433, 0
      %v1546 = vperm.slane %v1434, 0
      %v1547 = vperm.slane %v1435, 0
      %v1548 = vperm.slane %v1436, 0
      %v1549 = vperm.slane %v1437, 0
      %v1550 = vperm.slane %v1438, 0
      %v1551 = vperm.slane %v1439, 0
      %v1552 = vperm.slane %v1440, 0
      %v1553 = vperm.slane %v1442, 0
      %v1554 = vperm.slane %v1444, 0
      %v1555 = vperm.slane %v1445, 0
      %v1556 = vperm.slane %v1446, 0
      %v1557 = vperm.slane %v1447, 0
      %v1558 = vperm.slane %v1448, 0
      %v1559 = vperm.slane %v1449, 0
      %v1560 = vperm.slane %v1450, 0
      %v1561 = vperm.slane %v1452, 0
      %v1562 = vperm.slane %v1453, 0
      %v1563 = vperm.slane %v1454, 0
      %v1564 = vperm.slane %v1455, 0
      %v1565 = vperm.slane %v1456, 0
      %v1566 = vperm.slane %v1457, 0
      %v1567 = vperm.slane %v1458, 0
      %v1568 = vperm.slane %v1459, 0
      %v1569 = vperm.slane %v1461, 0
      %v1570 = vperm.slane %v1463, 0
      %v1571 = vperm.slane %v1464, 0
      %v1572 = vperm.slane %v1465, 0
      %v1573 = vperm.slane %v1466, 0
      %v1574 = vperm.slane %v1467, 0
      %v1575 = vperm.slane %v1468, 0
      %v1576 = vperm.slane %v1469, 0
      %v1577 = vperm.slane %v1471, 0
      %v1578 = vperm.slane %v1472, 0
      %v1579 = vperm.slane %v1473, 0
      %v1580 = vperm.slane %v1474, 0
      %v1581 = vperm.slane %v1475, 0
      %v1582 = vperm.slane %v1476, 0
      %v1583 = vperm.slane %v1477, 0
      %v1584 = vperm.slane %v1478, 0
      %v1585 = vperm.slane %v1480, 0
      %v1586 = vperm.slane %v1482, 0
      %v1587 = vperm.slane %v1483, 0
      %v1588 = vperm.slane %v1484, 0
      %v1589 = vperm.slane %v1485, 0
      %v1590 = vperm.slane %v1486, 0
      %v1591 = vperm.slane %v1487, 0
      %v1592 = vperm.slane %v1488, 0
      %v1593 = vperm.slane %v1490, 0
      %v1594 = vperm.slane %v1491, 0
      %v1595 = vperm.slane %v1492, 0
      %v1596 = vperm.slane %v1493, 0
      %v1597 = vperm.slane %v1494, 0
      %v1598 = vperm.slane %v1495, 0
      %v1599 = vperm.slane %v1496, 0
      %v1600 = vperm.slane %v1497, 0
      %v1601 = vperm.slane %v1499, 0
      %v1602 = vperm.slane %v1501, 0
      %v1603 = vperm.slane %v1502, 0
      %v1604 = vperm.slane %v1503, 0
      %v1605 = vperm.slane %v1504, 0
      %v1606 = vperm.slane %v1505, 0
      %v1607 = vperm.slane %v1506, 0
      %v1608 = vperm.slane %v1507, 0
      %v1609 = vperm.slane %v1509, 0
      %v1610 = vperm.slane %v1510, 0
      %v1611 = vperm.slane %v1511, 0
      %v1612 = vperm.slane %v1512, 0
      %v1613 = vperm.slane %v1513, 0
      %v1614 = vperm.slane %v1514, 0
      %v1615 = vperm.slane %v1515, 0
      %v1616 = vperm.slane %v1516, 0
      %v1617 = vperm.slane %v1518, 0
      %v1618 = vperm.slane %v1520, 0
      %v1619 = vperm.slane %v1521, 0
      %v1620 = vperm.slane %v1522, 0
      %v1621 = vperm.slane %v1523, 0
      %v1622 = vperm.slane %v1524, 0
      %v1623 = vperm.slane %v1525, 0
      %v1624 = vperm.slane %v1526, 0
      %v1625 = vperm.slane %v1528, 0
      %v1626 = vperm.slane %v1529, 0
      %v1627 = vperm.slane %v1530, 0
      %v1628 = vperm.slane %v1531, 0
      %v1629 = vperm.slane %v1532, 0
      %v1630 = vperm.slane %v1533, 0
      %v1631 = vperm.slane %v1534, 0
      %v1632 = vperm.slane %v1535, 0
      %v1633 = vperm.slane %v1537, 0
      %v1730 = vsel %vm657, %v925, %v1538
      %v1731 = vsel %vm657, %v1231, %v1539
      %v1732 = vsel %vm657, %v1232, %v1540
      %v1733 = vsel %vm657, %v1233, %v1541
      %v1734 = vsel %vm657, %v1234, %v1542
      %v1735 = vsel %vm657, %v1235, %v1543
      %v1736 = vsel %vm657, %v1236, %v1544
      %v1737 = vsel %vm657, %v1237, %v1545
      %v1738 = vsel %vm657, %v926, %v1546
      %v1739 = vsel %vm657, %v1238, %v1547
      %v1740 = vsel %vm657, %v1239, %v1548
      %v1741 = vsel %vm657, %v1240, %v1549
      %v1742 = vsel %vm657, %v1241, %v1550
      %v1743 = vsel %vm657, %v1242, %v1551
      %v1744 = vsel %vm657, %v1243, %v1552
      %v1745 = vsel %vm657, %v1244, %v1553
      %v1746 = vsel %vm657, %v927, %v1554
      %v1747 = vsel %vm657, %v1245, %v1555
      %v1748 = vsel %vm657, %v1246, %v1556
      %v1749 = vsel %vm657, %v1247, %v1557
      %v1750 = vsel %vm657, %v1248, %v1558
      %v1751 = vsel %vm657, %v1249, %v1559
      %v1752 = vsel %vm657, %v1250, %v1560
      %v1753 = vsel %vm657, %v1251, %v1561
      %v1754 = vsel %vm657, %v928, %v1562
      %v1755 = vsel %vm657, %v1252, %v1563
      %v1756 = vsel %vm657, %v1253, %v1564
      %v1757 = vsel %vm657, %v1254, %v1565
      %v1758 = vsel %vm657, %v1255, %v1566
      %v1759 = vsel %vm657, %v1256, %v1567
      %v1760 = vsel %vm657, %v1257, %v1568
      %v1761 = vsel %vm657, %v1258, %v1569
      %v1762 = vsel %vm657, %v929, %v1570
      %v1763 = vsel %vm657, %v1259, %v1571
      %v1764 = vsel %vm657, %v1260, %v1572
      %v1765 = vsel %vm657, %v1261, %v1573
      %v1766 = vsel %vm657, %v1262, %v1574
      %v1767 = vsel %vm657, %v1263, %v1575
      %v1768 = vsel %vm657, %v1264, %v1576
      %v1769 = vsel %vm657, %v1265, %v1577
      %v1770 = vsel %vm657, %v930, %v1578
      %v1771 = vsel %vm657, %v1266, %v1579
      %v1772 = vsel %vm657, %v1267, %v1580
      %v1773 = vsel %vm657, %v1268, %v1581
      %v1774 = vsel %vm657, %v1269, %v1582
      %v1775 = vsel %vm657, %v1270, %v1583
      %v1776 = vsel %vm657, %v1271, %v1584
      %v1777 = vsel %vm657, %v1272, %v1585
      %v1778 = vsel %vm657, %v931, %v1586
      %v1779 = vsel %vm657, %v1273, %v1587
      %v1780 = vsel %vm657, %v1274, %v1588
      %v1781 = vsel %vm657, %v1275, %v1589
      %v1782 = vsel %vm657, %v1276, %v1590
      %v1783 = vsel %vm657, %v1277, %v1591
      %v1784 = vsel %vm657, %v1278, %v1592
      %v1785 = vsel %vm657, %v1279, %v1593
      %v1786 = vsel %vm657, %v932, %v1594
      %v1787 = vsel %vm657, %v1280, %v1595
      %v1788 = vsel %vm657, %v1281, %v1596
      %v1789 = vsel %vm657, %v1282, %v1597
      %v1790 = vsel %vm657, %v1283, %v1598
      %v1791 = vsel %vm657, %v1284, %v1599
      %v1792 = vsel %vm657, %v1285, %v1600
      %v1793 = vsel %vm657, %v1286, %v1601
      %v1794 = vsel %vm657, %v933, %v1602
      %v1795 = vsel %vm657, %v1287, %v1603
      %v1796 = vsel %vm657, %v1288, %v1604
      %v1797 = vsel %vm657, %v1289, %v1605
      %v1798 = vsel %vm657, %v1290, %v1606
      %v1799 = vsel %vm657, %v1291, %v1607
      %v1800 = vsel %vm657, %v1292, %v1608
      %v1801 = vsel %vm657, %v1293, %v1609
      %v1802 = vsel %vm657, %v934, %v1610
      %v1803 = vsel %vm657, %v1294, %v1611
      %v1804 = vsel %vm657, %v1295, %v1612
      %v1805 = vsel %vm657, %v1296, %v1613
      %v1806 = vsel %vm657, %v1297, %v1614
      %v1807 = vsel %vm657, %v1298, %v1615
      %v1808 = vsel %vm657, %v1299, %v1616
      %v1809 = vsel %vm657, %v1300, %v1617
      %v1810 = vsel %vm657, %v935, %v1618
      %v1811 = vsel %vm657, %v1301, %v1619
      %v1812 = vsel %vm657, %v1302, %v1620
      %v1813 = vsel %vm657, %v1303, %v1621
      %v1814 = vsel %vm657, %v1304, %v1622
      %v1815 = vsel %vm657, %v1305, %v1623
      %v1816 = vsel %vm657, %v1306, %v1624
      %v1817 = vsel %vm657, %v1307, %v1625
      %v1818 = vsel %vm657, %v936, %v1626
      %v1819 = vsel %vm657, %v1308, %v1627
      %v1820 = vsel %vm657, %v1309, %v1628
      %v1821 = vsel %vm657, %v1310, %v1629
      %v1822 = vsel %vm657, %v1311, %v1630
      %v1823 = vsel %vm657, %v1312, %v1631
      %v1824 = vsel %vm657, %v1313, %v1632
      %v1825 = vsel %vm657, %v1314, %v1633
      %v1838 = vrot.slane %v1117, 1
      %v1839 = vrot.slane %v1117, 2
      %v1840 = vrot.slane %v1117, 3
      %v1841 = vrot.slane %v1117, 4
      %v1842 = vrot.slane %v1117, 5
      %v1843 = vrot.slane %v1117, 6
      %v1844 = vrot.slane %v1117, 7
      %v1845 = vrot.slane %v1118, 1
      %v1846 = vrot.slane %v1118, 2
      %v1847 = vrot.slane %v1118, 3
      %v1848 = vrot.slane %v1118, 4
      %v1849 = vrot.slane %v1118, 5
      %v1850 = vrot.slane %v1118, 6
      %v1851 = vrot.slane %v1118, 7
      %v1852 = vrot.slane %v1119, 1
      %v1853 = vrot.slane %v1119, 2
      %v1854 = vrot.slane %v1119, 3
      %v1855 = vrot.slane %v1119, 4
      %v1856 = vrot.slane %v1119, 5
      %v1857 = vrot.slane %v1119, 6
      %v1858 = vrot.slane %v1119, 7
      %v1859 = vrot.slane %v1120, 1
      %v1860 = vrot.slane %v1120, 2
      %v1861 = vrot.slane %v1120, 3
      %v1862 = vrot.slane %v1120, 4
      %v1863 = vrot.slane %v1120, 5
      %v1864 = vrot.slane %v1120, 6
      %v1865 = vrot.slane %v1120, 7
      %v1866 = vrot.slane %v1121, 1
      %v1867 = vrot.slane %v1121, 2
      %v1868 = vrot.slane %v1121, 3
      %v1869 = vrot.slane %v1121, 4
      %v1870 = vrot.slane %v1121, 5
      %v1871 = vrot.slane %v1121, 6
      %v1872 = vrot.slane %v1121, 7
      %v1873 = vrot.slane %v1122, 1
      %v1874 = vrot.slane %v1122, 2
      %v1875 = vrot.slane %v1122, 3
      %v1876 = vrot.slane %v1122, 4
      %v1877 = vrot.slane %v1122, 5
      %v1878 = vrot.slane %v1122, 6
      %v1879 = vrot.slane %v1122, 7
      %v1880 = vrot.slane %v1123, 1
      %v1881 = vrot.slane %v1123, 2
      %v1882 = vrot.slane %v1123, 3
      %v1883 = vrot.slane %v1123, 4
      %v1884 = vrot.slane %v1123, 5
      %v1885 = vrot.slane %v1123, 6
      %v1886 = vrot.slane %v1123, 7
      %v1887 = vrot.slane %v1124, 1
      %v1888 = vrot.slane %v1124, 2
      %v1889 = vrot.slane %v1124, 3
      %v1890 = vrot.slane %v1124, 4
      %v1891 = vrot.slane %v1124, 5
      %v1892 = vrot.slane %v1124, 6
      %v1893 = vrot.slane %v1124, 7
      %v1894 = vrot.slane %v1125, 1
      %v1895 = vrot.slane %v1125, 2
      %v1896 = vrot.slane %v1125, 3
      %v1897 = vrot.slane %v1125, 4
      %v1898 = vrot.slane %v1125, 5
      %v1899 = vrot.slane %v1125, 6
      %v1900 = vrot.slane %v1125, 7
      %v1901 = vrot.slane %v1126, 1
      %v1902 = vrot.slane %v1126, 2
      %v1903 = vrot.slane %v1126, 3
      %v1904 = vrot.slane %v1126, 4
      %v1905 = vrot.slane %v1126, 5
      %v1906 = vrot.slane %v1126, 6
      %v1907 = vrot.slane %v1126, 7
      %v1908 = vrot.slane %v1127, 1
      %v1909 = vrot.slane %v1127, 2
      %v1910 = vrot.slane %v1127, 3
      %v1911 = vrot.slane %v1127, 4
      %v1912 = vrot.slane %v1127, 5
      %v1913 = vrot.slane %v1127, 6
      %v1914 = vrot.slane %v1127, 7
      %v1915 = vrot.slane %v1128, 1
      %v1916 = vrot.slane %v1128, 2
      %v1917 = vrot.slane %v1128, 3
      %v1918 = vrot.slane %v1128, 4
      %v1919 = vrot.slane %v1128, 5
      %v1920 = vrot.slane %v1128, 6
      %v1921 = vrot.slane %v1128, 7
      %2024 = vst [vmem:[#allocation1] sm:$0xff] %v1201
      %s2025 = scalar_lea.vmem [#allocation1], 1
      %v2026 = vld [vmem:[%s2025] ss:$9 sm:$0xff]
      %s2027 = scalar_lea.vmem [#allocation1], 2
      %v2028 = vld [vmem:[%s2027] ss:$9 sm:$0xff]
      %s2029 = scalar_lea.vmem [#allocation1], 3
      %v2030 = vld [vmem:[%s2029] ss:$9 sm:$0xff]
      %s2031 = scalar_lea.vmem [#allocation1], 4
      %v2032 = vld [vmem:[%s2031] ss:$9 sm:$0xff]
      %s2033 = scalar_lea.vmem [#allocation1], 5
      %v2034 = vld [vmem:[%s2033] ss:$9 sm:$0xff]
      %s2035 = scalar_lea.vmem [#allocation1], 6
      %v2036 = vld [vmem:[%s2035] ss:$9 sm:$0xff]
      %s2037 = scalar_lea.vmem [#allocation1], 7
      %v2038 = vld [vmem:[%s2037] ss:$9 sm:$0xff]
      %2039 = vst [vmem:[#allocation1] sm:$0xff] %v1202
      %v2040 = vld [vmem:[#allocation1] ss:$9 sm:$0xff]
      %v2041 = vld [vmem:[%s2025] ss:$9 sm:$0xff]
      %v2042 = vld [vmem:[%s2027] ss:$9 sm:$0xff]
      %v2043 = vld [vmem:[%s2029] ss:$9 sm:$0xff]
      %v2044 = vld [vmem:[%s2031] ss:$9 sm:$0xff]
      %v2045 = vld [vmem:[%s2033] ss:$9 sm:$0xff]
      %v2046 = vld [vmem:[%s2035] ss:$9 sm:$0xff]
      %v2047 = vld [vmem:[%s2037] ss:$9 sm:$0xff]
      %2048 = vst [vmem:[#allocation1] sm:$0xff] %v1203
      %v2049 = vld [vmem:[#allocation1] ss:$9 sm:$0xff]
      %2050 = vst [vmem:[#allocation1] sm:$0xff] %v1204
      %v2051 = vld [vmem:[%s2025] ss:$9 sm:$0xff]
      %v2052 = vld [vmem:[%s2027] ss:$9 sm:$0xff]
      %v2053 = vld [vmem:[%s2029] ss:$9 sm:$0xff]
      %v2054 = vld [vmem:[%s2031] ss:$9 sm:$0xff]
      %v2055 = vld [vmem:[%s2033] ss:$9 sm:$0xff]
      %v2056 = vld [vmem:[%s2035] ss:$9 sm:$0xff]
      %v2057 = vld [vmem:[%s2037] ss:$9 sm:$0xff]
      %2058 = vst [vmem:[#allocation1] sm:$0xff] %v1205
      %v2059 = vld [vmem:[#allocation1] ss:$9 sm:$0xff]
      %v2060 = vld [vmem:[%s2025] ss:$9 sm:$0xff]
      %v2061 = vld [vmem:[%s2027] ss:$9 sm:$0xff]
      %v2062 = vld [vmem:[%s2029] ss:$9 sm:$0xff]
      %v2063 = vld [vmem:[%s2031] ss:$9 sm:$0xff]
      %v2064 = vld [vmem:[%s2033] ss:$9 sm:$0xff]
      %v2065 = vld [vmem:[%s2035] ss:$9 sm:$0xff]
      %v2066 = vld [vmem:[%s2037] ss:$9 sm:$0xff]
      %2067 = vst [vmem:[#allocation1] sm:$0xff] %v1206
      %v2068 = vld [vmem:[#allocation1] ss:$9 sm:$0xff]
      %2069 = vst [vmem:[#allocation1] sm:$0xff] %v1207
      %v2070 = vld [vmem:[%s2025] ss:$9 sm:$0xff]
      %v2071 = vld [vmem:[%s2027] ss:$9 sm:$0xff]
      %v2072 = vld [vmem:[%s2029] ss:$9 sm:$0xff]
      %v2073 = vld [vmem:[%s2031] ss:$9 sm:$0xff]
      %v2074 = vld [vmem:[%s2033] ss:$9 sm:$0xff]
      %v2075 = vld [vmem:[%s2035] ss:$9 sm:$0xff]
      %v2076 = vld [vmem:[%s2037] ss:$9 sm:$0xff]
      %2077 = vst [vmem:[#allocation1] sm:$0xff] %v1208
      %v2078 = vld [vmem:[#allocation1] ss:$9 sm:$0xff]
      %v2079 = vld [vmem:[%s2025] ss:$9 sm:$0xff]
      %v2080 = vld [vmem:[%s2027] ss:$9 sm:$0xff]
      %v2081 = vld [vmem:[%s2029] ss:$9 sm:$0xff]
      %v2082 = vld [vmem:[%s2031] ss:$9 sm:$0xff]
      %v2083 = vld [vmem:[%s2033] ss:$9 sm:$0xff]
      %v2084 = vld [vmem:[%s2035] ss:$9 sm:$0xff]
      %v2085 = vld [vmem:[%s2037] ss:$9 sm:$0xff]
      %2086 = vst [vmem:[#allocation1] sm:$0xff] %v1209
      %v2087 = vld [vmem:[#allocation1] ss:$9 sm:$0xff]
      %2088 = vst [vmem:[#allocation1] sm:$0xff] %v1210
      %v2089 = vld [vmem:[%s2025] ss:$9 sm:$0xff]
      %v2090 = vld [vmem:[%s2027] ss:$9 sm:$0xff]
      %v2091 = vld [vmem:[%s2029] ss:$9 sm:$0xff]
      %v2092 = vld [vmem:[%s2031] ss:$9 sm:$0xff]
      %v2093 = vld [vmem:[%s2033] ss:$9 sm:$0xff]
      %v2094 = vld [vmem:[%s2035] ss:$9 sm:$0xff]
      %v2095 = vld [vmem:[%s2037] ss:$9 sm:$0xff]
      %2096 = vst [vmem:[#allocation1] sm:$0xff] %v1211
      %v2097 = vld [vmem:[#allocation1] ss:$9 sm:$0xff]
      %v2098 = vld [vmem:[%s2025] ss:$9 sm:$0xff]
      %v2099 = vld [vmem:[%s2027] ss:$9 sm:$0xff]
      %v2100 = vld [vmem:[%s2029] ss:$9 sm:$0xff]
      %v2101 = vld [vmem:[%s2031] ss:$9 sm:$0xff]
      %v2102 = vld [vmem:[%s2033] ss:$9 sm:$0xff]
      %v2103 = vld [vmem:[%s2035] ss:$9 sm:$0xff]
      %v2104 = vld [vmem:[%s2037] ss:$9 sm:$0xff]
      %2105 = vst [vmem:[#allocation1] sm:$0xff] %v1212
      %v2106 = vld [vmem:[#allocation1] ss:$9 sm:$0xff]
      %2107 = vst [vmem:[#allocation1] sm:$0xff] %v1213
      %v2108 = vld [vmem:[%s2025] ss:$9 sm:$0xff]
      %v2109 = vld [vmem:[%s2027] ss:$9 sm:$0xff]
      %v2110 = vld [vmem:[%s2029] ss:$9 sm:$0xff]
      %v2111 = vld [vmem:[%s2031] ss:$9 sm:$0xff]
      %v2112 = vld [vmem:[%s2033] ss:$9 sm:$0xff]
      %v2113 = vld [vmem:[%s2035] ss:$9 sm:$0xff]
      %v2114 = vld [vmem:[%s2037] ss:$9 sm:$0xff]
      %2115 = vst [vmem:[#allocation1] sm:$0xff] %v1214
      %v2116 = vld [vmem:[#allocation1] ss:$9 sm:$0xff]
      %v2117 = vld [vmem:[%s2025] ss:$9 sm:$0xff]
      %v2118 = vld [vmem:[%s2027] ss:$9 sm:$0xff]
      %v2119 = vld [vmem:[%s2029] ss:$9 sm:$0xff]
      %v2120 = vld [vmem:[%s2031] ss:$9 sm:$0xff]
      %v2121 = vld [vmem:[%s2033] ss:$9 sm:$0xff]
      %v2122 = vld [vmem:[%s2035] ss:$9 sm:$0xff]
      %v2123 = vld [vmem:[%s2037] ss:$9 sm:$0xff]
      %2124 = vst [vmem:[#allocation1] sm:$0xff] %v1215
      %v2125 = vld [vmem:[#allocation1] ss:$9 sm:$0xff]
      %2126 = vst [vmem:[#allocation1] sm:$0xff] %v1216
      %v2127 = vld [vmem:[%s2025] ss:$9 sm:$0xff]
      %v2128 = vld [vmem:[%s2027] ss:$9 sm:$0xff]
      %v2129 = vld [vmem:[%s2029] ss:$9 sm:$0xff]
      %v2130 = vld [vmem:[%s2031] ss:$9 sm:$0xff]
      %v2131 = vld [vmem:[%s2033] ss:$9 sm:$0xff]
      %v2132 = vld [vmem:[%s2035] ss:$9 sm:$0xff]
      %v2133 = vld [vmem:[%s2037] ss:$9 sm:$0xff]
      %2134 = vst [vmem:[#allocation1] sm:$0xff] %v1217
      %v2135 = vld [vmem:[#allocation1] ss:$9 sm:$0xff]
      %v2136 = vld [vmem:[%s2025] ss:$9 sm:$0xff]
      %v2137 = vld [vmem:[%s2027] ss:$9 sm:$0xff]
      %v2138 = vld [vmem:[%s2029] ss:$9 sm:$0xff]
      %v2139 = vld [vmem:[%s2031] ss:$9 sm:$0xff]
      %v2140 = vld [vmem:[%s2033] ss:$9 sm:$0xff]
      %v2141 = vld [vmem:[%s2035] ss:$9 sm:$0xff]
      %v2142 = vld [vmem:[%s2037] ss:$9 sm:$0xff]
      %2143 = vst [vmem:[#allocation1] sm:$0xff] %v1218
      %v2144 = vld [vmem:[#allocation1] ss:$9 sm:$0xff]
      %v2145 = vperm.slane %v2026, 0
      %v2146 = vperm.slane %v2028, 0
      %v2147 = vperm.slane %v2030, 0
      %v2148 = vperm.slane %v2032, 0
      %v2149 = vperm.slane %v2034, 0
      %v2150 = vperm.slane %v2036, 0
      %v2151 = vperm.slane %v2038, 0
      %v2152 = vperm.slane %v2040, 0
      %v2153 = vperm.slane %v2041, 0
      %v2154 = vperm.slane %v2042, 0
      %v2155 = vperm.slane %v2043, 0
      %v2156 = vperm.slane %v2044, 0
      %v2157 = vperm.slane %v2045, 0
      %v2158 = vperm.slane %v2046, 0
      %v2159 = vperm.slane %v2047, 0
      %v2160 = vperm.slane %v2049, 0
      %v2161 = vperm.slane %v2051, 0
      %v2162 = vperm.slane %v2052, 0
      %v2163 = vperm.slane %v2053, 0
      %v2164 = vperm.slane %v2054, 0
      %v2165 = vperm.slane %v2055, 0
      %v2166 = vperm.slane %v2056, 0
      %v2167 = vperm.slane %v2057, 0
      %v2168 = vperm.slane %v2059, 0
      %v2169 = vperm.slane %v2060, 0
      %v2170 = vperm.slane %v2061, 0
      %v2171 = vperm.slane %v2062, 0
      %v2172 = vperm.slane %v2063, 0
      %v2173 = vperm.slane %v2064, 0
      %v2174 = vperm.slane %v2065, 0
      %v2175 = vperm.slane %v2066, 0
      %v2176 = vperm.slane %v2068, 0
      %v2177 = vperm.slane %v2070, 0
      %v2178 = vperm.slane %v2071, 0
      %v2179 = vperm.slane %v2072, 0
      %v2180 = vperm.slane %v2073, 0
      %v2181 = vperm.slane %v2074, 0
      %v2182 = vperm.slane %v2075, 0
      %v2183 = vperm.slane %v2076, 0
      %v2184 = vperm.slane %v2078, 0
      %v2185 = vperm.slane %v2079, 0
      %v2186 = vperm.slane %v2080, 0
      %v2187 = vperm.slane %v2081, 0
      %v2188 = vperm.slane %v2082, 0
      %v2189 = vperm.slane %v2083, 0
      %v2190 = vperm.slane %v2084, 0
      %v2191 = vperm.slane %v2085, 0
      %v2192 = vperm.slane %v2087, 0
      %v2193 = vperm.slane %v2089, 0
      %v2194 = vperm.slane %v2090, 0
      %v2195 = vperm.slane %v2091, 0
      %v2196 = vperm.slane %v2092, 0
      %v2197 = vperm.slane %v2093, 0
      %v2198 = vperm.slane %v2094, 0
      %v2199 = vperm.slane %v2095, 0
      %v2200 = vperm.slane %v2097, 0
      %v2201 = vperm.slane %v2098, 0
      %v2202 = vperm.slane %v2099, 0
      %v2203 = vperm.slane %v2100, 0
      %v2204 = vperm.slane %v2101, 0
      %v2205 = vperm.slane %v2102, 0
      %v2206 = vperm.slane %v2103, 0
      %v2207 = vperm.slane %v2104, 0
      %v2208 = vperm.slane %v2106, 0
      %v2209 = vperm.slane %v2108, 0
      %v2210 = vperm.slane %v2109, 0
      %v2211 = vperm.slane %v2110, 0
      %v2212 = vperm.slane %v2111, 0
      %v2213 = vperm.slane %v2112, 0
      %v2214 = vperm.slane %v2113, 0
      %v2215 = vperm.slane %v2114, 0
      %v2216 = vperm.slane %v2116, 0
      %v2217 = vperm.slane %v2117, 0
      %v2218 = vperm.slane %v2118, 0
      %v2219 = vperm.slane %v2119, 0
      %v2220 = vperm.slane %v2120, 0
      %v2221 = vperm.slane %v2121, 0
      %v2222 = vperm.slane %v2122, 0
      %v2223 = vperm.slane %v2123, 0
      %v2224 = vperm.slane %v2125, 0
      %v2225 = vperm.slane %v2127, 0
      %v2226 = vperm.slane %v2128, 0
      %v2227 = vperm.slane %v2129, 0
      %v2228 = vperm.slane %v2130, 0
      %v2229 = vperm.slane %v2131, 0
      %v2230 = vperm.slane %v2132, 0
      %v2231 = vperm.slane %v2133, 0
      %v2232 = vperm.slane %v2135, 0
      %v2233 = vperm.slane %v2136, 0
      %v2234 = vperm.slane %v2137, 0
      %v2235 = vperm.slane %v2138, 0
      %v2236 = vperm.slane %v2139, 0
      %v2237 = vperm.slane %v2140, 0
      %v2238 = vperm.slane %v2141, 0
      %v2239 = vperm.slane %v2142, 0
      %v2240 = vperm.slane %v2144, 0
      %v2337 = vsel %vm657, %v1117, %v2145
      %v2338 = vsel %vm657, %v1838, %v2146
      %v2339 = vsel %vm657, %v1839, %v2147
      %v2340 = vsel %vm657, %v1840, %v2148
      %v2341 = vsel %vm657, %v1841, %v2149
      %v2342 = vsel %vm657, %v1842, %v2150
      %v2343 = vsel %vm657, %v1843, %v2151
      %v2344 = vsel %vm657, %v1844, %v2152
      %v2345 = vsel %vm657, %v1118, %v2153
      %v2346 = vsel %vm657, %v1845, %v2154
      %v2347 = vsel %vm657, %v1846, %v2155
      %v2348 = vsel %vm657, %v1847, %v2156
      %v2349 = vsel %vm657, %v1848, %v2157
      %v2350 = vsel %vm657, %v1849, %v2158
      %v2351 = vsel %vm657, %v1850, %v2159
      %v2352 = vsel %vm657, %v1851, %v2160
      %v2353 = vsel %vm657, %v1119, %v2161
      %v2354 = vsel %vm657, %v1852, %v2162
      %v2355 = vsel %vm657, %v1853, %v2163
      %v2356 = vsel %vm657, %v1854, %v2164
      %v2357 = vsel %vm657, %v1855, %v2165
      %v2358 = vsel %vm657, %v1856, %v2166
      %v2359 = vsel %vm657, %v1857, %v2167
      %v2360 = vsel %vm657, %v1858, %v2168
      %v2361 = vsel %vm657, %v1120, %v2169
      %v2362 = vsel %vm657, %v1859, %v2170
      %v2363 = vsel %vm657, %v1860, %v2171
      %v2364 = vsel %vm657, %v1861, %v2172
      %v2365 = vsel %vm657, %v1862, %v2173
      %v2366 = vsel %vm657, %v1863, %v2174
      %v2367 = vsel %vm657, %v1864, %v2175
      %v2368 = vsel %vm657, %v1865, %v2176
      %v2369 = vsel %vm657, %v1121, %v2177
      %v2370 = vsel %vm657, %v1866, %v2178
      %v2371 = vsel %vm657, %v1867, %v2179
      %v2372 = vsel %vm657, %v1868, %v2180
      %v2373 = vsel %vm657, %v1869, %v2181
      %v2374 = vsel %vm657, %v1870, %v2182
      %v2375 = vsel %vm657, %v1871, %v2183
      %v2376 = vsel %vm657, %v1872, %v2184
      %v2377 = vsel %vm657, %v1122, %v2185
      %v2378 = vsel %vm657, %v1873, %v2186
      %v2379 = vsel %vm657, %v1874, %v2187
      %v2380 = vsel %vm657, %v1875, %v2188
      %v2381 = vsel %vm657, %v1876, %v2189
      %v2382 = vsel %vm657, %v1877, %v2190
      %v2383 = vsel %vm657, %v1878, %v2191
      %v2384 = vsel %vm657, %v1879, %v2192
      %v2385 = vsel %vm657, %v1123, %v2193
      %v2386 = vsel %vm657, %v1880, %v2194
      %v2387 = vsel %vm657, %v1881, %v2195
      %v2388 = vsel %vm657, %v1882, %v2196
      %v2389 = vsel %vm657, %v1883, %v2197
      %v2390 = vsel %vm657, %v1884, %v2198
      %v2391 = vsel %vm657, %v1885, %v2199
      %v2392 = vsel %vm657, %v1886, %v2200
      %v2393 = vsel %vm657, %v1124, %v2201
      %v2394 = vsel %vm657, %v1887, %v2202
      %v2395 = vsel %vm657, %v1888, %v2203
      %v2396 = vsel %vm657, %v1889, %v2204
      %v2397 = vsel %vm657, %v1890, %v2205
      %v2398 = vsel %vm657, %v1891, %v2206
      %v2399 = vsel %vm657, %v1892, %v2207
      %v2400 = vsel %vm657, %v1893, %v2208
      %v2401 = vsel %vm657, %v1125, %v2209
      %v2402 = vsel %vm657, %v1894, %v2210
      %v2403 = vsel %vm657, %v1895, %v2211
      %v2404 = vsel %vm657, %v1896, %v2212
      %v2405 = vsel %vm657, %v1897, %v2213
      %v2406 = vsel %vm657, %v1898, %v2214
      %v2407 = vsel %vm657, %v1899, %v2215
      %v2408 = vsel %vm657, %v1900, %v2216
      %v2409 = vsel %vm657, %v1126, %v2217
      %v2410 = vsel %vm657, %v1901, %v2218
      %v2411 = vsel %vm657, %v1902, %v2219
      %v2412 = vsel %vm657, %v1903, %v2220
      %v2413 = vsel %vm657, %v1904, %v2221
      %v2414 = vsel %vm657, %v1905, %v2222
      %v2415 = vsel %vm657, %v1906, %v2223
      %v2416 = vsel %vm657, %v1907, %v2224
      %v2417 = vsel %vm657, %v1127, %v2225
      %v2418 = vsel %vm657, %v1908, %v2226
      %v2419 = vsel %vm657, %v1909, %v2227
      %v2420 = vsel %vm657, %v1910, %v2228
      %v2421 = vsel %vm657, %v1911, %v2229
      %v2422 = vsel %vm657, %v1912, %v2230
      %v2423 = vsel %vm657, %v1913, %v2231
      %v2424 = vsel %vm657, %v1914, %v2232
      %v2425 = vsel %vm657, %v1128, %v2233
      %v2426 = vsel %vm657, %v1915, %v2234
      %v2427 = vsel %vm657, %v1916, %v2235
      %v2428 = vsel %vm657, %v1917, %v2236
      %v2429 = vsel %vm657, %v1918, %v2237
      %v2430 = vsel %vm657, %v1919, %v2238
      %v2431 = vsel %vm657, %v1920, %v2239
      %v2432 = vsel %vm657, %v1921, %v2240
      %2625 = vst [vmem:[#allocation1] ss:$4 sm:$0xff] %v1730
      %s2626 = scalar_lea.vmem [#allocation1], 1
      %2627 = vst [vmem:[%s2626] ss:$4 sm:$0xff] %v1731
      %s2628 = scalar_lea.vmem [#allocation1], 2
      %2629 = vst [vmem:[%s2628] ss:$4 sm:$0xff] %v1732
      %s2630 = scalar_lea.vmem [#allocation1], 3
      %2631 = vst [vmem:[%s2630] ss:$4 sm:$0xff] %v1733
      %s2632 = scalar_lea.vmem [#allocation1], 32
      %2633 = vst [vmem:[%s2632] ss:$4 sm:$0xff] %v1734
      %s2634 = scalar_lea.vmem [#allocation1], 33
      %2635 = vst [vmem:[%s2634] ss:$4 sm:$0xff] %v1735
      %s2636 = scalar_lea.vmem [#allocation1], 34
      %2637 = vst [vmem:[%s2636] ss:$4 sm:$0xff] %v1736
      %s2638 = scalar_lea.vmem [#allocation1], 35
      %2639 = vst [vmem:[%s2638] ss:$4 sm:$0xff] %v1737
      %v2640 = vld.sshfl [vmem:[#allocation1] sm:$0xff pattern:$0x73625140]
      %v2641 = vld.sshfl [vmem:[#allocation1 + $0x20] sm:$0xff pattern:$0x73625140]
      %2642 = vst [vmem:[#allocation1] ss:$4 sm:$0xff] %v1738
      %2643 = vst [vmem:[%s2626] ss:$4 sm:$0xff] %v1739
      %2644 = vst [vmem:[%s2628] ss:$4 sm:$0xff] %v1740
      %2645 = vst [vmem:[%s2630] ss:$4 sm:$0xff] %v1741
      %2646 = vst [vmem:[%s2632] ss:$4 sm:$0xff] %v1742
      %2647 = vst [vmem:[%s2634] ss:$4 sm:$0xff] %v1743
      %2648 = vst [vmem:[%s2636] ss:$4 sm:$0xff] %v1744
      %2649 = vst [vmem:[%s2638] ss:$4 sm:$0xff] %v1745
      %v2650 = vld.sshfl [vmem:[#allocation1] sm:$0xff pattern:$0x73625140]
      %v2651 = vld.sshfl [vmem:[#allocation1 + $0x20] sm:$0xff pattern:$0x73625140]
      %2652 = vst [vmem:[#allocation1] ss:$4 sm:$0xff] %v2337
      %2653 = vst [vmem:[%s2626] ss:$4 sm:$0xff] %v2338
      %2654 = vst [vmem:[%s2628] ss:$4 sm:$0xff] %v2339
      %2655 = vst [vmem:[%s2630] ss:$4 sm:$0xff] %v2340
      %2656 = vst [vmem:[%s2632] ss:$4 sm:$0xff] %v2341
      %2657 = vst [vmem:[%s2634] ss:$4 sm:$0xff] %v2342
      %2658 = vst [vmem:[%s2636] ss:$4 sm:$0xff] %v2343
      %2659 = vst [vmem:[%s2638] ss:$4 sm:$0xff] %v2344
      %v2660 = vld.sshfl [vmem:[#allocation1] sm:$0xff pattern:$0x73625140]
      %v2661 = vld.sshfl [vmem:[#allocation1 + $0x20] sm:$0xff pattern:$0x73625140]
      %2662 = vst [vmem:[#allocation1] ss:$4 sm:$0xff] %v2345
      %2663 = vst [vmem:[%s2626] ss:$4 sm:$0xff] %v2346
      %2664 = vst [vmem:[%s2628] ss:$4 sm:$0xff] %v2347
      %2665 = vst [vmem:[%s2630] ss:$4 sm:$0xff] %v2348
      %2666 = vst [vmem:[%s2632] ss:$4 sm:$0xff] %v2349
      %2667 = vst [vmem:[%s2634] ss:$4 sm:$0xff] %v2350
      %2668 = vst [vmem:[%s2636] ss:$4 sm:$0xff] %v2351
      %2669 = vst [vmem:[%s2638] ss:$4 sm:$0xff] %v2352
      %v2670 = vld.sshfl [vmem:[#allocation1] sm:$0xff pattern:$0x73625140]
      %v2671 = vld.sshfl [vmem:[#allocation1 + $0x20] sm:$0xff pattern:$0x73625140]
      %2672 = vst [vmem:[#allocation1] ss:$4 sm:$0xff] %v1746
      %2673 = vst [vmem:[%s2626] ss:$4 sm:$0xff] %v1747
      %2674 = vst [vmem:[%s2628] ss:$4 sm:$0xff] %v1748
      %2675 = vst [vmem:[%s2630] ss:$4 sm:$0xff] %v1749
      %2676 = vst [vmem:[%s2632] ss:$4 sm:$0xff] %v1750
      %2677 = vst [vmem:[%s2634] ss:$4 sm:$0xff] %v1751
      %2678 = vst [vmem:[%s2636] ss:$4 sm:$0xff] %v1752
      %2679 = vst [vmem:[%s2638] ss:$4 sm:$0xff] %v1753
      %v2680 = vld.sshfl [vmem:[#allocation1] sm:$0xff pattern:$0x73625140]
      %v2681 = vld.sshfl [vmem:[#allocation1 + $0x20] sm:$0xff pattern:$0x73625140]
      %2682 = vst [vmem:[#allocation1] ss:$4 sm:$0xff] %v1754
      %2683 = vst [vmem:[%s2626] ss:$4 sm:$0xff] %v1755
      %2684 = vst [vmem:[%s2628] ss:$4 sm:$0xff] %v1756
      %2685 = vst [vmem:[%s2630] ss:$4 sm:$0xff] %v1757
      %2686 = vst [vmem:[%s2632] ss:$4 sm:$0xff] %v1758
      %2687 = vst [vmem:[%s2634] ss:$4 sm:$0xff] %v1759
      %2688 = vst [vmem:[%s2636] ss:$4 sm:$0xff] %v1760
      %2689 = vst [vmem:[%s2638] ss:$4 sm:$0xff] %v1761
      %v2690 = vld.sshfl [vmem:[#allocation1] sm:$0xff pattern:$0x73625140]
      %v2691 = vld.sshfl [vmem:[#allocation1 + $0x20] sm:$0xff pattern:$0x73625140]
      %2692 = vst [vmem:[#allocation1] ss:$4 sm:$0xff] %v2353
      %2693 = vst [vmem:[%s2626] ss:$4 sm:$0xff] %v2354
      %2694 = vst [vmem:[%s2628] ss:$4 sm:$0xff] %v2355
      %2695 = vst [vmem:[%s2630] ss:$4 sm:$0xff] %v2356
      %2696 = vst [vmem:[%s2632] ss:$4 sm:$0xff] %v2357
      %2697 = vst [vmem:[%s2634] ss:$4 sm:$0xff] %v2358
      %2698 = vst [vmem:[%s2636] ss:$4 sm:$0xff] %v2359
      %2699 = vst [vmem:[%s2638] ss:$4 sm:$0xff] %v2360
      %v2700 = vld.sshfl [vmem:[#allocation1] sm:$0xff pattern:$0x73625140]
      %v2701 = vld.sshfl [vmem:[#allocation1 + $0x20] sm:$0xff pattern:$0x73625140]
      %2702 = vst [vmem:[#allocation1] ss:$4 sm:$0xff] %v2361
      %2703 = vst [vmem:[%s2626] ss:$4 sm:$0xff] %v2362
      %2704 = vst [vmem:[%s2628] ss:$4 sm:$0xff] %v2363
      %2705 = vst [vmem:[%s2630] ss:$4 sm:$0xff] %v2364
      %2706 = vst [vmem:[%s2632] ss:$4 sm:$0xff] %v2365
      %2707 = vst [vmem:[%s2634] ss:$4 sm:$0xff] %v2366
      %2708 = vst [vmem:[%s2636] ss:$4 sm:$0xff] %v2367
      %2709 = vst [vmem:[%s2638] ss:$4 sm:$0xff] %v2368
      %v2710 = vld.sshfl [vmem:[#allocation1] sm:$0xff pattern:$0x73625140]
      %v2711 = vld.sshfl [vmem:[#allocation1 + $0x20] sm:$0xff pattern:$0x73625140]
      %2712 = vst [vmem:[#allocation1] ss:$4 sm:$0xff] %v1762
      %2713 = vst [vmem:[%s2626] ss:$4 sm:$0xff] %v1763
      %2714 = vst [vmem:[%s2628] ss:$4 sm:$0xff] %v1764
      %2715 = vst [vmem:[%s2630] ss:$4 sm:$0xff] %v1765
      %2716 = vst [vmem:[%s2632] ss:$4 sm:$0xff] %v1766
      %2717 = vst [vmem:[%s2634] ss:$4 sm:$0xff] %v1767
      %2718 = vst [vmem:[%s2636] ss:$4 sm:$0xff] %v1768
      %2719 = vst [vmem:[%s2638] ss:$4 sm:$0xff] %v1769
      %v2720 = vld.sshfl [vmem:[#allocation1] sm:$0xff pattern:$0x73625140]
      %v2721 = vld.sshfl [vmem:[#allocation1 + $0x20] sm:$0xff pattern:$0x73625140]
      %2722 = vst [vmem:[#allocation1] ss:$4 sm:$0xff] %v1770
      %2723 = vst [vmem:[%s2626] ss:$4 sm:$0xff] %v1771
      %2724 = vst [vmem:[%s2628] ss:$4 sm:$0xff] %v1772
      %2725 = vst [vmem:[%s2630] ss:$4 sm:$0xff] %v1773
      %2726 = vst [vmem:[%s2632] ss:$4 sm:$0xff] %v1774
      %2727 = vst [vmem:[%s2634] ss:$4 sm:$0xff] %v1775
      %2728 = vst [vmem:[%s2636] ss:$4 sm:$0xff] %v1776
      %2729 = vst [vmem:[%s2638] ss:$4 sm:$0xff] %v1777
      %v2730 = vld.sshfl [vmem:[#allocation1] sm:$0xff pattern:$0x73625140]
      %v2731 = vld.sshfl [vmem:[#allocation1 + $0x20] sm:$0xff pattern:$0x73625140]
      %2732 = vst [vmem:[#allocation1] ss:$4 sm:$0xff] %v2369
      %2733 = vst [vmem:[%s2626] ss:$4 sm:$0xff] %v2370
      %2734 = vst [vmem:[%s2628] ss:$4 sm:$0xff] %v2371
      %2735 = vst [vmem:[%s2630] ss:$4 sm:$0xff] %v2372
      %2736 = vst [vmem:[%s2632] ss:$4 sm:$0xff] %v2373
      %2737 = vst [vmem:[%s2634] ss:$4 sm:$0xff] %v2374
      %2738 = vst [vmem:[%s2636] ss:$4 sm:$0xff] %v2375
      %2739 = vst [vmem:[%s2638] ss:$4 sm:$0xff] %v2376
      %v2740 = vld.sshfl [vmem:[#allocation1] sm:$0xff pattern:$0x73625140]
      %v2741 = vld.sshfl [vmem:[#allocation1 + $0x20] sm:$0xff pattern:$0x73625140]
      %2742 = vst [vmem:[#allocation1] ss:$4 sm:$0xff] %v2377
      %2743 = vst [vmem:[%s2626] ss:$4 sm:$0xff] %v2378
      %2744 = vst [vmem:[%s2628] ss:$4 sm:$0xff] %v2379
      %2745 = vst [vmem:[%s2630] ss:$4 sm:$0xff] %v2380
      %2746 = vst [vmem:[%s2632] ss:$4 sm:$0xff] %v2381
      %2747 = vst [vmem:[%s2634] ss:$4 sm:$0xff] %v2382
      %2748 = vst [vmem:[%s2636] ss:$4 sm:$0xff] %v2383
      %2749 = vst [vmem:[%s2638] ss:$4 sm:$0xff] %v2384
      %v2750 = vld.sshfl [vmem:[#allocation1] sm:$0xff pattern:$0x73625140]
      %v2751 = vld.sshfl [vmem:[#allocation1 + $0x20] sm:$0xff pattern:$0x73625140]
      %2752 = vst [vmem:[#allocation1] ss:$4 sm:$0xff] %v1778
      %2753 = vst [vmem:[%s2626] ss:$4 sm:$0xff] %v1779
      %2754 = vst [vmem:[%s2628] ss:$4 sm:$0xff] %v1780
      %2755 = vst [vmem:[%s2630] ss:$4 sm:$0xff] %v1781
      %2756 = vst [vmem:[%s2632] ss:$4 sm:$0xff] %v1782
      %2757 = vst [vmem:[%s2634] ss:$4 sm:$0xff] %v1783
      %2758 = vst [vmem:[%s2636] ss:$4 sm:$0xff] %v1784
      %2759 = vst [vmem:[%s2638] ss:$4 sm:$0xff] %v1785
      %v2760 = vld.sshfl [vmem:[#allocation1] sm:$0xff pattern:$0x73625140]
      %v2761 = vld.sshfl [vmem:[#allocation1 + $0x20] sm:$0xff pattern:$0x73625140]
      %2762 = vst [vmem:[#allocation1] ss:$4 sm:$0xff] %v1786
      %2763 = vst [vmem:[%s2626] ss:$4 sm:$0xff] %v1787
      %2764 = vst [vmem:[%s2628] ss:$4 sm:$0xff] %v1788
      %2765 = vst [vmem:[%s2630] ss:$4 sm:$0xff] %v1789
      %2766 = vst [vmem:[%s2632] ss:$4 sm:$0xff] %v1790
      %2767 = vst [vmem:[%s2634] ss:$4 sm:$0xff] %v1791
      %2768 = vst [vmem:[%s2636] ss:$4 sm:$0xff] %v1792
      %2769 = vst [vmem:[%s2638] ss:$4 sm:$0xff] %v1793
      %v2770 = vld.sshfl [vmem:[#allocation1] sm:$0xff pattern:$0x73625140]
      %v2771 = vld.sshfl [vmem:[#allocation1 + $0x20] sm:$0xff pattern:$0x73625140]
      %2772 = vst [vmem:[#allocation1] ss:$4 sm:$0xff] %v2385
      %2773 = vst [vmem:[%s2626] ss:$4 sm:$0xff] %v2386
      %2774 = vst [vmem:[%s2628] ss:$4 sm:$0xff] %v2387
      %2775 = vst [vmem:[%s2630] ss:$4 sm:$0xff] %v2388
      %2776 = vst [vmem:[%s2632] ss:$4 sm:$0xff] %v2389
      %2777 = vst [vmem:[%s2634] ss:$4 sm:$0xff] %v2390
      %2778 = vst [vmem:[%s2636] ss:$4 sm:$0xff] %v2391
      %2779 = vst [vmem:[%s2638] ss:$4 sm:$0xff] %v2392
      %v2780 = vld.sshfl [vmem:[#allocation1] sm:$0xff pattern:$0x73625140]
      %v2781 = vld.sshfl [vmem:[#allocation1 + $0x20] sm:$0xff pattern:$0x73625140]
      %2782 = vst [vmem:[#allocation1] ss:$4 sm:$0xff] %v2393
      %2783 = vst [vmem:[%s2626] ss:$4 sm:$0xff] %v2394
      %2784 = vst [vmem:[%s2628] ss:$4 sm:$0xff] %v2395
      %2785 = vst [vmem:[%s2630] ss:$4 sm:$0xff] %v2396
      %2786 = vst [vmem:[%s2632] ss:$4 sm:$0xff] %v2397
      %2787 = vst [vmem:[%s2634] ss:$4 sm:$0xff] %v2398
      %2788 = vst [vmem:[%s2636] ss:$4 sm:$0xff] %v2399
      %2789 = vst [vmem:[%s2638] ss:$4 sm:$0xff] %v2400
      %v2790 = vld.sshfl [vmem:[#allocation1] sm:$0xff pattern:$0x73625140]
      %v2791 = vld.sshfl [vmem:[#allocation1 + $0x20] sm:$0xff pattern:$0x73625140]
      %2792 = vst [vmem:[#allocation1] ss:$4 sm:$0xff] %v1794
      %2793 = vst [vmem:[%s2626] ss:$4 sm:$0xff] %v1795
      %2794 = vst [vmem:[%s2628] ss:$4 sm:$0xff] %v1796
      %2795 = vst [vmem:[%s2630] ss:$4 sm:$0xff] %v1797
      %2796 = vst [vmem:[%s2632] ss:$4 sm:$0xff] %v1798
      %2797 = vst [vmem:[%s2634] ss:$4 sm:$0xff] %v1799
      %2798 = vst [vmem:[%s2636] ss:$4 sm:$0xff] %v1800
      %2799 = vst [vmem:[%s2638] ss:$4 sm:$0xff] %v1801
      %v2800 = vld.sshfl [vmem:[#allocation1] sm:$0xff pattern:$0x73625140]
      %v2801 = vld.sshfl [vmem:[#allocation1 + $0x20] sm:$0xff pattern:$0x73625140]
      %2802 = vst [vmem:[#allocation1] ss:$4 sm:$0xff] %v1802
      %2803 = vst [vmem:[%s2626] ss:$4 sm:$0xff] %v1803
      %2804 = vst [vmem:[%s2628] ss:$4 sm:$0xff] %v1804
      %2805 = vst [vmem:[%s2630] ss:$4 sm:$0xff] %v1805
      %2806 = vst [vmem:[%s2632] ss:$4 sm:$0xff] %v1806
      %2807 = vst [vmem:[%s2634] ss:$4 sm:$0xff] %v1807
      %2808 = vst [vmem:[%s2636] ss:$4 sm:$0xff] %v1808
      %2809 = vst [vmem:[%s2638] ss:$4 sm:$0xff] %v1809
      %v2810 = vld.sshfl [vmem:[#allocation1] sm:$0xff pattern:$0x73625140]
      %v2811 = vld.sshfl [vmem:[#allocation1 + $0x20] sm:$0xff pattern:$0x73625140]
      %2812 = vst [vmem:[#allocation1] ss:$4 sm:$0xff] %v2401
      %2813 = vst [vmem:[%s2626] ss:$4 sm:$0xff] %v2402
      %2814 = vst [vmem:[%s2628] ss:$4 sm:$0xff] %v2403
      %2815 = vst [vmem:[%s2630] ss:$4 sm:$0xff] %v2404
      %2816 = vst [vmem:[%s2632] ss:$4 sm:$0xff] %v2405
      %2817 = vst [vmem:[%s2634] ss:$4 sm:$0xff] %v2406
      %2818 = vst [vmem:[%s2636] ss:$4 sm:$0xff] %v2407
      %2819 = vst [vmem:[%s2638] ss:$4 sm:$0xff] %v2408
      %v2820 = vld.sshfl [vmem:[#allocation1] sm:$0xff pattern:$0x73625140]
      %v2821 = vld.sshfl [vmem:[#allocation1 + $0x20] sm:$0xff pattern:$0x73625140]
      %2822 = vst [vmem:[#allocation1] ss:$4 sm:$0xff] %v2409
      %2823 = vst [vmem:[%s2626] ss:$4 sm:$0xff] %v2410
      %2824 = vst [vmem:[%s2628] ss:$4 sm:$0xff] %v2411
      %2825 = vst [vmem:[%s2630] ss:$4 sm:$0xff] %v2412
      %2826 = vst [vmem:[%s2632] ss:$4 sm:$0xff] %v2413
      %2827 = vst [vmem:[%s2634] ss:$4 sm:$0xff] %v2414
      %2828 = vst [vmem:[%s2636] ss:$4 sm:$0xff] %v2415
      %2829 = vst [vmem:[%s2638] ss:$4 sm:$0xff] %v2416
      %v2830 = vld.sshfl [vmem:[#allocation1] sm:$0xff pattern:$0x73625140]
      %v2831 = vld.sshfl [vmem:[#allocation1 + $0x20] sm:$0xff pattern:$0x73625140]
      %2832 = vst [vmem:[#allocation1] ss:$4 sm:$0xff] %v1810
      %2833 = vst [vmem:[%s2626] ss:$4 sm:$0xff] %v1811
      %2834 = vst [vmem:[%s2628] ss:$4 sm:$0xff] %v1812
      %2835 = vst [vmem:[%s2630] ss:$4 sm:$0xff] %v1813
      %2836 = vst [vmem:[%s2632] ss:$4 sm:$0xff] %v1814
      %2837 = vst [vmem:[%s2634] ss:$4 sm:$0xff] %v1815
      %2838 = vst [vmem:[%s2636] ss:$4 sm:$0xff] %v1816
      %2839 = vst [vmem:[%s2638] ss:$4 sm:$0xff] %v1817
      %v2840 = vld.sshfl [vmem:[#allocation1] sm:$0xff pattern:$0x73625140]
      %v2841 = vld.sshfl [vmem:[#allocation1 + $0x20] sm:$0xff pattern:$0x73625140]
      %2842 = vst [vmem:[#allocation1] ss:$4 sm:$0xff] %v1818
      %2843 = vst [vmem:[%s2626] ss:$4 sm:$0xff] %v1819
      %2844 = vst [vmem:[%s2628] ss:$4 sm:$0xff] %v1820
      %2845 = vst [vmem:[%s2630] ss:$4 sm:$0xff] %v1821
      %2846 = vst [vmem:[%s2632] ss:$4 sm:$0xff] %v1822
      %2847 = vst [vmem:[%s2634] ss:$4 sm:$0xff] %v1823
      %2848 = vst [vmem:[%s2636] ss:$4 sm:$0xff] %v1824
      %2849 = vst [vmem:[%s2638] ss:$4 sm:$0xff] %v1825
      %v2850 = vld.sshfl [vmem:[#allocation1] sm:$0xff pattern:$0x73625140]
      %v2851 = vld.sshfl [vmem:[#allocation1 + $0x20] sm:$0xff pattern:$0x73625140]
      %2852 = vst [vmem:[#allocation1] ss:$4 sm:$0xff] %v2417
      %2853 = vst [vmem:[%s2626] ss:$4 sm:$0xff] %v2418
      %2854 = vst [vmem:[%s2628] ss:$4 sm:$0xff] %v2419
      %2855 = vst [vmem:[%s2630] ss:$4 sm:$0xff] %v2420
      %2856 = vst [vmem:[%s2632] ss:$4 sm:$0xff] %v2421
      %2857 = vst [vmem:[%s2634] ss:$4 sm:$0xff] %v2422
      %2858 = vst [vmem:[%s2636] ss:$4 sm:$0xff] %v2423
      %2859 = vst [vmem:[%s2638] ss:$4 sm:$0xff] %v2424
      %v2860 = vld.sshfl [vmem:[#allocation1] sm:$0xff pattern:$0x73625140]
      %v2861 = vld.sshfl [vmem:[#allocation1 + $0x20] sm:$0xff pattern:$0x73625140]
      %2862 = vst [vmem:[#allocation1] ss:$4 sm:$0xff] %v2425
      %2863 = vst [vmem:[%s2626] ss:$4 sm:$0xff] %v2426
      %2864 = vst [vmem:[%s2628] ss:$4 sm:$0xff] %v2427
      %2865 = vst [vmem:[%s2630] ss:$4 sm:$0xff] %v2428
      %2866 = vst [vmem:[%s2632] ss:$4 sm:$0xff] %v2429
      %2867 = vst [vmem:[%s2634] ss:$4 sm:$0xff] %v2430
      %2868 = vst [vmem:[%s2636] ss:$4 sm:$0xff] %v2431
      %2869 = vst [vmem:[%s2638] ss:$4 sm:$0xff] %v2432
      %v2870 = vld.sshfl [vmem:[#allocation1] sm:$0xff pattern:$0x73625140]
      %v2871 = vld.sshfl [vmem:[#allocation1 + $0x20] sm:$0xff pattern:$0x73625140]
      %v2872 = vrot.slane %v2640, 7
      %v2873 = vrot.slane %v2641, 7
      %v2874 = vsel %vm657, %v2872, %v2873
      %v2875 = vrot.slane %v2650, 7
      %v2876 = vsel %vm657, %v2873, %v2875
      %v2877 = vrot.slane %v2651, 7
      %v2878 = vsel %vm657, %v2875, %v2877
      %v2879 = vrot.slane %v2660, 7
      %v2880 = vrot.slane %v2661, 7
      %v2881 = vsel %vm657, %v2879, %v2880
      %v2882 = vrot.slane %v2670, 7
      %v2883 = vsel %vm657, %v2880, %v2882
      %v2884 = vrot.slane %v2671, 7
      %v2885 = vsel %vm657, %v2882, %v2884
      %v2886 = vrot.slane %v2680, 7
      %v2887 = vrot.slane %v2681, 7
      %v2888 = vsel %vm657, %v2886, %v2887
      %v2889 = vrot.slane %v2690, 7
      %v2890 = vsel %vm657, %v2887, %v2889
      %v2891 = vrot.slane %v2691, 7
      %v2892 = vsel %vm657, %v2889, %v2891
      %v2893 = vrot.slane %v2700, 7
      %v2894 = vrot.slane %v2701, 7
      %v2895 = vsel %vm657, %v2893, %v2894
      %v2896 = vrot.slane %v2710, 7
      %v2897 = vsel %vm657, %v2894, %v2896
      %v2898 = vrot.slane %v2711, 7
      %v2899 = vsel %vm657, %v2896, %v2898
      %v2900 = vrot.slane %v2720, 7
      %v2901 = vrot.slane %v2721, 7
      %v2902 = vsel %vm657, %v2900, %v2901
      %v2903 = vrot.slane %v2730, 7
      %v2904 = vsel %vm657, %v2901, %v2903
      %v2905 = vrot.slane %v2731, 7
      %v2906 = vsel %vm657, %v2903, %v2905
      %v2907 = vrot.slane %v2740, 7
      %v2908 = vrot.slane %v2741, 7
      %v2909 = vsel %vm657, %v2907, %v2908
      %v2910 = vrot.slane %v2750, 7
      %v2911 = vsel %vm657, %v2908, %v2910
      %v2912 = vrot.slane %v2751, 7
      %v2913 = vsel %vm657, %v2910, %v2912
      %v2914 = vrot.slane %v2760, 7
      %v2915 = vrot.slane %v2761, 7
      %v2916 = vsel %vm657, %v2914, %v2915
      %v2917 = vrot.slane %v2770, 7
      %v2918 = vsel %vm657, %v2915, %v2917
      %v2919 = vrot.slane %v2771, 7
      %v2920 = vsel %vm657, %v2917, %v2919
      %v2921 = vrot.slane %v2780, 7
      %v2922 = vrot.slane %v2781, 7
      %v2923 = vsel %vm657, %v2921, %v2922
      %v2924 = vrot.slane %v2790, 7
      %v2925 = vsel %vm657, %v2922, %v2924
      %v2926 = vrot.slane %v2791, 7
      %v2927 = vsel %vm657, %v2924, %v2926
      %v2928 = vrot.slane %v2800, 7
      %v2929 = vrot.slane %v2801, 7
      %v2930 = vsel %vm657, %v2928, %v2929
      %v2931 = vrot.slane %v2810, 7
      %v2932 = vsel %vm657, %v2929, %v2931
      %v2933 = vrot.slane %v2811, 7
      %v2934 = vsel %vm657, %v2931, %v2933
      %v2935 = vrot.slane %v2820, 7
      %v2936 = vrot.slane %v2821, 7
      %v2937 = vsel %vm657, %v2935, %v2936
      %v2938 = vrot.slane %v2830, 7
      %v2939 = vsel %vm657, %v2936, %v2938
      %v2940 = vrot.slane %v2831, 7
      %v2941 = vsel %vm657, %v2938, %v2940
      %v2942 = vrot.slane %v2840, 7
      %v2943 = vrot.slane %v2841, 7
      %v2944 = vsel %vm657, %v2942, %v2943
      %v2945 = vrot.slane %v2850, 7
      %v2946 = vsel %vm657, %v2943, %v2945
      %v2947 = vrot.slane %v2851, 7
      %v2948 = vsel %vm657, %v2945, %v2947
      %v2949 = vrot.slane %v2860, 7
      %v2950 = vrot.slane %v2861, 7
      %v2951 = vsel %vm657, %v2949, %v2950
      %v2952 = vrot.slane %v2870, 7
      %v2953 = vsel %vm657, %v2950, %v2952
      %v2954 = vrot.slane %v2871, 7
      %v2955 = vsel %vm657, %v2952, %v2954
      %v3010 = vsel %vm657, 0.0, %v2872
      %v3011 = vsel %vm657, 0.0, %v2879
      %v3012 = vsel %vm657, 0.0, %v2886
      %v3013 = vsel %vm657, 0.0, %v2893
      %v3014 = vsel %vm657, 0.0, %v2900
      %v3015 = vsel %vm657, 0.0, %v2907
      %v3016 = vsel %vm657, 0.0, %v2914
      %v3017 = vsel %vm657, 0.0, %v2921
      %v3018 = vsel %vm657, 0.0, %v2928
      %v3019 = vsel %vm657, 0.0, %v2935
      %v3020 = vsel %vm657, 0.0, %v2942
      %v3021 = vsel %vm657, 0.0, %v2949
      %v3022 = vsel %vm657, %v2877, 0.0
      %v3023 = vsel %vm657, %v2884, 0.0
      %v3024 = vsel %vm657, %v2891, 0.0
      %v3025 = vsel %vm657, %v2898, 0.0
      %v3026 = vsel %vm657, %v2905, 0.0
      %v3027 = vsel %vm657, %v2912, 0.0
      %v3028 = vsel %vm657, %v2919, 0.0
      %v3029 = vsel %vm657, %v2926, 0.0
      %v3030 = vsel %vm657, %v2933, 0.0
      %v3031 = vsel %vm657, %v2940, 0.0
      %v3032 = vsel %vm657, %v2947, 0.0
      %v3033 = vsel %vm657, %v2954, 0.0
      %v3034 = vld [vmem:[%s5] sm:$0xff]
      %v3035 = vld [vmem:[%s5 + $0x8] sm:$0xff]
      %v3036 = vld [vmem:[%s5 + $0x10] sm:$0xff]
      %v3037 = vld [vmem:[%s5 + $0x18] sm:$0xff]
      %v3038 = vld [vmem:[%s5 + $0x20] sm:$0xf]
      %v3039 = vld [vmem:[%s6] sm:$0x1]
      %v3060 = vrot.slane %v3010, 1
      %v3061 = vrot.slane %v2874, 1
      %v3062 = vsel %vm882, %v3060, %v3061
      %v3063 = vrot.slane %v2876, 1
      %v3064 = vsel %vm882, %v3061, %v3063
      %v3065 = vrot.slane %v2878, 1
      %v3066 = vsel %vm882, %v3063, %v3065
      %v3067 = vrot.slane %v3022, 1
      %v3068 = vsel %vm882, %v3065, %v3067
      %v3069 = vrot.slane %v3011, 1
      %v3070 = vrot.slane %v2881, 1
      %v3071 = vsel %vm882, %v3069, %v3070
      %v3072 = vrot.slane %v2883, 1
      %v3073 = vsel %vm882, %v3070, %v3072
      %v3074 = vrot.slane %v2885, 1
      %v3075 = vsel %vm882, %v3072, %v3074
      %v3076 = vrot.slane %v3023, 1
      %v3077 = vsel %vm882, %v3074, %v3076
      %v3078 = vrot.slane %v3012, 1
      %v3079 = vrot.slane %v2888, 1
      %v3080 = vsel %vm882, %v3078, %v3079
      %v3081 = vrot.slane %v2890, 1
      %v3082 = vsel %vm882, %v3079, %v3081
      %v3083 = vrot.slane %v2892, 1
      %v3084 = vsel %vm882, %v3081, %v3083
      %v3085 = vrot.slane %v3024, 1
      %v3086 = vsel %vm882, %v3083, %v3085
      %v3087 = vrot.slane %v3013, 1
      %v3088 = vrot.slane %v2895, 1
      %v3089 = vsel %vm882, %v3087, %v3088
      %v3090 = vrot.slane %v2897, 1
      %v3091 = vsel %vm882, %v3088, %v3090
      %v3092 = vrot.slane %v2899, 1
      %v3093 = vsel %vm882, %v3090, %v3092
      %v3094 = vrot.slane %v3025, 1
      %v3095 = vsel %vm882, %v3092, %v3094
      %v3096 = vrot.slane %v3014, 1
      %v3097 = vrot.slane %v2902, 1
      %v3098 = vsel %vm882, %v3096, %v3097
      %v3099 = vrot.slane %v2904, 1
      %v3100 = vsel %vm882, %v3097, %v3099
      %v3101 = vrot.slane %v2906, 1
      %v3102 = vsel %vm882, %v3099, %v3101
      %v3103 = vrot.slane %v3026, 1
      %v3104 = vsel %vm882, %v3101, %v3103
      %v3105 = vrot.slane %v3015, 1
      %v3106 = vrot.slane %v2909, 1
      %v3107 = vsel %vm882, %v3105, %v3106
      %v3108 = vrot.slane %v2911, 1
      %v3109 = vsel %vm882, %v3106, %v3108
      %v3110 = vrot.slane %v2913, 1
      %v3111 = vsel %vm882, %v3108, %v3110
      %v3112 = vrot.slane %v3027, 1
      %v3113 = vsel %vm882, %v3110, %v3112
      %v3114 = vrot.slane %v3016, 1
      %v3115 = vrot.slane %v2916, 1
      %v3116 = vsel %vm882, %v3114, %v3115
      %v3117 = vrot.slane %v2918, 1
      %v3118 = vsel %vm882, %v3115, %v3117
      %v3119 = vrot.slane %v2920, 1
      %v3120 = vsel %vm882, %v3117, %v3119
      %v3121 = vrot.slane %v3028, 1
      %v3122 = vsel %vm882, %v3119, %v3121
      %v3123 = vrot.slane %v3017, 1
      %v3124 = vrot.slane %v2923, 1
      %v3125 = vsel %vm882, %v3123, %v3124
      %v3126 = vrot.slane %v2925, 1
      %v3127 = vsel %vm882, %v3124, %v3126
      %v3128 = vrot.slane %v2927, 1
      %v3129 = vsel %vm882, %v3126, %v3128
      %v3130 = vrot.slane %v3029, 1
      %v3131 = vsel %vm882, %v3128, %v3130
      %v3132 = vrot.slane %v3018, 1
      %v3133 = vrot.slane %v2930, 1
      %v3134 = vsel %vm882, %v3132, %v3133
      %v3135 = vrot.slane %v2932, 1
      %v3136 = vsel %vm882, %v3133, %v3135
      %v3137 = vrot.slane %v2934, 1
      %v3138 = vsel %vm882, %v3135, %v3137
      %v3139 = vrot.slane %v3030, 1
      %v3140 = vsel %vm882, %v3137, %v3139
      %v3141 = vrot.slane %v3019, 1
      %v3142 = vrot.slane %v2937, 1
      %v3143 = vsel %vm882, %v3141, %v3142
      %v3144 = vrot.slane %v2939, 1
      %v3145 = vsel %vm882, %v3142, %v3144
      %v3146 = vrot.slane %v2941, 1
      %v3147 = vsel %vm882, %v3144, %v3146
      %v3148 = vrot.slane %v3031, 1
      %v3149 = vsel %vm882, %v3146, %v3148
      %3150 = vrot.lane.b32.xlu0 %v3062, 4
      %v3151 = vpop.permute.xlu0 %3150
      %3152 = vrot.lane.b32.xlu0 %v3064, 4
      %v3153 = vpop.permute.xlu0 %3152
      %3154 = vrot.lane.b32.xlu0 %v3066, 4
      %v3155 = vpop.permute.xlu0 %3154
      %3156 = vrot.lane.b32.xlu0 %v3068, 4
      %v3157 = vpop.permute.xlu0 %3156
      %3158 = vrot.lane.b32.xlu0 %v3071, 4
      %v3159 = vpop.permute.xlu0 %3158
      %3160 = vrot.lane.b32.xlu0 %v3073, 4
      %v3161 = vpop.permute.xlu0 %3160
      %3162 = vrot.lane.b32.xlu0 %v3075, 4
      %v3163 = vpop.permute.xlu0 %3162
      %3164 = vrot.lane.b32.xlu0 %v3077, 4
      %v3165 = vpop.permute.xlu0 %3164
      %3166 = vrot.lane.b32.xlu0 %v3080, 4
      %v3167 = vpop.permute.xlu0 %3166
      %3168 = vrot.lane.b32.xlu0 %v3082, 4
      %v3169 = vpop.permute.xlu0 %3168
      %3170 = vrot.lane.b32.xlu0 %v3084, 4
      %v3171 = vpop.permute.xlu0 %3170
      %3172 = vrot.lane.b32.xlu0 %v3086, 4
      %v3173 = vpop.permute.xlu0 %3172
      %3174 = vrot.lane.b32.xlu0 %v3089, 4
      %v3175 = vpop.permute.xlu0 %3174
      %3176 = vrot.lane.b32.xlu0 %v3091, 4
      %v3177 = vpop.permute.xlu0 %3176
      %3178 = vrot.lane.b32.xlu0 %v3093, 4
      %v3179 = vpop.permute.xlu0 %3178
      %3180 = vrot.lane.b32.xlu0 %v3095, 4
      %v3181 = vpop.permute.xlu0 %3180
      %3182 = vrot.lane.b32.xlu0 %v3098, 4
      %v3183 = vpop.permute.xlu0 %3182
      %3184 = vrot.lane.b32.xlu0 %v3100, 4
      %v3185 = vpop.permute.xlu0 %3184
      %3186 = vrot.lane.b32.xlu0 %v3102, 4
      %v3187 = vpop.permute.xlu0 %3186
      %3188 = vrot.lane.b32.xlu0 %v3104, 4
      %v3189 = vpop.permute.xlu0 %3188
      %3190 = vrot.lane.b32.xlu0 %v3107, 4
      %v3191 = vpop.permute.xlu0 %3190
      %3192 = vrot.lane.b32.xlu0 %v3109, 4
      %v3193 = vpop.permute.xlu0 %3192
      %3194 = vrot.lane.b32.xlu0 %v3111, 4
      %v3195 = vpop.permute.xlu0 %3194
      %3196 = vrot.lane.b32.xlu0 %v3113, 4
      %v3197 = vpop.permute.xlu0 %3196
      %3198 = vrot.lane.b32.xlu0 %v3116, 4
      %v3199 = vpop.permute.xlu0 %3198
      %3200 = vrot.lane.b32.xlu0 %v3118, 4
      %v3201 = vpop.permute.xlu0 %3200
      %3202 = vrot.lane.b32.xlu0 %v3120, 4
      %v3203 = vpop.permute.xlu0 %3202
      %3204 = vrot.lane.b32.xlu0 %v3122, 4
      %v3205 = vpop.permute.xlu0 %3204
      %3206 = vrot.lane.b32.xlu0 %v3125, 4
      %v3207 = vpop.permute.xlu0 %3206
      %3208 = vrot.lane.b32.xlu0 %v3127, 4
      %v3209 = vpop.permute.xlu0 %3208
      %3210 = vrot.lane.b32.xlu0 %v3129, 4
      %v3211 = vpop.permute.xlu0 %3210
      %3212 = vrot.lane.b32.xlu0 %v3131, 4
      %v3213 = vpop.permute.xlu0 %3212
      %3214 = vrot.lane.b32.xlu0 %v3134, 4
      %v3215 = vpop.permute.xlu0 %3214
      %3216 = vrot.lane.b32.xlu0 %v3136, 4
      %v3217 = vpop.permute.xlu0 %3216
      %3218 = vrot.lane.b32.xlu0 %v3138, 4
      %v3219 = vpop.permute.xlu0 %3218
      %3220 = vrot.lane.b32.xlu0 %v3140, 4
      %v3221 = vpop.permute.xlu0 %3220
      %3222 = vrot.lane.b32.xlu0 %v3143, 4
      %v3223 = vpop.permute.xlu0 %3222
      %3224 = vrot.lane.b32.xlu0 %v3145, 4
      %v3225 = vpop.permute.xlu0 %3224
      %3226 = vrot.lane.b32.xlu0 %v3147, 4
      %v3227 = vpop.permute.xlu0 %3226
      %3228 = vrot.lane.b32.xlu0 %v3149, 4
      %v3229 = vpop.permute.xlu0 %3228
      %vm3270 = vcmask 1045504
      %v3271 = vrot.slane %v3010, 2
      %v3272 = vrot.slane %v2874, 2
      %v3273 = vsel %vm3270, %v3271, %v3272
      %v3274 = vrot.slane %v2876, 2
      %v3275 = vsel %vm3270, %v3272, %v3274
      %v3276 = vrot.slane %v2878, 2
      %v3277 = vsel %vm3270, %v3274, %v3276
      %v3278 = vrot.slane %v3022, 2
      %v3279 = vsel %vm3270, %v3276, %v3278
      %v3280 = vrot.slane %v3011, 2
      %v3281 = vrot.slane %v2881, 2
      %v3282 = vsel %vm3270, %v3280, %v3281
      %v3283 = vrot.slane %v2883, 2
      %v3284 = vsel %vm3270, %v3281, %v3283
      %v3285 = vrot.slane %v2885, 2
      %v3286 = vsel %vm3270, %v3283, %v3285
      %v3287 = vrot.slane %v3023, 2
      %v3288 = vsel %vm3270, %v3285, %v3287
      %v3289 = vrot.slane %v3012, 2
      %v3290 = vrot.slane %v2888, 2
      %v3291 = vsel %vm3270, %v3289, %v3290
      %v3292 = vrot.slane %v2890, 2
      %v3293 = vsel %vm3270, %v3290, %v3292
      %v3294 = vrot.slane %v2892, 2
      %v3295 = vsel %vm3270, %v3292, %v3294
      %v3296 = vrot.slane %v3024, 2
      %v3297 = vsel %vm3270, %v3294, %v3296
      %v3298 = vrot.slane %v3013, 2
      %v3299 = vrot.slane %v2895, 2
      %v3300 = vsel %vm3270, %v3298, %v3299
      %v3301 = vrot.slane %v2897, 2
      %v3302 = vsel %vm3270, %v3299, %v3301
      %v3303 = vrot.slane %v2899, 2
      %v3304 = vsel %vm3270, %v3301, %v3303
      %v3305 = vrot.slane %v3025, 2
      %v3306 = vsel %vm3270, %v3303, %v3305
      %v3307 = vrot.slane %v3014, 2
      %v3308 = vrot.slane %v2902, 2
      %v3309 = vsel %vm3270, %v3307, %v3308
      %v3310 = vrot.slane %v2904, 2
      %v3311 = vsel %vm3270, %v3308, %v3310
      %v3312 = vrot.slane %v2906, 2
      %v3313 = vsel %vm3270, %v3310, %v3312
      %v3314 = vrot.slane %v3026, 2
      %v3315 = vsel %vm3270, %v3312, %v3314
      %v3316 = vrot.slane %v3015, 2
      %v3317 = vrot.slane %v2909, 2
      %v3318 = vsel %vm3270, %v3316, %v3317
      %v3319 = vrot.slane %v2911, 2
      %v3320 = vsel %vm3270, %v3317, %v3319
      %v3321 = vrot.slane %v2913, 2
      %v3322 = vsel %vm3270, %v3319, %v3321
      %v3323 = vrot.slane %v3027, 2
      %v3324 = vsel %vm3270, %v3321, %v3323
      %v3325 = vrot.slane %v3016, 2
      %v3326 = vrot.slane %v2916, 2
      %v3327 = vsel %vm3270, %v3325, %v3326
      %v3328 = vrot.slane %v2918, 2
      %v3329 = vsel %vm3270, %v3326, %v3328
      %v3330 = vrot.slane %v2920, 2
      %v3331 = vsel %vm3270, %v3328, %v3330
      %v3332 = vrot.slane %v3028, 2
      %v3333 = vsel %vm3270, %v3330, %v3332
      %v3334 = vrot.slane %v3017, 2
      %v3335 = vrot.slane %v2923, 2
      %v3336 = vsel %vm3270, %v3334, %v3335
      %v3337 = vrot.slane %v2925, 2
      %v3338 = vsel %vm3270, %v3335, %v3337
      %v3339 = vrot.slane %v2927, 2
      %v3340 = vsel %vm3270, %v3337, %v3339
      %v3341 = vrot.slane %v3029, 2
      %v3342 = vsel %vm3270, %v3339, %v3341
      %v3343 = vrot.slane %v3018, 2
      %v3344 = vrot.slane %v2930, 2
      %v3345 = vsel %vm3270, %v3343, %v3344
      %v3346 = vrot.slane %v2932, 2
      %v3347 = vsel %vm3270, %v3344, %v3346
      %v3348 = vrot.slane %v2934, 2
      %v3349 = vsel %vm3270, %v3346, %v3348
      %v3350 = vrot.slane %v3030, 2
      %v3351 = vsel %vm3270, %v3348, %v3350
      %v3352 = vrot.slane %v3019, 2
      %v3353 = vrot.slane %v2937, 2
      %v3354 = vsel %vm3270, %v3352, %v3353
      %v3355 = vrot.slane %v2939, 2
      %v3356 = vsel %vm3270, %v3353, %v3355
      %v3357 = vrot.slane %v2941, 2
      %v3358 = vsel %vm3270, %v3355, %v3357
      %v3359 = vrot.slane %v3031, 2
      %v3360 = vsel %vm3270, %v3357, %v3359
      %3361 = vrot.lane.b32.xlu0 %v3273, 8
      %v3362 = vpop.permute.xlu0 %3361
      %3363 = vrot.lane.b32.xlu0 %v3275, 8
      %v3364 = vpop.permute.xlu0 %3363
      %3365 = vrot.lane.b32.xlu0 %v3277, 8
      %v3366 = vpop.permute.xlu0 %3365
      %3367 = vrot.lane.b32.xlu0 %v3279, 8
      %v3368 = vpop.permute.xlu0 %3367
      %3369 = vrot.lane.b32.xlu0 %v3282, 8
      %v3370 = vpop.permute.xlu0 %3369
      %3371 = vrot.lane.b32.xlu0 %v3284, 8
      %v3372 = vpop.permute.xlu0 %3371
      %3373 = vrot.lane.b32.xlu0 %v3286, 8
      %v3374 = vpop.permute.xlu0 %3373
      %3375 = vrot.lane.b32.xlu0 %v3288, 8
      %v3376 = vpop.permute.xlu0 %3375
      %3377 = vrot.lane.b32.xlu0 %v3291, 8
      %v3378 = vpop.permute.xlu0 %3377
      %3379 = vrot.lane.b32.xlu0 %v3293, 8
      %v3380 = vpop.permute.xlu0 %3379
      %3381 = vrot.lane.b32.xlu0 %v3295, 8
      %v3382 = vpop.permute.xlu0 %3381
      %3383 = vrot.lane.b32.xlu0 %v3297, 8
      %v3384 = vpop.permute.xlu0 %3383
      %3385 = vrot.lane.b32.xlu0 %v3300, 8
      %v3386 = vpop.permute.xlu0 %3385
      %3387 = vrot.lane.b32.xlu0 %v3302, 8
      %v3388 = vpop.permute.xlu0 %3387
      %3389 = vrot.lane.b32.xlu0 %v3304, 8
      %v3390 = vpop.permute.xlu0 %3389
      %3391 = vrot.lane.b32.xlu0 %v3306, 8
      %v3392 = vpop.permute.xlu0 %3391
      %3393 = vrot.lane.b32.xlu0 %v3309, 8
      %v3394 = vpop.permute.xlu0 %3393
      %3395 = vrot.lane.b32.xlu0 %v3311, 8
      %v3396 = vpop.permute.xlu0 %3395
      %3397 = vrot.lane.b32.xlu0 %v3313, 8
      %v3398 = vpop.permute.xlu0 %3397
      %3399 = vrot.lane.b32.xlu0 %v3315, 8
      %v3400 = vpop.permute.xlu0 %3399
      %3401 = vrot.lane.b32.xlu0 %v3318, 8
      %v3402 = vpop.permute.xlu0 %3401
      %3403 = vrot.lane.b32.xlu0 %v3320, 8
      %v3404 = vpop.permute.xlu0 %3403
      %3405 = vrot.lane.b32.xlu0 %v3322, 8
      %v3406 = vpop.permute.xlu0 %3405
      %3407 = vrot.lane.b32.xlu0 %v3324, 8
      %v3408 = vpop.permute.xlu0 %3407
      %3409 = vrot.lane.b32.xlu0 %v3327, 8
      %v3410 = vpop.permute.xlu0 %3409
      %3411 = vrot.lane.b32.xlu0 %v3329, 8
      %v3412 = vpop.permute.xlu0 %3411
      %3413 = vrot.lane.b32.xlu0 %v3331, 8
      %v3414 = vpop.permute.xlu0 %3413
      %3415 = vrot.lane.b32.xlu0 %v3333, 8
      %v3416 = vpop.permute.xlu0 %3415
      %3417 = vrot.lane.b32.xlu0 %v3336, 8
      %v3418 = vpop.permute.xlu0 %3417
      %3419 = vrot.lane.b32.xlu0 %v3338, 8
      %v3420 = vpop.permute.xlu0 %3419
      %3421 = vrot.lane.b32.xlu0 %v3340, 8
      %v3422 = vpop.permute.xlu0 %3421
      %3423 = vrot.lane.b32.xlu0 %v3342, 8
      %v3424 = vpop.permute.xlu0 %3423
      %3425 = vrot.lane.b32.xlu0 %v3345, 8
      %v3426 = vpop.permute.xlu0 %3425
      %3427 = vrot.lane.b32.xlu0 %v3347, 8
      %v3428 = vpop.permute.xlu0 %3427
      %3429 = vrot.lane.b32.xlu0 %v3349, 8
      %v3430 = vpop.permute.xlu0 %3429
      %3431 = vrot.lane.b32.xlu0 %v3351, 8
      %v3432 = vpop.permute.xlu0 %3431
      %3433 = vrot.lane.b32.xlu0 %v3354, 8
      %v3434 = vpop.permute.xlu0 %3433
      %3435 = vrot.lane.b32.xlu0 %v3356, 8
      %v3436 = vpop.permute.xlu0 %3435
      %3437 = vrot.lane.b32.xlu0 %v3358, 8
      %v3438 = vpop.permute.xlu0 %3437
      %3439 = vrot.lane.b32.xlu0 %v3360, 8
      %v3440 = vpop.permute.xlu0 %3439
      %3482 = vrot.lane.b32.xlu0 %v3011, 12
      %v3483 = vpop.permute.xlu0 %3482
      %3484 = vrot.lane.b32.xlu0 %v2881, 12
      %v3485 = vpop.permute.xlu0 %3484
      %3486 = vrot.lane.b32.xlu0 %v2883, 12
      %v3487 = vpop.permute.xlu0 %3486
      %3488 = vrot.lane.b32.xlu0 %v2885, 12
      %v3489 = vpop.permute.xlu0 %3488
      %3490 = vrot.lane.b32.xlu0 %v3012, 12
      %v3491 = vpop.permute.xlu0 %3490
      %3492 = vrot.lane.b32.xlu0 %v2888, 12
      %v3493 = vpop.permute.xlu0 %3492
      %3494 = vrot.lane.b32.xlu0 %v2890, 12
      %v3495 = vpop.permute.xlu0 %3494
      %3496 = vrot.lane.b32.xlu0 %v2892, 12
      %v3497 = vpop.permute.xlu0 %3496
      %3498 = vrot.lane.b32.xlu0 %v3013, 12
      %v3499 = vpop.permute.xlu0 %3498
      %3500 = vrot.lane.b32.xlu0 %v2895, 12
      %v3501 = vpop.permute.xlu0 %3500
      %3502 = vrot.lane.b32.xlu0 %v2897, 12
      %v3503 = vpop.permute.xlu0 %3502
      %3504 = vrot.lane.b32.xlu0 %v2899, 12
      %v3505 = vpop.permute.xlu0 %3504
      %3506 = vrot.lane.b32.xlu0 %v3014, 12
      %v3507 = vpop.permute.xlu0 %3506
      %3508 = vrot.lane.b32.xlu0 %v2902, 12
      %v3509 = vpop.permute.xlu0 %3508
      %3510 = vrot.lane.b32.xlu0 %v2904, 12
      %v3511 = vpop.permute.xlu0 %3510
      %3512 = vrot.lane.b32.xlu0 %v2906, 12
      %v3513 = vpop.permute.xlu0 %3512
      %3514 = vrot.lane.b32.xlu0 %v3015, 12
      %v3515 = vpop.permute.xlu0 %3514
      %3516 = vrot.lane.b32.xlu0 %v2909, 12
      %v3517 = vpop.permute.xlu0 %3516
      %3518 = vrot.lane.b32.xlu0 %v2911, 12
      %v3519 = vpop.permute.xlu0 %3518
      %3520 = vrot.lane.b32.xlu0 %v2913, 12
      %v3521 = vpop.permute.xlu0 %3520
      %3522 = vrot.lane.b32.xlu0 %v3016, 12
      %v3523 = vpop.permute.xlu0 %3522
      %3524 = vrot.lane.b32.xlu0 %v2916, 12
      %v3525 = vpop.permute.xlu0 %3524
      %3526 = vrot.lane.b32.xlu0 %v2918, 12
      %v3527 = vpop.permute.xlu0 %3526
      %3528 = vrot.lane.b32.xlu0 %v2920, 12
      %v3529 = vpop.permute.xlu0 %3528
      %3530 = vrot.lane.b32.xlu0 %v3017, 12
      %v3531 = vpop.permute.xlu0 %3530
      %3532 = vrot.lane.b32.xlu0 %v2923, 12
      %v3533 = vpop.permute.xlu0 %3532
      %3534 = vrot.lane.b32.xlu0 %v2925, 12
      %v3535 = vpop.permute.xlu0 %3534
      %3536 = vrot.lane.b32.xlu0 %v2927, 12
      %v3537 = vpop.permute.xlu0 %3536
      %3538 = vrot.lane.b32.xlu0 %v3018, 12
      %v3539 = vpop.permute.xlu0 %3538
      %3540 = vrot.lane.b32.xlu0 %v2930, 12
      %v3541 = vpop.permute.xlu0 %3540
      %3542 = vrot.lane.b32.xlu0 %v2932, 12
      %v3543 = vpop.permute.xlu0 %3542
      %3544 = vrot.lane.b32.xlu0 %v2934, 12
      %v3545 = vpop.permute.xlu0 %3544
      %3546 = vrot.lane.b32.xlu0 %v3019, 12
      %v3547 = vpop.permute.xlu0 %3546
      %3548 = vrot.lane.b32.xlu0 %v2937, 12
      %v3549 = vpop.permute.xlu0 %3548
      %3550 = vrot.lane.b32.xlu0 %v2939, 12
      %v3551 = vpop.permute.xlu0 %3550
      %3552 = vrot.lane.b32.xlu0 %v2941, 12
      %v3553 = vpop.permute.xlu0 %3552
      %3554 = vrot.lane.b32.xlu0 %v3020, 12
      %v3555 = vpop.permute.xlu0 %3554
      %3556 = vrot.lane.b32.xlu0 %v2944, 12
      %v3557 = vpop.permute.xlu0 %3556
      %3558 = vrot.lane.b32.xlu0 %v2946, 12
      %v3559 = vpop.permute.xlu0 %3558
      %3560 = vrot.lane.b32.xlu0 %v2948, 12
      %v3561 = vpop.permute.xlu0 %3560
      %v3603 = vrot.slane %v3020, 1
      %v3604 = vrot.slane %v2944, 1
      %v3605 = vsel %vm882, %v3603, %v3604
      %v3606 = vrot.slane %v2946, 1
      %v3607 = vsel %vm882, %v3604, %v3606
      %v3608 = vrot.slane %v2948, 1
      %v3609 = vsel %vm882, %v3606, %v3608
      %v3610 = vrot.slane %v3032, 1
      %v3611 = vsel %vm882, %v3608, %v3610
      %3612 = vrot.lane.b32.xlu0 %v3071, 16
      %v3613 = vpop.permute.xlu0 %3612
      %3614 = vrot.lane.b32.xlu0 %v3073, 16
      %v3615 = vpop.permute.xlu0 %3614
      %3616 = vrot.lane.b32.xlu0 %v3075, 16
      %v3617 = vpop.permute.xlu0 %3616
      %3618 = vrot.lane.b32.xlu0 %v3077, 16
      %v3619 = vpop.permute.xlu0 %3618
      %3620 = vrot.lane.b32.xlu0 %v3080, 16
      %v3621 = vpop.permute.xlu0 %3620
      %3622 = vrot.lane.b32.xlu0 %v3082, 16
      %v3623 = vpop.permute.xlu0 %3622
      %3624 = vrot.lane.b32.xlu0 %v3084, 16
      %v3625 = vpop.permute.xlu0 %3624
      %3626 = vrot.lane.b32.xlu0 %v3086, 16
      %v3627 = vpop.permute.xlu0 %3626
      %3628 = vrot.lane.b32.xlu0 %v3089, 16
      %v3629 = vpop.permute.xlu0 %3628
      %3630 = vrot.lane.b32.xlu0 %v3091, 16
      %v3631 = vpop.permute.xlu0 %3630
      %3632 = vrot.lane.b32.xlu0 %v3093, 16
      %v3633 = vpop.permute.xlu0 %3632
      %3634 = vrot.lane.b32.xlu0 %v3095, 16
      %v3635 = vpop.permute.xlu0 %3634
      %3636 = vrot.lane.b32.xlu0 %v3098, 16
      %v3637 = vpop.permute.xlu0 %3636
      %3638 = vrot.lane.b32.xlu0 %v3100, 16
      %v3639 = vpop.permute.xlu0 %3638
      %3640 = vrot.lane.b32.xlu0 %v3102, 16
      %v3641 = vpop.permute.xlu0 %3640
      %3642 = vrot.lane.b32.xlu0 %v3104, 16
      %v3643 = vpop.permute.xlu0 %3642
      %3644 = vrot.lane.b32.xlu0 %v3107, 16
      %v3645 = vpop.permute.xlu0 %3644
      %3646 = vrot.lane.b32.xlu0 %v3109, 16
      %v3647 = vpop.permute.xlu0 %3646
      %3648 = vrot.lane.b32.xlu0 %v3111, 16
      %v3649 = vpop.permute.xlu0 %3648
      %3650 = vrot.lane.b32.xlu0 %v3113, 16
      %v3651 = vpop.permute.xlu0 %3650
      %3652 = vrot.lane.b32.xlu0 %v3116, 16
      %v3653 = vpop.permute.xlu0 %3652
      %3654 = vrot.lane.b32.xlu0 %v3118, 16
      %v3655 = vpop.permute.xlu0 %3654
      %3656 = vrot.lane.b32.xlu0 %v3120, 16
      %v3657 = vpop.permute.xlu0 %3656
      %3658 = vrot.lane.b32.xlu0 %v3122, 16
      %v3659 = vpop.permute.xlu0 %3658
      %3660 = vrot.lane.b32.xlu0 %v3125, 16
      %v3661 = vpop.permute.xlu0 %3660
      %3662 = vrot.lane.b32.xlu0 %v3127, 16
      %v3663 = vpop.permute.xlu0 %3662
      %3664 = vrot.lane.b32.xlu0 %v3129, 16
      %v3665 = vpop.permute.xlu0 %3664
      %3666 = vrot.lane.b32.xlu0 %v3131, 16
      %v3667 = vpop.permute.xlu0 %3666
      %3668 = vrot.lane.b32.xlu0 %v3134, 16
      %v3669 = vpop.permute.xlu0 %3668
      %3670 = vrot.lane.b32.xlu0 %v3136, 16
      %v3671 = vpop.permute.xlu0 %3670
      %3672 = vrot.lane.b32.xlu0 %v3138, 16
      %v3673 = vpop.permute.xlu0 %3672
      %3674 = vrot.lane.b32.xlu0 %v3140, 16
      %v3675 = vpop.permute.xlu0 %3674
      %3676 = vrot.lane.b32.xlu0 %v3143, 16
      %v3677 = vpop.permute.xlu0 %3676
      %3678 = vrot.lane.b32.xlu0 %v3145, 16
      %v3679 = vpop.permute.xlu0 %3678
      %3680 = vrot.lane.b32.xlu0 %v3147, 16
      %v3681 = vpop.permute.xlu0 %3680
      %3682 = vrot.lane.b32.xlu0 %v3149, 16
      %v3683 = vpop.permute.xlu0 %3682
      %3684 = vrot.lane.b32.xlu0 %v3605, 16
      %v3685 = vpop.permute.xlu0 %3684
      %3686 = vrot.lane.b32.xlu0 %v3607, 16
      %v3687 = vpop.permute.xlu0 %3686
      %3688 = vrot.lane.b32.xlu0 %v3609, 16
      %v3689 = vpop.permute.xlu0 %3688
      %3690 = vrot.lane.b32.xlu0 %v3611, 16
      %v3691 = vpop.permute.xlu0 %3690
      %v3732 = vrot.slane %v3020, 2
      %v3733 = vrot.slane %v2944, 2
      %v3734 = vsel %vm3270, %v3732, %v3733
      %v3735 = vrot.slane %v2946, 2
      %v3736 = vsel %vm3270, %v3733, %v3735
      %v3737 = vrot.slane %v2948, 2
      %v3738 = vsel %vm3270, %v3735, %v3737
      %v3739 = vrot.slane %v3032, 2
      %v3740 = vsel %vm3270, %v3737, %v3739
      %3741 = vrot.lane.b32.xlu0 %v3282, 20
      %v3742 = vpop.permute.xlu0 %3741
      %3743 = vrot.lane.b32.xlu0 %v3284, 20
      %v3744 = vpop.permute.xlu0 %3743
      %3745 = vrot.lane.b32.xlu0 %v3286, 20
      %v3746 = vpop.permute.xlu0 %3745
      %3747 = vrot.lane.b32.xlu0 %v3288, 20
      %v3748 = vpop.permute.xlu0 %3747
      %3749 = vrot.lane.b32.xlu0 %v3291, 20
      %v3750 = vpop.permute.xlu0 %3749
      %3751 = vrot.lane.b32.xlu0 %v3293, 20
      %v3752 = vpop.permute.xlu0 %3751
      %3753 = vrot.lane.b32.xlu0 %v3295, 20
      %v3754 = vpop.permute.xlu0 %3753
      %3755 = vrot.lane.b32.xlu0 %v3297, 20
      %v3756 = vpop.permute.xlu0 %3755
      %3757 = vrot.lane.b32.xlu0 %v3300, 20
      %v3758 = vpop.permute.xlu0 %3757
      %3759 = vrot.lane.b32.xlu0 %v3302, 20
      %v3760 = vpop.permute.xlu0 %3759
      %3761 = vrot.lane.b32.xlu0 %v3304, 20
      %v3762 = vpop.permute.xlu0 %3761
      %3763 = vrot.lane.b32.xlu0 %v3306, 20
      %v3764 = vpop.permute.xlu0 %3763
      %3765 = vrot.lane.b32.xlu0 %v3309, 20
      %v3766 = vpop.permute.xlu0 %3765
      %3767 = vrot.lane.b32.xlu0 %v3311, 20
      %v3768 = vpop.permute.xlu0 %3767
      %3769 = vrot.lane.b32.xlu0 %v3313, 20
      %v3770 = vpop.permute.xlu0 %3769
      %3771 = vrot.lane.b32.xlu0 %v3315, 20
      %v3772 = vpop.permute.xlu0 %3771
      %3773 = vrot.lane.b32.xlu0 %v3318, 20
      %v3774 = vpop.permute.xlu0 %3773
      %3775 = vrot.lane.b32.xlu0 %v3320, 20
      %v3776 = vpop.permute.xlu0 %3775
      %3777 = vrot.lane.b32.xlu0 %v3322, 20
      %v3778 = vpop.permute.xlu0 %3777
      %3779 = vrot.lane.b32.xlu0 %v3324, 20
      %v3780 = vpop.permute.xlu0 %3779
      %3781 = vrot.lane.b32.xlu0 %v3327, 20
      %v3782 = vpop.permute.xlu0 %3781
      %3783 = vrot.lane.b32.xlu0 %v3329, 20
      %v3784 = vpop.permute.xlu0 %3783
      %3785 = vrot.lane.b32.xlu0 %v3331, 20
      %v3786 = vpop.permute.xlu0 %3785
      %3787 = vrot.lane.b32.xlu0 %v3333, 20
      %v3788 = vpop.permute.xlu0 %3787
      %3789 = vrot.lane.b32.xlu0 %v3336, 20
      %v3790 = vpop.permute.xlu0 %3789
      %3791 = vrot.lane.b32.xlu0 %v3338, 20
      %v3792 = vpop.permute.xlu0 %3791
      %3793 = vrot.lane.b32.xlu0 %v3340, 20
      %v3794 = vpop.permute.xlu0 %3793
      %3795 = vrot.lane.b32.xlu0 %v3342, 20
      %v3796 = vpop.permute.xlu0 %3795
      %3797 = vrot.lane.b32.xlu0 %v3345, 20
      %v3798 = vpop.permute.xlu0 %3797
      %3799 = vrot.lane.b32.xlu0 %v3347, 20
      %v3800 = vpop.permute.xlu0 %3799
      %3801 = vrot.lane.b32.xlu0 %v3349, 20
      %v3802 = vpop.permute.xlu0 %3801
      %3803 = vrot.lane.b32.xlu0 %v3351, 20
      %v3804 = vpop.permute.xlu0 %3803
      %3805 = vrot.lane.b32.xlu0 %v3354, 20
      %v3806 = vpop.permute.xlu0 %3805
      %3807 = vrot.lane.b32.xlu0 %v3356, 20
      %v3808 = vpop.permute.xlu0 %3807
      %3809 = vrot.lane.b32.xlu0 %v3358, 20
      %v3810 = vpop.permute.xlu0 %3809
      %3811 = vrot.lane.b32.xlu0 %v3360, 20
      %v3812 = vpop.permute.xlu0 %3811
      %3813 = vrot.lane.b32.xlu0 %v3734, 20
      %v3814 = vpop.permute.xlu0 %3813
      %3815 = vrot.lane.b32.xlu0 %v3736, 20
      %v3816 = vpop.permute.xlu0 %3815
      %3817 = vrot.lane.b32.xlu0 %v3738, 20
      %v3818 = vpop.permute.xlu0 %3817
      %3819 = vrot.lane.b32.xlu0 %v3740, 20
      %v3820 = vpop.permute.xlu0 %3819
      %3862 = vrot.lane.b32.xlu0 %v3012, 24
      %v3863 = vpop.permute.xlu0 %3862
      %3864 = vrot.lane.b32.xlu0 %v2888, 24
      %v3865 = vpop.permute.xlu0 %3864
      %3866 = vrot.lane.b32.xlu0 %v2890, 24
      %v3867 = vpop.permute.xlu0 %3866
      %3868 = vrot.lane.b32.xlu0 %v2892, 24
      %v3869 = vpop.permute.xlu0 %3868
      %3870 = vrot.lane.b32.xlu0 %v3013, 24
      %v3871 = vpop.permute.xlu0 %3870
      %3872 = vrot.lane.b32.xlu0 %v2895, 24
      %v3873 = vpop.permute.xlu0 %3872
      %3874 = vrot.lane.b32.xlu0 %v2897, 24
      %v3875 = vpop.permute.xlu0 %3874
      %3876 = vrot.lane.b32.xlu0 %v2899, 24
      %v3877 = vpop.permute.xlu0 %3876
      %3878 = vrot.lane.b32.xlu0 %v3014, 24
      %v3879 = vpop.permute.xlu0 %3878
      %3880 = vrot.lane.b32.xlu0 %v2902, 24
      %v3881 = vpop.permute.xlu0 %3880
      %3882 = vrot.lane.b32.xlu0 %v2904, 24
      %v3883 = vpop.permute.xlu0 %3882
      %3884 = vrot.lane.b32.xlu0 %v2906, 24
      %v3885 = vpop.permute.xlu0 %3884
      %3886 = vrot.lane.b32.xlu0 %v3015, 24
      %v3887 = vpop.permute.xlu0 %3886
      %3888 = vrot.lane.b32.xlu0 %v2909, 24
      %v3889 = vpop.permute.xlu0 %3888
      %3890 = vrot.lane.b32.xlu0 %v2911, 24
      %v3891 = vpop.permute.xlu0 %3890
      %3892 = vrot.lane.b32.xlu0 %v2913, 24
      %v3893 = vpop.permute.xlu0 %3892
      %3894 = vrot.lane.b32.xlu0 %v3016, 24
      %v3895 = vpop.permute.xlu0 %3894
      %3896 = vrot.lane.b32.xlu0 %v2916, 24
      %v3897 = vpop.permute.xlu0 %3896
      %3898 = vrot.lane.b32.xlu0 %v2918, 24
      %v3899 = vpop.permute.xlu0 %3898
      %3900 = vrot.lane.b32.xlu0 %v2920, 24
      %v3901 = vpop.permute.xlu0 %3900
      %3902 = vrot.lane.b32.xlu0 %v3017, 24
      %v3903 = vpop.permute.xlu0 %3902
      %3904 = vrot.lane.b32.xlu0 %v2923, 24
      %v3905 = vpop.permute.xlu0 %3904
      %3906 = vrot.lane.b32.xlu0 %v2925, 24
      %v3907 = vpop.permute.xlu0 %3906
      %3908 = vrot.lane.b32.xlu0 %v2927, 24
      %v3909 = vpop.permute.xlu0 %3908
      %3910 = vrot.lane.b32.xlu0 %v3018, 24
      %v3911 = vpop.permute.xlu0 %3910
      %3912 = vrot.lane.b32.xlu0 %v2930, 24
      %v3913 = vpop.permute.xlu0 %3912
      %3914 = vrot.lane.b32.xlu0 %v2932, 24
      %v3915 = vpop.permute.xlu0 %3914
      %3916 = vrot.lane.b32.xlu0 %v2934, 24
      %v3917 = vpop.permute.xlu0 %3916
      %3918 = vrot.lane.b32.xlu0 %v3019, 24
      %v3919 = vpop.permute.xlu0 %3918
      %3920 = vrot.lane.b32.xlu0 %v2937, 24
      %v3921 = vpop.permute.xlu0 %3920
      %3922 = vrot.lane.b32.xlu0 %v2939, 24
      %v3923 = vpop.permute.xlu0 %3922
      %3924 = vrot.lane.b32.xlu0 %v2941, 24
      %v3925 = vpop.permute.xlu0 %3924
      %3926 = vrot.lane.b32.xlu0 %v3020, 24
      %v3927 = vpop.permute.xlu0 %3926
      %3928 = vrot.lane.b32.xlu0 %v2944, 24
      %v3929 = vpop.permute.xlu0 %3928
      %3930 = vrot.lane.b32.xlu0 %v2946, 24
      %v3931 = vpop.permute.xlu0 %3930
      %3932 = vrot.lane.b32.xlu0 %v2948, 24
      %v3933 = vpop.permute.xlu0 %3932
      %3934 = vrot.lane.b32.xlu0 %v3021, 24
      %v3935 = vpop.permute.xlu0 %3934
      %3936 = vrot.lane.b32.xlu0 %v2951, 24
      %v3937 = vpop.permute.xlu0 %3936
      %3938 = vrot.lane.b32.xlu0 %v2953, 24
      %v3939 = vpop.permute.xlu0 %3938
      %3940 = vrot.lane.b32.xlu0 %v2955, 24
      %v3941 = vpop.permute.xlu0 %3940
      %v3983 = vrot.slane %v3021, 1
      %v3984 = vrot.slane %v2951, 1
      %v3985 = vsel %vm882, %v3983, %v3984
      %v3986 = vrot.slane %v2953, 1
      %v3987 = vsel %vm882, %v3984, %v3986
      %v3988 = vrot.slane %v2955, 1
      %v3989 = vsel %vm882, %v3986, %v3988
      %v3990 = vrot.slane %v3033, 1
      %v3991 = vsel %vm882, %v3988, %v3990
      %3992 = vrot.lane.b32.xlu0 %v3080, 28
      %v3993 = vpop.permute.xlu0 %3992
      %3994 = vrot.lane.b32.xlu0 %v3082, 28
      %v3995 = vpop.permute.xlu0 %3994
      %3996 = vrot.lane.b32.xlu0 %v3084, 28
      %v3997 = vpop.permute.xlu0 %3996
      %3998 = vrot.lane.b32.xlu0 %v3086, 28
      %v3999 = vpop.permute.xlu0 %3998
      %4000 = vrot.lane.b32.xlu0 %v3089, 28
      %v4001 = vpop.permute.xlu0 %4000
      %4002 = vrot.lane.b32.xlu0 %v3091, 28
      %v4003 = vpop.permute.xlu0 %4002
      %4004 = vrot.lane.b32.xlu0 %v3093, 28
      %v4005 = vpop.permute.xlu0 %4004
      %4006 = vrot.lane.b32.xlu0 %v3095, 28
      %v4007 = vpop.permute.xlu0 %4006
      %4008 = vrot.lane.b32.xlu0 %v3098, 28
      %v4009 = vpop.permute.xlu0 %4008
      %4010 = vrot.lane.b32.xlu0 %v3100, 28
      %v4011 = vpop.permute.xlu0 %4010
      %4012 = vrot.lane.b32.xlu0 %v3102, 28
      %v4013 = vpop.permute.xlu0 %4012
      %4014 = vrot.lane.b32.xlu0 %v3104, 28
      %v4015 = vpop.permute.xlu0 %4014
      %4016 = vrot.lane.b32.xlu0 %v3107, 28
      %v4017 = vpop.permute.xlu0 %4016
      %4018 = vrot.lane.b32.xlu0 %v3109, 28
      %v4019 = vpop.permute.xlu0 %4018
      %4020 = vrot.lane.b32.xlu0 %v3111, 28
      %v4021 = vpop.permute.xlu0 %4020
      %4022 = vrot.lane.b32.xlu0 %v3113, 28
      %v4023 = vpop.permute.xlu0 %4022
      %4024 = vrot.lane.b32.xlu0 %v3116, 28
      %v4025 = vpop.permute.xlu0 %4024
      %4026 = vrot.lane.b32.xlu0 %v3118, 28
      %v4027 = vpop.permute.xlu0 %4026
      %4028 = vrot.lane.b32.xlu0 %v3120, 28
      %v4029 = vpop.permute.xlu0 %4028
      %4030 = vrot.lane.b32.xlu0 %v3122, 28
      %v4031 = vpop.permute.xlu0 %4030
      %4032 = vrot.lane.b32.xlu0 %v3125, 28
      %v4033 = vpop.permute.xlu0 %4032
      %4034 = vrot.lane.b32.xlu0 %v3127, 28
      %v4035 = vpop.permute.xlu0 %4034
      %4036 = vrot.lane.b32.xlu0 %v3129, 28
      %v4037 = vpop.permute.xlu0 %4036
      %4038 = vrot.lane.b32.xlu0 %v3131, 28
      %v4039 = vpop.permute.xlu0 %4038
      %4040 = vrot.lane.b32.xlu0 %v3134, 28
      %v4041 = vpop.permute.xlu0 %4040
      %4042 = vrot.lane.b32.xlu0 %v3136, 28
      %v4043 = vpop.permute.xlu0 %4042
      %4044 = vrot.lane.b32.xlu0 %v3138, 28
      %v4045 = vpop.permute.xlu0 %4044
      %4046 = vrot.lane.b32.xlu0 %v3140, 28
      %v4047 = vpop.permute.xlu0 %4046
      %4048 = vrot.lane.b32.xlu0 %v3143, 28
      %v4049 = vpop.permute.xlu0 %4048
      %4050 = vrot.lane.b32.xlu0 %v3145, 28
      %v4051 = vpop.permute.xlu0 %4050
      %4052 = vrot.lane.b32.xlu0 %v3147, 28
      %v4053 = vpop.permute.xlu0 %4052
      %4054 = vrot.lane.b32.xlu0 %v3149, 28
      %v4055 = vpop.permute.xlu0 %4054
      %4056 = vrot.lane.b32.xlu0 %v3605, 28
      %v4057 = vpop.permute.xlu0 %4056
      %4058 = vrot.lane.b32.xlu0 %v3607, 28
      %v4059 = vpop.permute.xlu0 %4058
      %4060 = vrot.lane.b32.xlu0 %v3609, 28
      %v4061 = vpop.permute.xlu0 %4060
      %4062 = vrot.lane.b32.xlu0 %v3611, 28
      %v4063 = vpop.permute.xlu0 %4062
      %4064 = vrot.lane.b32.xlu0 %v3985, 28
      %v4065 = vpop.permute.xlu0 %4064
      %4066 = vrot.lane.b32.xlu0 %v3987, 28
      %v4067 = vpop.permute.xlu0 %4066
      %4068 = vrot.lane.b32.xlu0 %v3989, 28
      %v4069 = vpop.permute.xlu0 %4068
      %4070 = vrot.lane.b32.xlu0 %v3991, 28
      %v4071 = vpop.permute.xlu0 %4070
      %v4112 = vrot.slane %v3021, 2
      %v4113 = vrot.slane %v2951, 2
      %v4114 = vsel %vm3270, %v4112, %v4113
      %v4115 = vrot.slane %v2953, 2
      %v4116 = vsel %vm3270, %v4113, %v4115
      %v4117 = vrot.slane %v2955, 2
      %v4118 = vsel %vm3270, %v4115, %v4117
      %v4119 = vrot.slane %v3033, 2
      %v4120 = vsel %vm3270, %v4117, %v4119
      %4121 = vrot.lane.b32.xlu0 %v3291, 32
      %v4122 = vpop.permute.xlu0 %4121
      %4123 = vrot.lane.b32.xlu0 %v3293, 32
      %v4124 = vpop.permute.xlu0 %4123
      %4125 = vrot.lane.b32.xlu0 %v3295, 32
      %v4126 = vpop.permute.xlu0 %4125
      %4127 = vrot.lane.b32.xlu0 %v3297, 32
      %v4128 = vpop.permute.xlu0 %4127
      %4129 = vrot.lane.b32.xlu0 %v3300, 32
      %v4130 = vpop.permute.xlu0 %4129
      %4131 = vrot.lane.b32.xlu0 %v3302, 32
      %v4132 = vpop.permute.xlu0 %4131
      %4133 = vrot.lane.b32.xlu0 %v3304, 32
      %v4134 = vpop.permute.xlu0 %4133
      %4135 = vrot.lane.b32.xlu0 %v3306, 32
      %v4136 = vpop.permute.xlu0 %4135
      %4137 = vrot.lane.b32.xlu0 %v3309, 32
      %v4138 = vpop.permute.xlu0 %4137
      %4139 = vrot.lane.b32.xlu0 %v3311, 32
      %v4140 = vpop.permute.xlu0 %4139
      %4141 = vrot.lane.b32.xlu0 %v3313, 32
      %v4142 = vpop.permute.xlu0 %4141
      %4143 = vrot.lane.b32.xlu0 %v3315, 32
      %v4144 = vpop.permute.xlu0 %4143
      %4145 = vrot.lane.b32.xlu0 %v3318, 32
      %v4146 = vpop.permute.xlu0 %4145
      %4147 = vrot.lane.b32.xlu0 %v3320, 32
      %v4148 = vpop.permute.xlu0 %4147
      %4149 = vrot.lane.b32.xlu0 %v3322, 32
      %v4150 = vpop.permute.xlu0 %4149
      %4151 = vrot.lane.b32.xlu0 %v3324, 32
      %v4152 = vpop.permute.xlu0 %4151
      %4153 = vrot.lane.b32.xlu0 %v3327, 32
      %v4154 = vpop.permute.xlu0 %4153
      %4155 = vrot.lane.b32.xlu0 %v3329, 32
      %v4156 = vpop.permute.xlu0 %4155
      %4157 = vrot.lane.b32.xlu0 %v3331, 32
      %v4158 = vpop.permute.xlu0 %4157
      %4159 = vrot.lane.b32.xlu0 %v3333, 32
      %v4160 = vpop.permute.xlu0 %4159
      %4161 = vrot.lane.b32.xlu0 %v3336, 32
      %v4162 = vpop.permute.xlu0 %4161
      %4163 = vrot.lane.b32.xlu0 %v3338, 32
      %v4164 = vpop.permute.xlu0 %4163
      %4165 = vrot.lane.b32.xlu0 %v3340, 32
      %v4166 = vpop.permute.xlu0 %4165
      %4167 = vrot.lane.b32.xlu0 %v3342, 32
      %v4168 = vpop.permute.xlu0 %4167
      %4169 = vrot.lane.b32.xlu0 %v3345, 32
      %v4170 = vpop.permute.xlu0 %4169
      %4171 = vrot.lane.b32.xlu0 %v3347, 32
      %v4172 = vpop.permute.xlu0 %4171
      %4173 = vrot.lane.b32.xlu0 %v3349, 32
      %v4174 = vpop.permute.xlu0 %4173
      %4175 = vrot.lane.b32.xlu0 %v3351, 32
      %v4176 = vpop.permute.xlu0 %4175
      %4177 = vrot.lane.b32.xlu0 %v3354, 32
      %v4178 = vpop.permute.xlu0 %4177
      %4179 = vrot.lane.b32.xlu0 %v3356, 32
      %v4180 = vpop.permute.xlu0 %4179
      %4181 = vrot.lane.b32.xlu0 %v3358, 32
      %v4182 = vpop.permute.xlu0 %4181
      %4183 = vrot.lane.b32.xlu0 %v3360, 32
      %v4184 = vpop.permute.xlu0 %4183
      %4185 = vrot.lane.b32.xlu0 %v3734, 32
      %v4186 = vpop.permute.xlu0 %4185
      %4187 = vrot.lane.b32.xlu0 %v3736, 32
      %v4188 = vpop.permute.xlu0 %4187
      %4189 = vrot.lane.b32.xlu0 %v3738, 32
      %v4190 = vpop.permute.xlu0 %4189
      %4191 = vrot.lane.b32.xlu0 %v3740, 32
      %v4192 = vpop.permute.xlu0 %4191
      %4193 = vrot.lane.b32.xlu0 %v4114, 32
      %v4194 = vpop.permute.xlu0 %4193
      %4195 = vrot.lane.b32.xlu0 %v4116, 32
      %v4196 = vpop.permute.xlu0 %4195
      %4197 = vrot.lane.b32.xlu0 %v4118, 32
      %v4198 = vpop.permute.xlu0 %4197
      %4199 = vrot.lane.b32.xlu0 %v4120, 32
      %v4200 = vpop.permute.xlu0 %4199
      %vm4241 = vcmask 31744
      %v4242 = vsel %vm4241, %v3010, %v3151
      %v4243 = vsel %vm4241, %v2874, %v3153
      %v4244 = vsel %vm4241, %v2876, %v3155
      %v4245 = vsel %vm4241, %v2878, %v3157
      %v4246 = vsel %vm4241, %v3011, %v3159
      %v4247 = vsel %vm4241, %v2881, %v3161
      %v4248 = vsel %vm4241, %v2883, %v3163
      %v4249 = vsel %vm4241, %v2885, %v3165
      %v4250 = vsel %vm4241, %v3012, %v3167
      %v4251 = vsel %vm4241, %v2888, %v3169
      %v4252 = vsel %vm4241, %v2890, %v3171
      %v4253 = vsel %vm4241, %v2892, %v3173
      %v4254 = vsel %vm4241, %v3013, %v3175
      %v4255 = vsel %vm4241, %v2895, %v3177
      %v4256 = vsel %vm4241, %v2897, %v3179
      %v4257 = vsel %vm4241, %v2899, %v3181
      %v4258 = vsel %vm4241, %v3014, %v3183
      %v4259 = vsel %vm4241, %v2902, %v3185
      %v4260 = vsel %vm4241, %v2904, %v3187
      %v4261 = vsel %vm4241, %v2906, %v3189
      %v4262 = vsel %vm4241, %v3015, %v3191
      %v4263 = vsel %vm4241, %v2909, %v3193
      %v4264 = vsel %vm4241, %v2911, %v3195
      %v4265 = vsel %vm4241, %v2913, %v3197
      %v4266 = vsel %vm4241, %v3016, %v3199
      %v4267 = vsel %vm4241, %v2916, %v3201
      %v4268 = vsel %vm4241, %v2918, %v3203
      %v4269 = vsel %vm4241, %v2920, %v3205
      %v4270 = vsel %vm4241, %v3017, %v3207
      %v4271 = vsel %vm4241, %v2923, %v3209
      %v4272 = vsel %vm4241, %v2925, %v3211
      %v4273 = vsel %vm4241, %v2927, %v3213
      %v4274 = vsel %vm4241, %v3018, %v3215
      %v4275 = vsel %vm4241, %v2930, %v3217
      %v4276 = vsel %vm4241, %v2932, %v3219
      %v4277 = vsel %vm4241, %v2934, %v3221
      %v4278 = vsel %vm4241, %v3019, %v3223
      %v4279 = vsel %vm4241, %v2937, %v3225
      %v4280 = vsel %vm4241, %v2939, %v3227
      %v4281 = vsel %vm4241, %v2941, %v3229
      %vm4282 = vcmask 64512
      %v4283 = vsel %vm4282, %v4242, %v3362
      %v4284 = vsel %vm4282, %v4243, %v3364
      %v4285 = vsel %vm4282, %v4244, %v3366
      %v4286 = vsel %vm4282, %v4245, %v3368
      %v4287 = vsel %vm4282, %v4246, %v3370
      %v4288 = vsel %vm4282, %v4247, %v3372
      %v4289 = vsel %vm4282, %v4248, %v3374
      %v4290 = vsel %vm4282, %v4249, %v3376
      %v4291 = vsel %vm4282, %v4250, %v3378
      %v4292 = vsel %vm4282, %v4251, %v3380
      %v4293 = vsel %vm4282, %v4252, %v3382
      %v4294 = vsel %vm4282, %v4253, %v3384
      %v4295 = vsel %vm4282, %v4254, %v3386
      %v4296 = vsel %vm4282, %v4255, %v3388
      %v4297 = vsel %vm4282, %v4256, %v3390
      %v4298 = vsel %vm4282, %v4257, %v3392
      %v4299 = vsel %vm4282, %v4258, %v3394
      %v4300 = vsel %vm4282, %v4259, %v3396
      %v4301 = vsel %vm4282, %v4260, %v3398
      %v4302 = vsel %vm4282, %v4261, %v3400
      %v4303 = vsel %vm4282, %v4262, %v3402
      %v4304 = vsel %vm4282, %v4263, %v3404
      %v4305 = vsel %vm4282, %v4264, %v3406
      %v4306 = vsel %vm4282, %v4265, %v3408
      %v4307 = vsel %vm4282, %v4266, %v3410
      %v4308 = vsel %vm4282, %v4267, %v3412
      %v4309 = vsel %vm4282, %v4268, %v3414
      %v4310 = vsel %vm4282, %v4269, %v3416
      %v4311 = vsel %vm4282, %v4270, %v3418
      %v4312 = vsel %vm4282, %v4271, %v3420
      %v4313 = vsel %vm4282, %v4272, %v3422
      %v4314 = vsel %vm4282, %v4273, %v3424
      %v4315 = vsel %vm4282, %v4274, %v3426
      %v4316 = vsel %vm4282, %v4275, %v3428
      %v4317 = vsel %vm4282, %v4276, %v3430
      %v4318 = vsel %vm4282, %v4277, %v3432
      %v4319 = vsel %vm4282, %v4278, %v3434
      %v4320 = vsel %vm4282, %v4279, %v3436
      %v4321 = vsel %vm4282, %v4280, %v3438
      %v4322 = vsel %vm4282, %v4281, %v3440
      %vm4323 = vcmask 97280
      %v4324 = vsel %vm4323, %v4283, %v3483
      %v4325 = vsel %vm4323, %v4284, %v3485
      %v4326 = vsel %vm4323, %v4285, %v3487
      %v4327 = vsel %vm4323, %v4286, %v3489
      %v4328 = vsel %vm4323, %v4287, %v3491
      %v4329 = vsel %vm4323, %v4288, %v3493
      %v4330 = vsel %vm4323, %v4289, %v3495
      %v4331 = vsel %vm4323, %v4290, %v3497
      %v4332 = vsel %vm4323, %v4291, %v3499
      %v4333 = vsel %vm4323, %v4292, %v3501
      %v4334 = vsel %vm4323, %v4293, %v3503
      %v4335 = vsel %vm4323, %v4294, %v3505
      %v4336 = vsel %vm4323, %v4295, %v3507
      %v4337 = vsel %vm4323, %v4296, %v3509
      %v4338 = vsel %vm4323, %v4297, %v3511
      %v4339 = vsel %vm4323, %v4298, %v3513
      %v4340 = vsel %vm4323, %v4299, %v3515
      %v4341 = vsel %vm4323, %v4300, %v3517
      %v4342 = vsel %vm4323, %v4301, %v3519
      %v4343 = vsel %vm4323, %v4302, %v3521
      %v4344 = vsel %vm4323, %v4303, %v3523
      %v4345 = vsel %vm4323, %v4304, %v3525
      %v4346 = vsel %vm4323, %v4305, %v3527
      %v4347 = vsel %vm4323, %v4306, %v3529
      %v4348 = vsel %vm4323, %v4307, %v3531
      %v4349 = vsel %vm4323, %v4308, %v3533
      %v4350 = vsel %vm4323, %v4309, %v3535
      %v4351 = vsel %vm4323, %v4310, %v3537
      %v4352 = vsel %vm4323, %v4311, %v3539
      %v4353 = vsel %vm4323, %v4312, %v3541
      %v4354 = vsel %vm4323, %v4313, %v3543
      %v4355 = vsel %vm4323, %v4314, %v3545
      %v4356 = vsel %vm4323, %v4315, %v3547
      %v4357 = vsel %vm4323, %v4316, %v3549
      %v4358 = vsel %vm4323, %v4317, %v3551
      %v4359 = vsel %vm4323, %v4318, %v3553
      %v4360 = vsel %vm4323, %v4319, %v3555
      %v4361 = vsel %vm4323, %v4320, %v3557
      %v4362 = vsel %vm4323, %v4321, %v3559
      %v4363 = vsel %vm4323, %v4322, %v3561
      %vm4364 = vcmask 130048
      %v4365 = vsel %vm4364, %v4324, %v3613
      %v4366 = vsel %vm4364, %v4325, %v3615
      %v4367 = vsel %vm4364, %v4326, %v3617
      %v4368 = vsel %vm4364, %v4327, %v3619
      %v4369 = vsel %vm4364, %v4328, %v3621
      %v4370 = vsel %vm4364, %v4329, %v3623
      %v4371 = vsel %vm4364, %v4330, %v3625
      %v4372 = vsel %vm4364, %v4331, %v3627
      %v4373 = vsel %vm4364, %v4332, %v3629
      %v4374 = vsel %vm4364, %v4333, %v3631
      %v4375 = vsel %vm4364, %v4334, %v3633
      %v4376 = vsel %vm4364, %v4335, %v3635
      %v4377 = vsel %vm4364, %v4336, %v3637
      %v4378 = vsel %vm4364, %v4337, %v3639
      %v4379 = vsel %vm4364, %v4338, %v3641
      %v4380 = vsel %vm4364, %v4339, %v3643
      %v4381 = vsel %vm4364, %v4340, %v3645
      %v4382 = vsel %vm4364, %v4341, %v3647
      %v4383 = vsel %vm4364, %v4342, %v3649
      %v4384 = vsel %vm4364, %v4343, %v3651
      %v4385 = vsel %vm4364, %v4344, %v3653
      %v4386 = vsel %vm4364, %v4345, %v3655
      %v4387 = vsel %vm4364, %v4346, %v3657
      %v4388 = vsel %vm4364, %v4347, %v3659
      %v4389 = vsel %vm4364, %v4348, %v3661
      %v4390 = vsel %vm4364, %v4349, %v3663
      %v4391 = vsel %vm4364, %v4350, %v3665
      %v4392 = vsel %vm4364, %v4351, %v3667
      %v4393 = vsel %vm4364, %v4352, %v3669
      %v4394 = vsel %vm4364, %v4353, %v3671
      %v4395 = vsel %vm4364, %v4354, %v3673
      %v4396 = vsel %vm4364, %v4355, %v3675
      %v4397 = vsel %vm4364, %v4356, %v3677
      %v4398 = vsel %vm4364, %v4357, %v3679
      %v4399 = vsel %vm4364, %v4358, %v3681
      %v4400 = vsel %vm4364, %v4359, %v3683
      %v4401 = vsel %vm4364, %v4360, %v3685
      %v4402 = vsel %vm4364, %v4361, %v3687
      %v4403 = vsel %vm4364, %v4362, %v3689
      %v4404 = vsel %vm4364, %v4363, %v3691
      %vm4405 = vcmask 162816
      %v4406 = vsel %vm4405, %v4365, %v3742
      %v4407 = vsel %vm4405, %v4366, %v3744
      %v4408 = vsel %vm4405, %v4367, %v3746
      %v4409 = vsel %vm4405, %v4368, %v3748
      %v4410 = vsel %vm4405, %v4369, %v3750
      %v4411 = vsel %vm4405, %v4370, %v3752
      %v4412 = vsel %vm4405, %v4371, %v3754
      %v4413 = vsel %vm4405, %v4372, %v3756
      %v4414 = vsel %vm4405, %v4373, %v3758
      %v4415 = vsel %vm4405, %v4374, %v3760
      %v4416 = vsel %vm4405, %v4375, %v3762
      %v4417 = vsel %vm4405, %v4376, %v3764
      %v4418 = vsel %vm4405, %v4377, %v3766
      %v4419 = vsel %vm4405, %v4378, %v3768
      %v4420 = vsel %vm4405, %v4379, %v3770
      %v4421 = vsel %vm4405, %v4380, %v3772
      %v4422 = vsel %vm4405, %v4381, %v3774
      %v4423 = vsel %vm4405, %v4382, %v3776
      %v4424 = vsel %vm4405, %v4383, %v3778
      %v4425 = vsel %vm4405, %v4384, %v3780
      %v4426 = vsel %vm4405, %v4385, %v3782
      %v4427 = vsel %vm4405, %v4386, %v3784
      %v4428 = vsel %vm4405, %v4387, %v3786
      %v4429 = vsel %vm4405, %v4388, %v3788
      %v4430 = vsel %vm4405, %v4389, %v3790
      %v4431 = vsel %vm4405, %v4390, %v3792
      %v4432 = vsel %vm4405, %v4391, %v3794
      %v4433 = vsel %vm4405, %v4392, %v3796
      %v4434 = vsel %vm4405, %v4393, %v3798
      %v4435 = vsel %vm4405, %v4394, %v3800
      %v4436 = vsel %vm4405, %v4395, %v3802
      %v4437 = vsel %vm4405, %v4396, %v3804
      %v4438 = vsel %vm4405, %v4397, %v3806
      %v4439 = vsel %vm4405, %v4398, %v3808
      %v4440 = vsel %vm4405, %v4399, %v3810
      %v4441 = vsel %vm4405, %v4400, %v3812
      %v4442 = vsel %vm4405, %v4401, %v3814
      %v4443 = vsel %vm4405, %v4402, %v3816
      %v4444 = vsel %vm4405, %v4403, %v3818
      %v4445 = vsel %vm4405, %v4404, %v3820
      %vm4446 = vcmask 195584
      %v4447 = vsel %vm4446, %v4406, %v3863
      %v4448 = vsel %vm4446, %v4407, %v3865
      %v4449 = vsel %vm4446, %v4408, %v3867
      %v4450 = vsel %vm4446, %v4409, %v3869
      %v4451 = vsel %vm4446, %v4410, %v3871
      %v4452 = vsel %vm4446, %v4411, %v3873
      %v4453 = vsel %vm4446, %v4412, %v3875
      %v4454 = vsel %vm4446, %v4413, %v3877
      %v4455 = vsel %vm4446, %v4414, %v3879
      %v4456 = vsel %vm4446, %v4415, %v3881
      %v4457 = vsel %vm4446, %v4416, %v3883
      %v4458 = vsel %vm4446, %v4417, %v3885
      %v4459 = vsel %vm4446, %v4418, %v3887
      %v4460 = vsel %vm4446, %v4419, %v3889
      %v4461 = vsel %vm4446, %v4420, %v3891
      %v4462 = vsel %vm4446, %v4421, %v3893
      %v4463 = vsel %vm4446, %v4422, %v3895
      %v4464 = vsel %vm4446, %v4423, %v3897
      %v4465 = vsel %vm4446, %v4424, %v3899
      %v4466 = vsel %vm4446, %v4425, %v3901
      %v4467 = vsel %vm4446, %v4426, %v3903
      %v4468 = vsel %vm4446, %v4427, %v3905
      %v4469 = vsel %vm4446, %v4428, %v3907
      %v4470 = vsel %vm4446, %v4429, %v3909
      %v4471 = vsel %vm4446, %v4430, %v3911
      %v4472 = vsel %vm4446, %v4431, %v3913
      %v4473 = vsel %vm4446, %v4432, %v3915
      %v4474 = vsel %vm4446, %v4433, %v3917
      %v4475 = vsel %vm4446, %v4434, %v3919
      %v4476 = vsel %vm4446, %v4435, %v3921
      %v4477 = vsel %vm4446, %v4436, %v3923
      %v4478 = vsel %vm4446, %v4437, %v3925
      %v4479 = vsel %vm4446, %v4438, %v3927
      %v4480 = vsel %vm4446, %v4439, %v3929
      %v4481 = vsel %vm4446, %v4440, %v3931
      %v4482 = vsel %vm4446, %v4441, %v3933
      %v4483 = vsel %vm4446, %v4442, %v3935
      %v4484 = vsel %vm4446, %v4443, %v3937
      %v4485 = vsel %vm4446, %v4444, %v3939
      %v4486 = vsel %vm4446, %v4445, %v3941
      %vm4487 = vcmask 228352
      %v4488 = vsel %vm4487, %v4447, %v3993
      %v4489 = vsel %vm4487, %v4448, %v3995
      %v4490 = vsel %vm4487, %v4449, %v3997
      %v4491 = vsel %vm4487, %v4450, %v3999
      %v4492 = vsel %vm4487, %v4451, %v4001
      %v4493 = vsel %vm4487, %v4452, %v4003
      %v4494 = vsel %vm4487, %v4453, %v4005
      %v4495 = vsel %vm4487, %v4454, %v4007
      %v4496 = vsel %vm4487, %v4455, %v4009
      %v4497 = vsel %vm4487, %v4456, %v4011
      %v4498 = vsel %vm4487, %v4457, %v4013
      %v4499 = vsel %vm4487, %v4458, %v4015
      %v4500 = vsel %vm4487, %v4459, %v4017
      %v4501 = vsel %vm4487, %v4460, %v4019
      %v4502 = vsel %vm4487, %v4461, %v4021
      %v4503 = vsel %vm4487, %v4462, %v4023
      %v4504 = vsel %vm4487, %v4463, %v4025
      %v4505 = vsel %vm4487, %v4464, %v4027
      %v4506 = vsel %vm4487, %v4465, %v4029
      %v4507 = vsel %vm4487, %v4466, %v4031
      %v4508 = vsel %vm4487, %v4467, %v4033
      %v4509 = vsel %vm4487, %v4468, %v4035
      %v4510 = vsel %vm4487, %v4469, %v4037
      %v4511 = vsel %vm4487, %v4470, %v4039
      %v4512 = vsel %vm4487, %v4471, %v4041
      %v4513 = vsel %vm4487, %v4472, %v4043
      %v4514 = vsel %vm4487, %v4473, %v4045
      %v4515 = vsel %vm4487, %v4474, %v4047
      %v4516 = vsel %vm4487, %v4475, %v4049
      %v4517 = vsel %vm4487, %v4476, %v4051
      %v4518 = vsel %vm4487, %v4477, %v4053
      %v4519 = vsel %vm4487, %v4478, %v4055
      %v4520 = vsel %vm4487, %v4479, %v4057
      %v4521 = vsel %vm4487, %v4480, %v4059
      %v4522 = vsel %vm4487, %v4481, %v4061
      %v4523 = vsel %vm4487, %v4482, %v4063
      %v4524 = vsel %vm4487, %v4483, %v4065
      %v4525 = vsel %vm4487, %v4484, %v4067
      %v4526 = vsel %vm4487, %v4485, %v4069
      %v4527 = vsel %vm4487, %v4486, %v4071
      %vm4528 = vcmask 261120
      %v4529 = vsel %vm4528, %v4488, %v4122
      %v4530 = vsel %vm4528, %v4489, %v4124
      %v4531 = vsel %vm4528, %v4490, %v4126
      %v4532 = vsel %vm4528, %v4491, %v4128
      %v4533 = vsel %vm4528, %v4492, %v4130
      %v4534 = vsel %vm4528, %v4493, %v4132
      %v4535 = vsel %vm4528, %v4494, %v4134
      %v4536 = vsel %vm4528, %v4495, %v4136
      %v4537 = vsel %vm4528, %v4496, %v4138
      %v4538 = vsel %vm4528, %v4497, %v4140
      %v4539 = vsel %vm4528, %v4498, %v4142
      %v4540 = vsel %vm4528, %v4499, %v4144
      %v4541 = vsel %vm4528, %v4500, %v4146
      %v4542 = vsel %vm4528, %v4501, %v4148
      %v4543 = vsel %vm4528, %v4502, %v4150
      %v4544 = vsel %vm4528, %v4503, %v4152
      %v4545 = vsel %vm4528, %v4504, %v4154
      %v4546 = vsel %vm4528, %v4505, %v4156
      %v4547 = vsel %vm4528, %v4506, %v4158
      %v4548 = vsel %vm4528, %v4507, %v4160
      %v4549 = vsel %vm4528, %v4508, %v4162
      %v4550 = vsel %vm4528, %v4509, %v4164
      %v4551 = vsel %vm4528, %v4510, %v4166
      %v4552 = vsel %vm4528, %v4511, %v4168
      %v4553 = vsel %vm4528, %v4512, %v4170
      %v4554 = vsel %vm4528, %v4513, %v4172
      %v4555 = vsel %vm4528, %v4514, %v4174
      %v4556 = vsel %vm4528, %v4515, %v4176
      %v4557 = vsel %vm4528, %v4516, %v4178
      %v4558 = vsel %vm4528, %v4517, %v4180
      %v4559 = vsel %vm4528, %v4518, %v4182
      %v4560 = vsel %vm4528, %v4519, %v4184
      %v4561 = vsel %vm4528, %v4520, %v4186
      %v4562 = vsel %vm4528, %v4521, %v4188
      %v4563 = vsel %vm4528, %v4522, %v4190
      %v4564 = vsel %vm4528, %v4523, %v4192
      %v4565 = vsel %vm4528, %v4524, %v4194
      %v4566 = vsel %vm4528, %v4525, %v4196
      %v4567 = vsel %vm4528, %v4526, %v4198
      %v4568 = vsel %vm4528, %v4527, %v4200
      %v4570 = vperm.slane %v3039, 0
      %vm4572 = vcmask 293888
      %v4574 = vsel %vm4572, %v4529, 0
      %v4577 = vsel %vm4572, %v4530, 0
      %v4580 = vsel %vm4572, %v4531, 0
      %v4583 = vsel %vm4572, %v4532, 0
      %v4586 = vsel %vm4572, %v4533, 0
      %v4589 = vsel %vm4572, %v4534, 0
      %v4592 = vsel %vm4572, %v4535, 0
      %v4595 = vsel %vm4572, %v4536, 0
      %v4598 = vsel %vm4572, %v4537, 0
      %v4601 = vsel %vm4572, %v4538, 0
      %v4604 = vsel %vm4572, %v4539, 0
      %v4607 = vsel %vm4572, %v4540, 0
      %v4610 = vsel %vm4572, %v4541, 0
      %v4613 = vsel %vm4572, %v4542, 0
      %v4616 = vsel %vm4572, %v4543, 0
      %v4619 = vsel %vm4572, %v4544, 0
      %v4622 = vsel %vm4572, %v4545, 0
      %v4625 = vsel %vm4572, %v4546, 0
      %v4628 = vsel %vm4572, %v4547, 0
      %v4631 = vsel %vm4572, %v4548, 0
      %v4634 = vsel %vm4572, %v4549, 0
      %v4637 = vsel %vm4572, %v4550, 0
      %v4640 = vsel %vm4572, %v4551, 0
      %v4643 = vsel %vm4572, %v4552, 0
      %v4646 = vsel %vm4572, %v4553, 0
      %v4649 = vsel %vm4572, %v4554, 0
      %v4652 = vsel %vm4572, %v4555, 0
      %v4655 = vsel %vm4572, %v4556, 0
      %v4658 = vsel %vm4572, %v4557, 0
      %v4661 = vsel %vm4572, %v4558, 0
      %v4664 = vsel %vm4572, %v4559, 0
      %v4667 = vsel %vm4572, %v4560, 0
      %v4670 = vsel %vm4572, %v4561, 0
      %v4673 = vsel %vm4572, %v4562, 0
      %v4676 = vsel %vm4572, %v4563, 0
      %v4679 = vsel %vm4572, %v4564, 0
      %v4682 = vsel %vm4572, %v4565, 0
      %v4685 = vsel %vm4572, %v4566, 0
      %v4688 = vsel %vm4572, %v4567, 0
      %v4691 = vsel %vm4572, %v4568, 0
      %vm4693 = vcmask 1043456
      %v4695 = vsel %vm4693, %v3038, 0
      %4697 = vmatpush.msra.mxu0 0.0
      %4698 = vmatpush.msra.mxu0 0.0
      %4699 = vmatpush.msra.mxu0 0.0
      %4700 = vmatpush.msra.mxu0 0.0
      %4701 = vmatpush.msra.mxu0 0.0
      %4702 = vmatpush.msra.mxu0 0.0
      %4703 = vmatpush.msra.mxu0 0.0
      %4704 = vmatpush.msra.mxu0 0.0
      %4705 = vmatpush.msra.mxu0 0.0
      %4706 = vmatpush.msra.mxu0 0.0
      %4707 = vmatpush.msra.mxu0 0.0
      %4708 = vmatpush.msra.mxu0 %v4695
      %4709 = vmatpush.msra.mxu0 %v3037
      %4710 = vmatpush.msra.mxu0 %v3036
      %4711 = vmatpush.msra.mxu0 %v3035
      %4712 = vmatpush.msra.mxu0 %v3034
      %4713 = vmatmul.f32.gmra.mxu0 %v4574
      %v4714 = vpop.f32.mrf.mxu0
      %v4715 = vadd.f32 %v4570, %v4714
      %4716 = vmatmul.f32.gmra.mxu0 %v4577
      %v4717 = vpop.f32.mrf.mxu0
      %v4718 = vadd.f32 %v4570, %v4717
      %4719 = vmatmul.f32.gmra.mxu0 %v4580
      %v4720 = vpop.f32.mrf.mxu0
      %v4721 = vadd.f32 %v4570, %v4720
      %4722 = vmatmul.f32.gmra.mxu0 %v4583
      %v4723 = vpop.f32.mrf.mxu0
      %v4724 = vadd.f32 %v4570, %v4723
      %4725 = vmatmul.f32.gmra.mxu0 %v4586
      %v4726 = vpop.f32.mrf.mxu0
      %v4727 = vadd.f32 %v4570, %v4726
      %4728 = vmatmul.f32.gmra.mxu0 %v4589
      %v4729 = vpop.f32.mrf.mxu0
      %v4730 = vadd.f32 %v4570, %v4729
      %4731 = vmatmul.f32.gmra.mxu0 %v4592
      %v4732 = vpop.f32.mrf.mxu0
      %v4733 = vadd.f32 %v4570, %v4732
      %4734 = vmatmul.f32.gmra.mxu0 %v4595
      %v4735 = vpop.f32.mrf.mxu0
      %v4736 = vadd.f32 %v4570, %v4735
      %4737 = vmatmul.f32.gmra.mxu0 %v4598
      %v4738 = vpop.f32.mrf.mxu0
      %v4739 = vadd.f32 %v4570, %v4738
      %4740 = vmatmul.f32.gmra.mxu0 %v4601
      %v4741 = vpop.f32.mrf.mxu0
      %v4742 = vadd.f32 %v4570, %v4741
      %4743 = vmatmul.f32.gmra.mxu0 %v4604
      %v4744 = vpop.f32.mrf.mxu0
      %v4745 = vadd.f32 %v4570, %v4744
      %4746 = vmatmul.f32.gmra.mxu0 %v4607
      %v4747 = vpop.f32.mrf.mxu0
      %v4748 = vadd.f32 %v4570, %v4747
      %4749 = vmatmul.f32.gmra.mxu0 %v4610
      %v4750 = vpop.f32.mrf.mxu0
      %v4751 = vadd.f32 %v4570, %v4750
      %4752 = vmatmul.f32.gmra.mxu0 %v4613
      %v4753 = vpop.f32.mrf.mxu0
      %v4754 = vadd.f32 %v4570, %v4753
      %4755 = vmatmul.f32.gmra.mxu0 %v4616
      %v4756 = vpop.f32.mrf.mxu0
      %v4757 = vadd.f32 %v4570, %v4756
      %4758 = vmatmul.f32.gmra.mxu0 %v4619
      %v4759 = vpop.f32.mrf.mxu0
      %v4760 = vadd.f32 %v4570, %v4759
      %4761 = vmatmul.f32.gmra.mxu0 %v4622
      %v4762 = vpop.f32.mrf.mxu0
      %v4763 = vadd.f32 %v4570, %v4762
      %4764 = vmatmul.f32.gmra.mxu0 %v4625
      %v4765 = vpop.f32.mrf.mxu0
      %v4766 = vadd.f32 %v4570, %v4765
      %4767 = vmatmul.f32.gmra.mxu0 %v4628
      %v4768 = vpop.f32.mrf.mxu0
      %v4769 = vadd.f32 %v4570, %v4768
      %4770 = vmatmul.f32.gmra.mxu0 %v4631
      %v4771 = vpop.f32.mrf.mxu0
      %v4772 = vadd.f32 %v4570, %v4771
      %4773 = vmatmul.f32.gmra.mxu0 %v4634
      %v4774 = vpop.f32.mrf.mxu0
      %v4775 = vadd.f32 %v4570, %v4774
      %4776 = vmatmul.f32.gmra.mxu0 %v4637
      %v4777 = vpop.f32.mrf.mxu0
      %v4778 = vadd.f32 %v4570, %v4777
      %4779 = vmatmul.f32.gmra.mxu0 %v4640
      %v4780 = vpop.f32.mrf.mxu0
      %v4781 = vadd.f32 %v4570, %v4780
      %4782 = vmatmul.f32.gmra.mxu0 %v4643
      %v4783 = vpop.f32.mrf.mxu0
      %v4784 = vadd.f32 %v4570, %v4783
      %4785 = vmatmul.f32.gmra.mxu0 %v4646
      %v4786 = vpop.f32.mrf.mxu0
      %v4787 = vadd.f32 %v4570, %v4786
      %4788 = vmatmul.f32.gmra.mxu0 %v4649
      %v4789 = vpop.f32.mrf.mxu0
      %v4790 = vadd.f32 %v4570, %v4789
      %4791 = vmatmul.f32.gmra.mxu0 %v4652
      %v4792 = vpop.f32.mrf.mxu0
      %v4793 = vadd.f32 %v4570, %v4792
      %4794 = vmatmul.f32.gmra.mxu0 %v4655
      %v4795 = vpop.f32.mrf.mxu0
      %v4796 = vadd.f32 %v4570, %v4795
      %4797 = vmatmul.f32.gmra.mxu0 %v4658
      %v4798 = vpop.f32.mrf.mxu0
      %v4799 = vadd.f32 %v4570, %v4798
      %4800 = vmatmul.f32.gmra.mxu0 %v4661
      %v4801 = vpop.f32.mrf.mxu0
      %v4802 = vadd.f32 %v4570, %v4801
      %4803 = vmatmul.f32.gmra.mxu0 %v4664
      %v4804 = vpop.f32.mrf.mxu0
      %v4805 = vadd.f32 %v4570, %v4804
      %4806 = vmatmul.f32.gmra.mxu0 %v4667
      %v4807 = vpop.f32.mrf.mxu0
      %v4808 = vadd.f32 %v4570, %v4807
      %4809 = vmatmul.f32.gmra.mxu0 %v4670
      %v4810 = vpop.f32.mrf.mxu0
      %v4811 = vadd.f32 %v4570, %v4810
      %4812 = vmatmul.f32.gmra.mxu0 %v4673
      %v4813 = vpop.f32.mrf.mxu0
      %v4814 = vadd.f32 %v4570, %v4813
      %4815 = vmatmul.f32.gmra.mxu0 %v4676
      %v4816 = vpop.f32.mrf.mxu0
      %v4817 = vadd.f32 %v4570, %v4816
      %4818 = vmatmul.f32.gmra.mxu0 %v4679
      %v4819 = vpop.f32.mrf.mxu0
      %v4820 = vadd.f32 %v4570, %v4819
      %4821 = vmatmul.f32.gmra.mxu0 %v4682
      %v4822 = vpop.f32.mrf.mxu0
      %v4823 = vadd.f32 %v4570, %v4822
      %4824 = vmatmul.f32.gmra.mxu0 %v4685
      %v4825 = vpop.f32.mrf.mxu0
      %v4826 = vadd.f32 %v4570, %v4825
      %4827 = vmatmul.f32.gmra.mxu0 %v4688
      %v4828 = vpop.f32.mrf.mxu0
      %v4829 = vadd.f32 %v4570, %v4828
      %4830 = vmatmul.f32.gmra.mxu0 %v4691
      %v4831 = vpop.f32.mrf.mxu0
      %v4832 = vadd.f32 %v4570, %v4831
      %4833 = vdwg.mxu0
      %v4834 = vmax.f32 %v4715, 0.0
      %v4835 = vmax.f32 %v4718, 0.0
      %v4836 = vmax.f32 %v4721, 0.0
      %v4837 = vmax.f32 %v4724, 0.0
      %v4838 = vmax.f32 %v4727, 0.0
      %v4839 = vmax.f32 %v4730, 0.0
      %v4840 = vmax.f32 %v4733, 0.0
      %v4841 = vmax.f32 %v4736, 0.0
      %v4842 = vmax.f32 %v4739, 0.0
      %v4843 = vmax.f32 %v4742, 0.0
      %v4844 = vmax.f32 %v4745, 0.0
      %v4845 = vmax.f32 %v4748, 0.0
      %v4846 = vmax.f32 %v4751, 0.0
      %v4847 = vmax.f32 %v4754, 0.0
      %v4848 = vmax.f32 %v4757, 0.0
      %v4849 = vmax.f32 %v4760, 0.0
      %v4850 = vmax.f32 %v4763, 0.0
      %v4851 = vmax.f32 %v4766, 0.0
      %v4852 = vmax.f32 %v4769, 0.0
      %v4853 = vmax.f32 %v4772, 0.0
      %v4854 = vmax.f32 %v4775, 0.0
      %v4855 = vmax.f32 %v4778, 0.0
      %v4856 = vmax.f32 %v4781, 0.0
      %v4857 = vmax.f32 %v4784, 0.0
      %v4858 = vmax.f32 %v4787, 0.0
      %v4859 = vmax.f32 %v4790, 0.0
      %v4860 = vmax.f32 %v4793, 0.0
      %v4861 = vmax.f32 %v4796, 0.0
      %v4862 = vmax.f32 %v4799, 0.0
      %v4863 = vmax.f32 %v4802, 0.0
      %v4864 = vmax.f32 %v4805, 0.0
      %v4865 = vmax.f32 %v4808, 0.0
      %v4866 = vmax.f32 %v4811, 0.0
      %v4867 = vmax.f32 %v4814, 0.0
      %v4868 = vmax.f32 %v4817, 0.0
      %v4869 = vmax.f32 %v4820, 0.0
      %v4870 = vmax.f32 %v4823, 0.0
      %v4871 = vmax.f32 %v4826, 0.0
      %v4872 = vmax.f32 %v4829, 0.0
      %v4873 = vmax.f32 %v4832, 0.0
      %v4874 = vmul.f32 %v4834, %v820
      %v4875 = vmul.f32 %v4835, %v820
      %v4876 = vmul.f32 %v4836, %v820
      %v4877 = vmul.f32 %v4837, %v820
      %v4878 = vmul.f32 %v4870, %v824
      %v4879 = vmul.f32 %v4871, %v824
      %v4880 = vmul.f32 %v4872, %v824
      %v4881 = vmul.f32 %v4873, %v824
      %v4922 = vrot.slane %v4874, 7
      %v4923 = vrot.slane %v4875, 7
      %v4924 = vsel %vm657, %v4922, %v4923
      %v4925 = vrot.slane %v4876, 7
      %v4926 = vsel %vm657, %v4923, %v4925
      %v4927 = vrot.slane %v4877, 7
      %v4928 = vsel %vm657, %v4925, %v4927
      %v4929 = vrot.slane %v4838, 7
      %v4930 = vrot.slane %v4839, 7
      %v4931 = vsel %vm657, %v4929, %v4930
      %v4932 = vrot.slane %v4840, 7
      %v4933 = vsel %vm657, %v4930, %v4932
      %v4934 = vrot.slane %v4841, 7
      %v4935 = vsel %vm657, %v4932, %v4934
      %v4936 = vrot.slane %v4842, 7
      %v4937 = vrot.slane %v4843, 7
      %v4938 = vsel %vm657, %v4936, %v4937
      %v4939 = vrot.slane %v4844, 7
      %v4940 = vsel %vm657, %v4937, %v4939
      %v4941 = vrot.slane %v4845, 7
      %v4942 = vsel %vm657, %v4939, %v4941
      %v4943 = vrot.slane %v4846, 7
      %v4944 = vrot.slane %v4847, 7
      %v4945 = vsel %vm657, %v4943, %v4944
      %v4946 = vrot.slane %v4848, 7
      %v4947 = vsel %vm657, %v4944, %v4946
      %v4948 = vrot.slane %v4849, 7
      %v4949 = vsel %vm657, %v4946, %v4948
      %v4950 = vrot.slane %v4850, 7
      %v4951 = vrot.slane %v4851, 7
      %v4952 = vsel %vm657, %v4950, %v4951
      %v4953 = vrot.slane %v4852, 7
      %v4954 = vsel %vm657, %v4951, %v4953
      %v4955 = vrot.slane %v4853, 7
      %v4956 = vsel %vm657, %v4953, %v4955
      %v4957 = vrot.slane %v4854, 7
      %v4958 = vrot.slane %v4855, 7
      %v4959 = vsel %vm657, %v4957, %v4958
      %v4960 = vrot.slane %v4856, 7
      %v4961 = vsel %vm657, %v4958, %v4960
      %v4962 = vrot.slane %v4857, 7
      %v4963 = vsel %vm657, %v4960, %v4962
      %v4964 = vrot.slane %v4858, 7
      %v4965 = vrot.slane %v4859, 7
      %v4966 = vsel %vm657, %v4964, %v4965
      %v4967 = vrot.slane %v4860, 7
      %v4968 = vsel %vm657, %v4965, %v4967
      %v4969 = vrot.slane %v4861, 7
      %v4970 = vsel %vm657, %v4967, %v4969
      %v4971 = vrot.slane %v4862, 7
      %v4972 = vrot.slane %v4863, 7
      %v4973 = vsel %vm657, %v4971, %v4972
      %v4974 = vrot.slane %v4864, 7
      %v4975 = vsel %vm657, %v4972, %v4974
      %v4976 = vrot.slane %v4865, 7
      %v4977 = vsel %vm657, %v4974, %v4976
      %v4978 = vrot.slane %v4866, 7
      %v4979 = vrot.slane %v4867, 7
      %v4980 = vsel %vm657, %v4978, %v4979
      %v4981 = vrot.slane %v4868, 7
      %v4982 = vsel %vm657, %v4979, %v4981
      %v4983 = vrot.slane %v4869, 7
      %v4984 = vsel %vm657, %v4981, %v4983
      %v4985 = vrot.slane %v4878, 7
      %v4986 = vrot.slane %v4879, 7
      %v4987 = vsel %vm657, %v4985, %v4986
      %v4988 = vrot.slane %v4880, 7
      %v4989 = vsel %vm657, %v4986, %v4988
      %v4990 = vrot.slane %v4881, 7
      %v4991 = vsel %vm657, %v4988, %v4990
      %v5036 = vsel %vm657, 0.0, %v4922
      %v5037 = vsel %vm657, 0.0, %v4929
      %v5038 = vsel %vm657, 0.0, %v4936
      %v5039 = vsel %vm657, 0.0, %v4943
      %v5040 = vsel %vm657, 0.0, %v4950
      %v5041 = vsel %vm657, 0.0, %v4957
      %v5042 = vsel %vm657, 0.0, %v4964
      %v5043 = vsel %vm657, 0.0, %v4971
      %v5044 = vsel %vm657, 0.0, %v4978
      %v5045 = vsel %vm657, 0.0, %v4985
      %v5046 = vsel %vm657, %v4927, 0.0
      %v5047 = vsel %vm657, %v4934, 0.0
      %v5048 = vsel %vm657, %v4941, 0.0
      %v5049 = vsel %vm657, %v4948, 0.0
      %v5050 = vsel %vm657, %v4955, 0.0
      %v5051 = vsel %vm657, %v4962, 0.0
      %v5052 = vsel %vm657, %v4969, 0.0
      %v5053 = vsel %vm657, %v4976, 0.0
      %v5054 = vsel %vm657, %v4983, 0.0
      %v5055 = vsel %vm657, %v4990, 0.0
      %v5056 = vld [vmem:[%s7] sm:$0xff]
      %v5057 = vld [vmem:[%s7 + $0x8] sm:$0xff]
      %v5058 = vld [vmem:[%s7 + $0x10] sm:$0x3]
      %v5059 = vld [vmem:[%s8] sm:$0x1]
      %v5076 = vrot.slane %v5036, 1
      %v5077 = vrot.slane %v4924, 1
      %v5078 = vsel %vm882, %v5076, %v5077
      %v5079 = vrot.slane %v4926, 1
      %v5080 = vsel %vm882, %v5077, %v5079
      %v5081 = vrot.slane %v4928, 1
      %v5082 = vsel %vm882, %v5079, %v5081
      %v5083 = vrot.slane %v5046, 1
      %v5084 = vsel %vm882, %v5081, %v5083
      %v5085 = vrot.slane %v5037, 1
      %v5086 = vrot.slane %v4931, 1
      %v5087 = vsel %vm882, %v5085, %v5086
      %v5088 = vrot.slane %v4933, 1
      %v5089 = vsel %vm882, %v5086, %v5088
      %v5090 = vrot.slane %v4935, 1
      %v5091 = vsel %vm882, %v5088, %v5090
      %v5092 = vrot.slane %v5047, 1
      %v5093 = vsel %vm882, %v5090, %v5092
      %v5094 = vrot.slane %v5038, 1
      %v5095 = vrot.slane %v4938, 1
      %v5096 = vsel %vm882, %v5094, %v5095
      %v5097 = vrot.slane %v4940, 1
      %v5098 = vsel %vm882, %v5095, %v5097
      %v5099 = vrot.slane %v4942, 1
      %v5100 = vsel %vm882, %v5097, %v5099
      %v5101 = vrot.slane %v5048, 1
      %v5102 = vsel %vm882, %v5099, %v5101
      %v5103 = vrot.slane %v5039, 1
      %v5104 = vrot.slane %v4945, 1
      %v5105 = vsel %vm882, %v5103, %v5104
      %v5106 = vrot.slane %v4947, 1
      %v5107 = vsel %vm882, %v5104, %v5106
      %v5108 = vrot.slane %v4949, 1
      %v5109 = vsel %vm882, %v5106, %v5108
      %v5110 = vrot.slane %v5049, 1
      %v5111 = vsel %vm882, %v5108, %v5110
      %v5112 = vrot.slane %v5040, 1
      %v5113 = vrot.slane %v4952, 1
      %v5114 = vsel %vm882, %v5112, %v5113
      %v5115 = vrot.slane %v4954, 1
      %v5116 = vsel %vm882, %v5113, %v5115
      %v5117 = vrot.slane %v4956, 1
      %v5118 = vsel %vm882, %v5115, %v5117
      %v5119 = vrot.slane %v5050, 1
      %v5120 = vsel %vm882, %v5117, %v5119
      %v5121 = vrot.slane %v5041, 1
      %v5122 = vrot.slane %v4959, 1
      %v5123 = vsel %vm882, %v5121, %v5122
      %v5124 = vrot.slane %v4961, 1
      %v5125 = vsel %vm882, %v5122, %v5124
      %v5126 = vrot.slane %v4963, 1
      %v5127 = vsel %vm882, %v5124, %v5126
      %v5128 = vrot.slane %v5051, 1
      %v5129 = vsel %vm882, %v5126, %v5128
      %v5130 = vrot.slane %v5042, 1
      %v5131 = vrot.slane %v4966, 1
      %v5132 = vsel %vm882, %v5130, %v5131
      %v5133 = vrot.slane %v4968, 1
      %v5134 = vsel %vm882, %v5131, %v5133
      %v5135 = vrot.slane %v4970, 1
      %v5136 = vsel %vm882, %v5133, %v5135
      %v5137 = vrot.slane %v5052, 1
      %v5138 = vsel %vm882, %v5135, %v5137
      %v5139 = vrot.slane %v5043, 1
      %v5140 = vrot.slane %v4973, 1
      %v5141 = vsel %vm882, %v5139, %v5140
      %v5142 = vrot.slane %v4975, 1
      %v5143 = vsel %vm882, %v5140, %v5142
      %v5144 = vrot.slane %v4977, 1
      %v5145 = vsel %vm882, %v5142, %v5144
      %v5146 = vrot.slane %v5053, 1
      %v5147 = vsel %vm882, %v5144, %v5146
      %5148 = vrot.lane.b32.xlu0 %v5078, 2
      %v5149 = vpop.permute.xlu0 %5148
      %5150 = vrot.lane.b32.xlu0 %v5080, 2
      %v5151 = vpop.permute.xlu0 %5150
      %5152 = vrot.lane.b32.xlu0 %v5082, 2
      %v5153 = vpop.permute.xlu0 %5152
      %5154 = vrot.lane.b32.xlu0 %v5084, 2
      %v5155 = vpop.permute.xlu0 %5154
      %5156 = vrot.lane.b32.xlu0 %v5087, 2
      %v5157 = vpop.permute.xlu0 %5156
      %5158 = vrot.lane.b32.xlu0 %v5089, 2
      %v5159 = vpop.permute.xlu0 %5158
      %5160 = vrot.lane.b32.xlu0 %v5091, 2
      %v5161 = vpop.permute.xlu0 %5160
      %5162 = vrot.lane.b32.xlu0 %v5093, 2
      %v5163 = vpop.permute.xlu0 %5162
      %5164 = vrot.lane.b32.xlu0 %v5096, 2
      %v5165 = vpop.permute.xlu0 %5164
      %5166 = vrot.lane.b32.xlu0 %v5098, 2
      %v5167 = vpop.permute.xlu0 %5166
      %5168 = vrot.lane.b32.xlu0 %v5100, 2
      %v5169 = vpop.permute.xlu0 %5168
      %5170 = vrot.lane.b32.xlu0 %v5102, 2
      %v5171 = vpop.permute.xlu0 %5170
      %5172 = vrot.lane.b32.xlu0 %v5105, 2
      %v5173 = vpop.permute.xlu0 %5172
      %5174 = vrot.lane.b32.xlu0 %v5107, 2
      %v5175 = vpop.permute.xlu0 %5174
      %5176 = vrot.lane.b32.xlu0 %v5109, 2
      %v5177 = vpop.permute.xlu0 %5176
      %5178 = vrot.lane.b32.xlu0 %v5111, 2
      %v5179 = vpop.permute.xlu0 %5178
      %5180 = vrot.lane.b32.xlu0 %v5114, 2
      %v5181 = vpop.permute.xlu0 %5180
      %5182 = vrot.lane.b32.xlu0 %v5116, 2
      %v5183 = vpop.permute.xlu0 %5182
      %5184 = vrot.lane.b32.xlu0 %v5118, 2
      %v5185 = vpop.permute.xlu0 %5184
      %5186 = vrot.lane.b32.xlu0 %v5120, 2
      %v5187 = vpop.permute.xlu0 %5186
      %5188 = vrot.lane.b32.xlu0 %v5123, 2
      %v5189 = vpop.permute.xlu0 %5188
      %5190 = vrot.lane.b32.xlu0 %v5125, 2
      %v5191 = vpop.permute.xlu0 %5190
      %5192 = vrot.lane.b32.xlu0 %v5127, 2
      %v5193 = vpop.permute.xlu0 %5192
      %5194 = vrot.lane.b32.xlu0 %v5129, 2
      %v5195 = vpop.permute.xlu0 %5194
      %5196 = vrot.lane.b32.xlu0 %v5132, 2
      %v5197 = vpop.permute.xlu0 %5196
      %5198 = vrot.lane.b32.xlu0 %v5134, 2
      %v5199 = vpop.permute.xlu0 %5198
      %5200 = vrot.lane.b32.xlu0 %v5136, 2
      %v5201 = vpop.permute.xlu0 %5200
      %5202 = vrot.lane.b32.xlu0 %v5138, 2
      %v5203 = vpop.permute.xlu0 %5202
      %5204 = vrot.lane.b32.xlu0 %v5141, 2
      %v5205 = vpop.permute.xlu0 %5204
      %5206 = vrot.lane.b32.xlu0 %v5143, 2
      %v5207 = vpop.permute.xlu0 %5206
      %5208 = vrot.lane.b32.xlu0 %v5145, 2
      %v5209 = vpop.permute.xlu0 %5208
      %5210 = vrot.lane.b32.xlu0 %v5147, 2
      %v5211 = vpop.permute.xlu0 %5210
      %v5244 = vrot.slane %v5036, 2
      %v5245 = vrot.slane %v4924, 2
      %v5246 = vsel %vm3270, %v5244, %v5245
      %v5247 = vrot.slane %v4926, 2
      %v5248 = vsel %vm3270, %v5245, %v5247
      %v5249 = vrot.slane %v4928, 2
      %v5250 = vsel %vm3270, %v5247, %v5249
      %v5251 = vrot.slane %v5046, 2
      %v5252 = vsel %vm3270, %v5249, %v5251
      %v5253 = vrot.slane %v5037, 2
      %v5254 = vrot.slane %v4931, 2
      %v5255 = vsel %vm3270, %v5253, %v5254
      %v5256 = vrot.slane %v4933, 2
      %v5257 = vsel %vm3270, %v5254, %v5256
      %v5258 = vrot.slane %v4935, 2
      %v5259 = vsel %vm3270, %v5256, %v5258
      %v5260 = vrot.slane %v5047, 2
      %v5261 = vsel %vm3270, %v5258, %v5260
      %v5262 = vrot.slane %v5038, 2
      %v5263 = vrot.slane %v4938, 2
      %v5264 = vsel %vm3270, %v5262, %v5263
      %v5265 = vrot.slane %v4940, 2
      %v5266 = vsel %vm3270, %v5263, %v5265
      %v5267 = vrot.slane %v4942, 2
      %v5268 = vsel %vm3270, %v5265, %v5267
      %v5269 = vrot.slane %v5048, 2
      %v5270 = vsel %vm3270, %v5267, %v5269
      %v5271 = vrot.slane %v5039, 2
      %v5272 = vrot.slane %v4945, 2
      %v5273 = vsel %vm3270, %v5271, %v5272
      %v5274 = vrot.slane %v4947, 2
      %v5275 = vsel %vm3270, %v5272, %v5274
      %v5276 = vrot.slane %v4949, 2
      %v5277 = vsel %vm3270, %v5274, %v5276
      %v5278 = vrot.slane %v5049, 2
      %v5279 = vsel %vm3270, %v5276, %v5278
      %v5280 = vrot.slane %v5040, 2
      %v5281 = vrot.slane %v4952, 2
      %v5282 = vsel %vm3270, %v5280, %v5281
      %v5283 = vrot.slane %v4954, 2
      %v5284 = vsel %vm3270, %v5281, %v5283
      %v5285 = vrot.slane %v4956, 2
      %v5286 = vsel %vm3270, %v5283, %v5285
      %v5287 = vrot.slane %v5050, 2
      %v5288 = vsel %vm3270, %v5285, %v5287
      %v5289 = vrot.slane %v5041, 2
      %v5290 = vrot.slane %v4959, 2
      %v5291 = vsel %vm3270, %v5289, %v5290
      %v5292 = vrot.slane %v4961, 2
      %v5293 = vsel %vm3270, %v5290, %v5292
      %v5294 = vrot.slane %v4963, 2
      %v5295 = vsel %vm3270, %v5292, %v5294
      %v5296 = vrot.slane %v5051, 2
      %v5297 = vsel %vm3270, %v5294, %v5296
      %v5298 = vrot.slane %v5042, 2
      %v5299 = vrot.slane %v4966, 2
      %v5300 = vsel %vm3270, %v5298, %v5299
      %v5301 = vrot.slane %v4968, 2
      %v5302 = vsel %vm3270, %v5299, %v5301
      %v5303 = vrot.slane %v4970, 2
      %v5304 = vsel %vm3270, %v5301, %v5303
      %v5305 = vrot.slane %v5052, 2
      %v5306 = vsel %vm3270, %v5303, %v5305
      %v5307 = vrot.slane %v5043, 2
      %v5308 = vrot.slane %v4973, 2
      %v5309 = vsel %vm3270, %v5307, %v5308
      %v5310 = vrot.slane %v4975, 2
      %v5311 = vsel %vm3270, %v5308, %v5310
      %v5312 = vrot.slane %v4977, 2
      %v5313 = vsel %vm3270, %v5310, %v5312
      %v5314 = vrot.slane %v5053, 2
      %v5315 = vsel %vm3270, %v5312, %v5314
      %5316 = vrot.lane.b32.xlu0 %v5246, 4
      %v5317 = vpop.permute.xlu0 %5316
      %5318 = vrot.lane.b32.xlu0 %v5248, 4
      %v5319 = vpop.permute.xlu0 %5318
      %5320 = vrot.lane.b32.xlu0 %v5250, 4
      %v5321 = vpop.permute.xlu0 %5320
      %5322 = vrot.lane.b32.xlu0 %v5252, 4
      %v5323 = vpop.permute.xlu0 %5322
      %5324 = vrot.lane.b32.xlu0 %v5255, 4
      %v5325 = vpop.permute.xlu0 %5324
      %5326 = vrot.lane.b32.xlu0 %v5257, 4
      %v5327 = vpop.permute.xlu0 %5326
      %5328 = vrot.lane.b32.xlu0 %v5259, 4
      %v5329 = vpop.permute.xlu0 %5328
      %5330 = vrot.lane.b32.xlu0 %v5261, 4
      %v5331 = vpop.permute.xlu0 %5330
      %5332 = vrot.lane.b32.xlu0 %v5264, 4
      %v5333 = vpop.permute.xlu0 %5332
      %5334 = vrot.lane.b32.xlu0 %v5266, 4
      %v5335 = vpop.permute.xlu0 %5334
      %5336 = vrot.lane.b32.xlu0 %v5268, 4
      %v5337 = vpop.permute.xlu0 %5336
      %5338 = vrot.lane.b32.xlu0 %v5270, 4
      %v5339 = vpop.permute.xlu0 %5338
      %5340 = vrot.lane.b32.xlu0 %v5273, 4
      %v5341 = vpop.permute.xlu0 %5340
      %5342 = vrot.lane.b32.xlu0 %v5275, 4
      %v5343 = vpop.permute.xlu0 %5342
      %5344 = vrot.lane.b32.xlu0 %v5277, 4
      %v5345 = vpop.permute.xlu0 %5344
      %5346 = vrot.lane.b32.xlu0 %v5279, 4
      %v5347 = vpop.permute.xlu0 %5346
      %5348 = vrot.lane.b32.xlu0 %v5282, 4
      %v5349 = vpop.permute.xlu0 %5348
      %5350 = vrot.lane.b32.xlu0 %v5284, 4
      %v5351 = vpop.permute.xlu0 %5350
      %5352 = vrot.lane.b32.xlu0 %v5286, 4
      %v5353 = vpop.permute.xlu0 %5352
      %5354 = vrot.lane.b32.xlu0 %v5288, 4
      %v5355 = vpop.permute.xlu0 %5354
      %5356 = vrot.lane.b32.xlu0 %v5291, 4
      %v5357 = vpop.permute.xlu0 %5356
      %5358 = vrot.lane.b32.xlu0 %v5293, 4
      %v5359 = vpop.permute.xlu0 %5358
      %5360 = vrot.lane.b32.xlu0 %v5295, 4
      %v5361 = vpop.permute.xlu0 %5360
      %5362 = vrot.lane.b32.xlu0 %v5297, 4
      %v5363 = vpop.permute.xlu0 %5362
      %5364 = vrot.lane.b32.xlu0 %v5300, 4
      %v5365 = vpop.permute.xlu0 %5364
      %5366 = vrot.lane.b32.xlu0 %v5302, 4
      %v5367 = vpop.permute.xlu0 %5366
      %5368 = vrot.lane.b32.xlu0 %v5304, 4
      %v5369 = vpop.permute.xlu0 %5368
      %5370 = vrot.lane.b32.xlu0 %v5306, 4
      %v5371 = vpop.permute.xlu0 %5370
      %5372 = vrot.lane.b32.xlu0 %v5309, 4
      %v5373 = vpop.permute.xlu0 %5372
      %5374 = vrot.lane.b32.xlu0 %v5311, 4
      %v5375 = vpop.permute.xlu0 %5374
      %5376 = vrot.lane.b32.xlu0 %v5313, 4
      %v5377 = vpop.permute.xlu0 %5376
      %5378 = vrot.lane.b32.xlu0 %v5315, 4
      %v5379 = vpop.permute.xlu0 %5378
      %5413 = vrot.lane.b32.xlu0 %v5037, 6
      %v5414 = vpop.permute.xlu0 %5413
      %5415 = vrot.lane.b32.xlu0 %v4931, 6
      %v5416 = vpop.permute.xlu0 %5415
      %5417 = vrot.lane.b32.xlu0 %v4933, 6
      %v5418 = vpop.permute.xlu0 %5417
      %5419 = vrot.lane.b32.xlu0 %v4935, 6
      %v5420 = vpop.permute.xlu0 %5419
      %5421 = vrot.lane.b32.xlu0 %v5038, 6
      %v5422 = vpop.permute.xlu0 %5421
      %5423 = vrot.lane.b32.xlu0 %v4938, 6
      %v5424 = vpop.permute.xlu0 %5423
      %5425 = vrot.lane.b32.xlu0 %v4940, 6
      %v5426 = vpop.permute.xlu0 %5425
      %5427 = vrot.lane.b32.xlu0 %v4942, 6
      %v5428 = vpop.permute.xlu0 %5427
      %5429 = vrot.lane.b32.xlu0 %v5039, 6
      %v5430 = vpop.permute.xlu0 %5429
      %5431 = vrot.lane.b32.xlu0 %v4945, 6
      %v5432 = vpop.permute.xlu0 %5431
      %5433 = vrot.lane.b32.xlu0 %v4947, 6
      %v5434 = vpop.permute.xlu0 %5433
      %5435 = vrot.lane.b32.xlu0 %v4949, 6
      %v5436 = vpop.permute.xlu0 %5435
      %5437 = vrot.lane.b32.xlu0 %v5040, 6
      %v5438 = vpop.permute.xlu0 %5437
      %5439 = vrot.lane.b32.xlu0 %v4952, 6
      %v5440 = vpop.permute.xlu0 %5439
      %5441 = vrot.lane.b32.xlu0 %v4954, 6
      %v5442 = vpop.permute.xlu0 %5441
      %5443 = vrot.lane.b32.xlu0 %v4956, 6
      %v5444 = vpop.permute.xlu0 %5443
      %5445 = vrot.lane.b32.xlu0 %v5041, 6
      %v5446 = vpop.permute.xlu0 %5445
      %5447 = vrot.lane.b32.xlu0 %v4959, 6
      %v5448 = vpop.permute.xlu0 %5447
      %5449 = vrot.lane.b32.xlu0 %v4961, 6
      %v5450 = vpop.permute.xlu0 %5449
      %5451 = vrot.lane.b32.xlu0 %v4963, 6
      %v5452 = vpop.permute.xlu0 %5451
      %5453 = vrot.lane.b32.xlu0 %v5042, 6
      %v5454 = vpop.permute.xlu0 %5453
      %5455 = vrot.lane.b32.xlu0 %v4966, 6
      %v5456 = vpop.permute.xlu0 %5455
      %5457 = vrot.lane.b32.xlu0 %v4968, 6
      %v5458 = vpop.permute.xlu0 %5457
      %5459 = vrot.lane.b32.xlu0 %v4970, 6
      %v5460 = vpop.permute.xlu0 %5459
      %5461 = vrot.lane.b32.xlu0 %v5043, 6
      %v5462 = vpop.permute.xlu0 %5461
      %5463 = vrot.lane.b32.xlu0 %v4973, 6
      %v5464 = vpop.permute.xlu0 %5463
      %5465 = vrot.lane.b32.xlu0 %v4975, 6
      %v5466 = vpop.permute.xlu0 %5465
      %5467 = vrot.lane.b32.xlu0 %v4977, 6
      %v5468 = vpop.permute.xlu0 %5467
      %5469 = vrot.lane.b32.xlu0 %v5044, 6
      %v5470 = vpop.permute.xlu0 %5469
      %5471 = vrot.lane.b32.xlu0 %v4980, 6
      %v5472 = vpop.permute.xlu0 %5471
      %5473 = vrot.lane.b32.xlu0 %v4982, 6
      %v5474 = vpop.permute.xlu0 %5473
      %5475 = vrot.lane.b32.xlu0 %v4984, 6
      %v5476 = vpop.permute.xlu0 %5475
      %v5510 = vrot.slane %v5044, 1
      %v5511 = vrot.slane %v4980, 1
      %v5512 = vsel %vm882, %v5510, %v5511
      %v5513 = vrot.slane %v4982, 1
      %v5514 = vsel %vm882, %v5511, %v5513
      %v5515 = vrot.slane %v4984, 1
      %v5516 = vsel %vm882, %v5513, %v5515
      %v5517 = vrot.slane %v5054, 1
      %v5518 = vsel %vm882, %v5515, %v5517
      %5519 = vrot.lane.b32.xlu0 %v5087, 8
      %v5520 = vpop.permute.xlu0 %5519
      %5521 = vrot.lane.b32.xlu0 %v5089, 8
      %v5522 = vpop.permute.xlu0 %5521
      %5523 = vrot.lane.b32.xlu0 %v5091, 8
      %v5524 = vpop.permute.xlu0 %5523
      %5525 = vrot.lane.b32.xlu0 %v5093, 8
      %v5526 = vpop.permute.xlu0 %5525
      %5527 = vrot.lane.b32.xlu0 %v5096, 8
      %v5528 = vpop.permute.xlu0 %5527
      %5529 = vrot.lane.b32.xlu0 %v5098, 8
      %v5530 = vpop.permute.xlu0 %5529
      %5531 = vrot.lane.b32.xlu0 %v5100, 8
      %v5532 = vpop.permute.xlu0 %5531
      %5533 = vrot.lane.b32.xlu0 %v5102, 8
      %v5534 = vpop.permute.xlu0 %5533
      %5535 = vrot.lane.b32.xlu0 %v5105, 8
      %v5536 = vpop.permute.xlu0 %5535
      %5537 = vrot.lane.b32.xlu0 %v5107, 8
      %v5538 = vpop.permute.xlu0 %5537
      %5539 = vrot.lane.b32.xlu0 %v5109, 8
      %v5540 = vpop.permute.xlu0 %5539
      %5541 = vrot.lane.b32.xlu0 %v5111, 8
      %v5542 = vpop.permute.xlu0 %5541
      %5543 = vrot.lane.b32.xlu0 %v5114, 8
      %v5544 = vpop.permute.xlu0 %5543
      %5545 = vrot.lane.b32.xlu0 %v5116, 8
      %v5546 = vpop.permute.xlu0 %5545
      %5547 = vrot.lane.b32.xlu0 %v5118, 8
      %v5548 = vpop.permute.xlu0 %5547
      %5549 = vrot.lane.b32.xlu0 %v5120, 8
      %v5550 = vpop.permute.xlu0 %5549
      %5551 = vrot.lane.b32.xlu0 %v5123, 8
      %v5552 = vpop.permute.xlu0 %5551
      %5553 = vrot.lane.b32.xlu0 %v5125, 8
      %v5554 = vpop.permute.xlu0 %5553
      %5555 = vrot.lane.b32.xlu0 %v5127, 8
      %v5556 = vpop.permute.xlu0 %5555
      %5557 = vrot.lane.b32.xlu0 %v5129, 8
      %v5558 = vpop.permute.xlu0 %5557
      %5559 = vrot.lane.b32.xlu0 %v5132, 8
      %v5560 = vpop.permute.xlu0 %5559
      %5561 = vrot.lane.b32.xlu0 %v5134, 8
      %v5562 = vpop.permute.xlu0 %5561
      %5563 = vrot.lane.b32.xlu0 %v5136, 8
      %v5564 = vpop.permute.xlu0 %5563
      %5565 = vrot.lane.b32.xlu0 %v5138, 8
      %v5566 = vpop.permute.xlu0 %5565
      %5567 = vrot.lane.b32.xlu0 %v5141, 8
      %v5568 = vpop.permute.xlu0 %5567
      %5569 = vrot.lane.b32.xlu0 %v5143, 8
      %v5570 = vpop.permute.xlu0 %5569
      %5571 = vrot.lane.b32.xlu0 %v5145, 8
      %v5572 = vpop.permute.xlu0 %5571
      %5573 = vrot.lane.b32.xlu0 %v5147, 8
      %v5574 = vpop.permute.xlu0 %5573
      %5575 = vrot.lane.b32.xlu0 %v5512, 8
      %v5576 = vpop.permute.xlu0 %5575
      %5577 = vrot.lane.b32.xlu0 %v5514, 8
      %v5578 = vpop.permute.xlu0 %5577
      %5579 = vrot.lane.b32.xlu0 %v5516, 8
      %v5580 = vpop.permute.xlu0 %5579
      %5581 = vrot.lane.b32.xlu0 %v5518, 8
      %v5582 = vpop.permute.xlu0 %5581
      %v5615 = vrot.slane %v5044, 2
      %v5616 = vrot.slane %v4980, 2
      %v5617 = vsel %vm3270, %v5615, %v5616
      %v5618 = vrot.slane %v4982, 2
      %v5619 = vsel %vm3270, %v5616, %v5618
      %v5620 = vrot.slane %v4984, 2
      %v5621 = vsel %vm3270, %v5618, %v5620
      %v5622 = vrot.slane %v5054, 2
      %v5623 = vsel %vm3270, %v5620, %v5622
      %5624 = vrot.lane.b32.xlu0 %v5255, 10
      %v5625 = vpop.permute.xlu0 %5624
      %5626 = vrot.lane.b32.xlu0 %v5257, 10
      %v5627 = vpop.permute.xlu0 %5626
      %5628 = vrot.lane.b32.xlu0 %v5259, 10
      %v5629 = vpop.permute.xlu0 %5628
      %5630 = vrot.lane.b32.xlu0 %v5261, 10
      %v5631 = vpop.permute.xlu0 %5630
      %5632 = vrot.lane.b32.xlu0 %v5264, 10
      %v5633 = vpop.permute.xlu0 %5632
      %5634 = vrot.lane.b32.xlu0 %v5266, 10
      %v5635 = vpop.permute.xlu0 %5634
      %5636 = vrot.lane.b32.xlu0 %v5268, 10
      %v5637 = vpop.permute.xlu0 %5636
      %5638 = vrot.lane.b32.xlu0 %v5270, 10
      %v5639 = vpop.permute.xlu0 %5638
      %5640 = vrot.lane.b32.xlu0 %v5273, 10
      %v5641 = vpop.permute.xlu0 %5640
      %5642 = vrot.lane.b32.xlu0 %v5275, 10
      %v5643 = vpop.permute.xlu0 %5642
      %5644 = vrot.lane.b32.xlu0 %v5277, 10
      %v5645 = vpop.permute.xlu0 %5644
      %5646 = vrot.lane.b32.xlu0 %v5279, 10
      %v5647 = vpop.permute.xlu0 %5646
      %5648 = vrot.lane.b32.xlu0 %v5282, 10
      %v5649 = vpop.permute.xlu0 %5648
      %5650 = vrot.lane.b32.xlu0 %v5284, 10
      %v5651 = vpop.permute.xlu0 %5650
      %5652 = vrot.lane.b32.xlu0 %v5286, 10
      %v5653 = vpop.permute.xlu0 %5652
      %5654 = vrot.lane.b32.xlu0 %v5288, 10
      %v5655 = vpop.permute.xlu0 %5654
      %5656 = vrot.lane.b32.xlu0 %v5291, 10
      %v5657 = vpop.permute.xlu0 %5656
      %5658 = vrot.lane.b32.xlu0 %v5293, 10
      %v5659 = vpop.permute.xlu0 %5658
      %5660 = vrot.lane.b32.xlu0 %v5295, 10
      %v5661 = vpop.permute.xlu0 %5660
      %5662 = vrot.lane.b32.xlu0 %v5297, 10
      %v5663 = vpop.permute.xlu0 %5662
      %5664 = vrot.lane.b32.xlu0 %v5300, 10
      %v5665 = vpop.permute.xlu0 %5664
      %5666 = vrot.lane.b32.xlu0 %v5302, 10
      %v5667 = vpop.permute.xlu0 %5666
      %5668 = vrot.lane.b32.xlu0 %v5304, 10
      %v5669 = vpop.permute.xlu0 %5668
      %5670 = vrot.lane.b32.xlu0 %v5306, 10
      %v5671 = vpop.permute.xlu0 %5670
      %5672 = vrot.lane.b32.xlu0 %v5309, 10
      %v5673 = vpop.permute.xlu0 %5672
      %5674 = vrot.lane.b32.xlu0 %v5311, 10
      %v5675 = vpop.permute.xlu0 %5674
      %5676 = vrot.lane.b32.xlu0 %v5313, 10
      %v5677 = vpop.permute.xlu0 %5676
      %5678 = vrot.lane.b32.xlu0 %v5315, 10
      %v5679 = vpop.permute.xlu0 %5678
      %5680 = vrot.lane.b32.xlu0 %v5617, 10
      %v5681 = vpop.permute.xlu0 %5680
      %5682 = vrot.lane.b32.xlu0 %v5619, 10
      %v5683 = vpop.permute.xlu0 %5682
      %5684 = vrot.lane.b32.xlu0 %v5621, 10
      %v5685 = vpop.permute.xlu0 %5684
      %5686 = vrot.lane.b32.xlu0 %v5623, 10
      %v5687 = vpop.permute.xlu0 %5686
      %5721 = vrot.lane.b32.xlu0 %v5038, 12
      %v5722 = vpop.permute.xlu0 %5721
      %5723 = vrot.lane.b32.xlu0 %v4938, 12
      %v5724 = vpop.permute.xlu0 %5723
      %5725 = vrot.lane.b32.xlu0 %v4940, 12
      %v5726 = vpop.permute.xlu0 %5725
      %5727 = vrot.lane.b32.xlu0 %v4942, 12
      %v5728 = vpop.permute.xlu0 %5727
      %5729 = vrot.lane.b32.xlu0 %v5039, 12
      %v5730 = vpop.permute.xlu0 %5729
      %5731 = vrot.lane.b32.xlu0 %v4945, 12
      %v5732 = vpop.permute.xlu0 %5731
      %5733 = vrot.lane.b32.xlu0 %v4947, 12
      %v5734 = vpop.permute.xlu0 %5733
      %5735 = vrot.lane.b32.xlu0 %v4949, 12
      %v5736 = vpop.permute.xlu0 %5735
      %5737 = vrot.lane.b32.xlu0 %v5040, 12
      %v5738 = vpop.permute.xlu0 %5737
      %5739 = vrot.lane.b32.xlu0 %v4952, 12
      %v5740 = vpop.permute.xlu0 %5739
      %5741 = vrot.lane.b32.xlu0 %v4954, 12
      %v5742 = vpop.permute.xlu0 %5741
      %5743 = vrot.lane.b32.xlu0 %v4956, 12
      %v5744 = vpop.permute.xlu0 %5743
      %5745 = vrot.lane.b32.xlu0 %v5041, 12
      %v5746 = vpop.permute.xlu0 %5745
      %5747 = vrot.lane.b32.xlu0 %v4959, 12
      %v5748 = vpop.permute.xlu0 %5747
      %5749 = vrot.lane.b32.xlu0 %v4961, 12
      %v5750 = vpop.permute.xlu0 %5749
      %5751 = vrot.lane.b32.xlu0 %v4963, 12
      %v5752 = vpop.permute.xlu0 %5751
      %5753 = vrot.lane.b32.xlu0 %v5042, 12
      %v5754 = vpop.permute.xlu0 %5753
      %5755 = vrot.lane.b32.xlu0 %v4966, 12
      %v5756 = vpop.permute.xlu0 %5755
      %5757 = vrot.lane.b32.xlu0 %v4968, 12
      %v5758 = vpop.permute.xlu0 %5757
      %5759 = vrot.lane.b32.xlu0 %v4970, 12
      %v5760 = vpop.permute.xlu0 %5759
      %5761 = vrot.lane.b32.xlu0 %v5043, 12
      %v5762 = vpop.permute.xlu0 %5761
      %5763 = vrot.lane.b32.xlu0 %v4973, 12
      %v5764 = vpop.permute.xlu0 %5763
      %5765 = vrot.lane.b32.xlu0 %v4975, 12
      %v5766 = vpop.permute.xlu0 %5765
      %5767 = vrot.lane.b32.xlu0 %v4977, 12
      %v5768 = vpop.permute.xlu0 %5767
      %5769 = vrot.lane.b32.xlu0 %v5044, 12
      %v5770 = vpop.permute.xlu0 %5769
      %5771 = vrot.lane.b32.xlu0 %v4980, 12
      %v5772 = vpop.permute.xlu0 %5771
      %5773 = vrot.lane.b32.xlu0 %v4982, 12
      %v5774 = vpop.permute.xlu0 %5773
      %5775 = vrot.lane.b32.xlu0 %v4984, 12
      %v5776 = vpop.permute.xlu0 %5775
      %5777 = vrot.lane.b32.xlu0 %v5045, 12
      %v5778 = vpop.permute.xlu0 %5777
      %5779 = vrot.lane.b32.xlu0 %v4987, 12
      %v5780 = vpop.permute.xlu0 %5779
      %5781 = vrot.lane.b32.xlu0 %v4989, 12
      %v5782 = vpop.permute.xlu0 %5781
      %5783 = vrot.lane.b32.xlu0 %v4991, 12
      %v5784 = vpop.permute.xlu0 %5783
      %v5818 = vrot.slane %v5045, 1
      %v5819 = vrot.slane %v4987, 1
      %v5820 = vsel %vm882, %v5818, %v5819
      %v5821 = vrot.slane %v4989, 1
      %v5822 = vsel %vm882, %v5819, %v5821
      %v5823 = vrot.slane %v4991, 1
      %v5824 = vsel %vm882, %v5821, %v5823
      %v5825 = vrot.slane %v5055, 1
      %v5826 = vsel %vm882, %v5823, %v5825
      %5827 = vrot.lane.b32.xlu0 %v5096, 14
      %v5828 = vpop.permute.xlu0 %5827
      %5829 = vrot.lane.b32.xlu0 %v5098, 14
      %v5830 = vpop.permute.xlu0 %5829
      %5831 = vrot.lane.b32.xlu0 %v5100, 14
      %v5832 = vpop.permute.xlu0 %5831
      %5833 = vrot.lane.b32.xlu0 %v5102, 14
      %v5834 = vpop.permute.xlu0 %5833
      %5835 = vrot.lane.b32.xlu0 %v5105, 14
      %v5836 = vpop.permute.xlu0 %5835
      %5837 = vrot.lane.b32.xlu0 %v5107, 14
      %v5838 = vpop.permute.xlu0 %5837
      %5839 = vrot.lane.b32.xlu0 %v5109, 14
      %v5840 = vpop.permute.xlu0 %5839
      %5841 = vrot.lane.b32.xlu0 %v5111, 14
      %v5842 = vpop.permute.xlu0 %5841
      %5843 = vrot.lane.b32.xlu0 %v5114, 14
      %v5844 = vpop.permute.xlu0 %5843
      %5845 = vrot.lane.b32.xlu0 %v5116, 14
      %v5846 = vpop.permute.xlu0 %5845
      %5847 = vrot.lane.b32.xlu0 %v5118, 14
      %v5848 = vpop.permute.xlu0 %5847
      %5849 = vrot.lane.b32.xlu0 %v5120, 14
      %v5850 = vpop.permute.xlu0 %5849
      %5851 = vrot.lane.b32.xlu0 %v5123, 14
      %v5852 = vpop.permute.xlu0 %5851
      %5853 = vrot.lane.b32.xlu0 %v5125, 14
      %v5854 = vpop.permute.xlu0 %5853
      %5855 = vrot.lane.b32.xlu0 %v5127, 14
      %v5856 = vpop.permute.xlu0 %5855
      %5857 = vrot.lane.b32.xlu0 %v5129, 14
      %v5858 = vpop.permute.xlu0 %5857
      %5859 = vrot.lane.b32.xlu0 %v5132, 14
      %v5860 = vpop.permute.xlu0 %5859
      %5861 = vrot.lane.b32.xlu0 %v5134, 14
      %v5862 = vpop.permute.xlu0 %5861
      %5863 = vrot.lane.b32.xlu0 %v5136, 14
      %v5864 = vpop.permute.xlu0 %5863
      %5865 = vrot.lane.b32.xlu0 %v5138, 14
      %v5866 = vpop.permute.xlu0 %5865
      %5867 = vrot.lane.b32.xlu0 %v5141, 14
      %v5868 = vpop.permute.xlu0 %5867
      %5869 = vrot.lane.b32.xlu0 %v5143, 14
      %v5870 = vpop.permute.xlu0 %5869
      %5871 = vrot.lane.b32.xlu0 %v5145, 14
      %v5872 = vpop.permute.xlu0 %5871
      %5873 = vrot.lane.b32.xlu0 %v5147, 14
      %v5874 = vpop.permute.xlu0 %5873
      %5875 = vrot.lane.b32.xlu0 %v5512, 14
      %v5876 = vpop.permute.xlu0 %5875
      %5877 = vrot.lane.b32.xlu0 %v5514, 14
      %v5878 = vpop.permute.xlu0 %5877
      %5879 = vrot.lane.b32.xlu0 %v5516, 14
      %v5880 = vpop.permute.xlu0 %5879
      %5881 = vrot.lane.b32.xlu0 %v5518, 14
      %v5882 = vpop.permute.xlu0 %5881
      %5883 = vrot.lane.b32.xlu0 %v5820, 14
      %v5884 = vpop.permute.xlu0 %5883
      %5885 = vrot.lane.b32.xlu0 %v5822, 14
      %v5886 = vpop.permute.xlu0 %5885
      %5887 = vrot.lane.b32.xlu0 %v5824, 14
      %v5888 = vpop.permute.xlu0 %5887
      %5889 = vrot.lane.b32.xlu0 %v5826, 14
      %v5890 = vpop.permute.xlu0 %5889
      %v5923 = vrot.slane %v5045, 2
      %v5924 = vrot.slane %v4987, 2
      %v5925 = vsel %vm3270, %v5923, %v5924
      %v5926 = vrot.slane %v4989, 2
      %v5927 = vsel %vm3270, %v5924, %v5926
      %v5928 = vrot.slane %v4991, 2
      %v5929 = vsel %vm3270, %v5926, %v5928
      %v5930 = vrot.slane %v5055, 2
      %v5931 = vsel %vm3270, %v5928, %v5930
      %5932 = vrot.lane.b32.xlu0 %v5264, 16
      %v5933 = vpop.permute.xlu0 %5932
      %5934 = vrot.lane.b32.xlu0 %v5266, 16
      %v5935 = vpop.permute.xlu0 %5934
      %5936 = vrot.lane.b32.xlu0 %v5268, 16
      %v5937 = vpop.permute.xlu0 %5936
      %5938 = vrot.lane.b32.xlu0 %v5270, 16
      %v5939 = vpop.permute.xlu0 %5938
      %5940 = vrot.lane.b32.xlu0 %v5273, 16
      %v5941 = vpop.permute.xlu0 %5940
      %5942 = vrot.lane.b32.xlu0 %v5275, 16
      %v5943 = vpop.permute.xlu0 %5942
      %5944 = vrot.lane.b32.xlu0 %v5277, 16
      %v5945 = vpop.permute.xlu0 %5944
      %5946 = vrot.lane.b32.xlu0 %v5279, 16
      %v5947 = vpop.permute.xlu0 %5946
      %5948 = vrot.lane.b32.xlu0 %v5282, 16
      %v5949 = vpop.permute.xlu0 %5948
      %5950 = vrot.lane.b32.xlu0 %v5284, 16
      %v5951 = vpop.permute.xlu0 %5950
      %5952 = vrot.lane.b32.xlu0 %v5286, 16
      %v5953 = vpop.permute.xlu0 %5952
      %5954 = vrot.lane.b32.xlu0 %v5288, 16
      %v5955 = vpop.permute.xlu0 %5954
      %5956 = vrot.lane.b32.xlu0 %v5291, 16
      %v5957 = vpop.permute.xlu0 %5956
      %5958 = vrot.lane.b32.xlu0 %v5293, 16
      %v5959 = vpop.permute.xlu0 %5958
      %5960 = vrot.lane.b32.xlu0 %v5295, 16
      %v5961 = vpop.permute.xlu0 %5960
      %5962 = vrot.lane.b32.xlu0 %v5297, 16
      %v5963 = vpop.permute.xlu0 %5962
      %5964 = vrot.lane.b32.xlu0 %v5300, 16
      %v5965 = vpop.permute.xlu0 %5964
      %5966 = vrot.lane.b32.xlu0 %v5302, 16
      %v5967 = vpop.permute.xlu0 %5966
      %5968 = vrot.lane.b32.xlu0 %v5304, 16
      %v5969 = vpop.permute.xlu0 %5968
      %5970 = vrot.lane.b32.xlu0 %v5306, 16
      %v5971 = vpop.permute.xlu0 %5970
      %5972 = vrot.lane.b32.xlu0 %v5309, 16
      %v5973 = vpop.permute.xlu0 %5972
      %5974 = vrot.lane.b32.xlu0 %v5311, 16
      %v5975 = vpop.permute.xlu0 %5974
      %5976 = vrot.lane.b32.xlu0 %v5313, 16
      %v5977 = vpop.permute.xlu0 %5976
      %5978 = vrot.lane.b32.xlu0 %v5315, 16
      %v5979 = vpop.permute.xlu0 %5978
      %5980 = vrot.lane.b32.xlu0 %v5617, 16
      %v5981 = vpop.permute.xlu0 %5980
      %5982 = vrot.lane.b32.xlu0 %v5619, 16
      %v5983 = vpop.permute.xlu0 %5982
      %5984 = vrot.lane.b32.xlu0 %v5621, 16
      %v5985 = vpop.permute.xlu0 %5984
      %5986 = vrot.lane.b32.xlu0 %v5623, 16
      %v5987 = vpop.permute.xlu0 %5986
      %5988 = vrot.lane.b32.xlu0 %v5925, 16
      %v5989 = vpop.permute.xlu0 %5988
      %5990 = vrot.lane.b32.xlu0 %v5927, 16
      %v5991 = vpop.permute.xlu0 %5990
      %5992 = vrot.lane.b32.xlu0 %v5929, 16
      %v5993 = vpop.permute.xlu0 %5992
      %5994 = vrot.lane.b32.xlu0 %v5931, 16
      %v5995 = vpop.permute.xlu0 %5994
      %vm6028 = vcmask 15360
      %v6029 = vsel %vm6028, %v5036, %v5149
      %v6030 = vsel %vm6028, %v4924, %v5151
      %v6031 = vsel %vm6028, %v4926, %v5153
      %v6032 = vsel %vm6028, %v4928, %v5155
      %v6033 = vsel %vm6028, %v5037, %v5157
      %v6034 = vsel %vm6028, %v4931, %v5159
      %v6035 = vsel %vm6028, %v4933, %v5161
      %v6036 = vsel %vm6028, %v4935, %v5163
      %v6037 = vsel %vm6028, %v5038, %v5165
      %v6038 = vsel %vm6028, %v4938, %v5167
      %v6039 = vsel %vm6028, %v4940, %v5169
      %v6040 = vsel %vm6028, %v4942, %v5171
      %v6041 = vsel %vm6028, %v5039, %v5173
      %v6042 = vsel %vm6028, %v4945, %v5175
      %v6043 = vsel %vm6028, %v4947, %v5177
      %v6044 = vsel %vm6028, %v4949, %v5179
      %v6045 = vsel %vm6028, %v5040, %v5181
      %v6046 = vsel %vm6028, %v4952, %v5183
      %v6047 = vsel %vm6028, %v4954, %v5185
      %v6048 = vsel %vm6028, %v4956, %v5187
      %v6049 = vsel %vm6028, %v5041, %v5189
      %v6050 = vsel %vm6028, %v4959, %v5191
      %v6051 = vsel %vm6028, %v4961, %v5193
      %v6052 = vsel %vm6028, %v4963, %v5195
      %v6053 = vsel %vm6028, %v5042, %v5197
      %v6054 = vsel %vm6028, %v4966, %v5199
      %v6055 = vsel %vm6028, %v4968, %v5201
      %v6056 = vsel %vm6028, %v4970, %v5203
      %v6057 = vsel %vm6028, %v5043, %v5205
      %v6058 = vsel %vm6028, %v4973, %v5207
      %v6059 = vsel %vm6028, %v4975, %v5209
      %v6060 = vsel %vm6028, %v4977, %v5211
      %v6061 = vsel %vm4241, %v6029, %v5317
      %v6062 = vsel %vm4241, %v6030, %v5319
      %v6063 = vsel %vm4241, %v6031, %v5321
      %v6064 = vsel %vm4241, %v6032, %v5323
      %v6065 = vsel %vm4241, %v6033, %v5325
      %v6066 = vsel %vm4241, %v6034, %v5327
      %v6067 = vsel %vm4241, %v6035, %v5329
      %v6068 = vsel %vm4241, %v6036, %v5331
      %v6069 = vsel %vm4241, %v6037, %v5333
      %v6070 = vsel %vm4241, %v6038, %v5335
      %v6071 = vsel %vm4241, %v6039, %v5337
      %v6072 = vsel %vm4241, %v6040, %v5339
      %v6073 = vsel %vm4241, %v6041, %v5341
      %v6074 = vsel %vm4241, %v6042, %v5343
      %v6075 = vsel %vm4241, %v6043, %v5345
      %v6076 = vsel %vm4241, %v6044, %v5347
      %v6077 = vsel %vm4241, %v6045, %v5349
      %v6078 = vsel %vm4241, %v6046, %v5351
      %v6079 = vsel %vm4241, %v6047, %v5353
      %v6080 = vsel %vm4241, %v6048, %v5355
      %v6081 = vsel %vm4241, %v6049, %v5357
      %v6082 = vsel %vm4241, %v6050, %v5359
      %v6083 = vsel %vm4241, %v6051, %v5361
      %v6084 = vsel %vm4241, %v6052, %v5363
      %v6085 = vsel %vm4241, %v6053, %v5365
      %v6086 = vsel %vm4241, %v6054, %v5367
      %v6087 = vsel %vm4241, %v6055, %v5369
      %v6088 = vsel %vm4241, %v6056, %v5371
      %v6089 = vsel %vm4241, %v6057, %v5373
      %v6090 = vsel %vm4241, %v6058, %v5375
      %v6091 = vsel %vm4241, %v6059, %v5377
      %v6092 = vsel %vm4241, %v6060, %v5379
      %vm6093 = vcmask 48128
      %v6094 = vsel %vm6093, %v6061, %v5414
      %v6095 = vsel %vm6093, %v6062, %v5416
      %v6096 = vsel %vm6093, %v6063, %v5418
      %v6097 = vsel %vm6093, %v6064, %v5420
      %v6098 = vsel %vm6093, %v6065, %v5422
      %v6099 = vsel %vm6093, %v6066, %v5424
      %v6100 = vsel %vm6093, %v6067, %v5426
      %v6101 = vsel %vm6093, %v6068, %v5428
      %v6102 = vsel %vm6093, %v6069, %v5430
      %v6103 = vsel %vm6093, %v6070, %v5432
      %v6104 = vsel %vm6093, %v6071, %v5434
      %v6105 = vsel %vm6093, %v6072, %v5436
      %v6106 = vsel %vm6093, %v6073, %v5438
      %v6107 = vsel %vm6093, %v6074, %v5440
      %v6108 = vsel %vm6093, %v6075, %v5442
      %v6109 = vsel %vm6093, %v6076, %v5444
      %v6110 = vsel %vm6093, %v6077, %v5446
      %v6111 = vsel %vm6093, %v6078, %v5448
      %v6112 = vsel %vm6093, %v6079, %v5450
      %v6113 = vsel %vm6093, %v6080, %v5452
      %v6114 = vsel %vm6093, %v6081, %v5454
      %v6115 = vsel %vm6093, %v6082, %v5456
      %v6116 = vsel %vm6093, %v6083, %v5458
      %v6117 = vsel %vm6093, %v6084, %v5460
      %v6118 = vsel %vm6093, %v6085, %v5462
      %v6119 = vsel %vm6093, %v6086, %v5464
      %v6120 = vsel %vm6093, %v6087, %v5466
      %v6121 = vsel %vm6093, %v6088, %v5468
      %v6122 = vsel %vm6093, %v6089, %v5470
      %v6123 = vsel %vm6093, %v6090, %v5472
      %v6124 = vsel %vm6093, %v6091, %v5474
      %v6125 = vsel %vm6093, %v6092, %v5476
      %v6126 = vsel %vm4282, %v6094, %v5520
      %v6127 = vsel %vm4282, %v6095, %v5522
      %v6128 = vsel %vm4282, %v6096, %v5524
      %v6129 = vsel %vm4282, %v6097, %v5526
      %v6130 = vsel %vm4282, %v6098, %v5528
      %v6131 = vsel %vm4282, %v6099, %v5530
      %v6132 = vsel %vm4282, %v6100, %v5532
      %v6133 = vsel %vm4282, %v6101, %v5534
      %v6134 = vsel %vm4282, %v6102, %v5536
      %v6135 = vsel %vm4282, %v6103, %v5538
      %v6136 = vsel %vm4282, %v6104, %v5540
      %v6137 = vsel %vm4282, %v6105, %v5542
      %v6138 = vsel %vm4282, %v6106, %v5544
      %v6139 = vsel %vm4282, %v6107, %v5546
      %v6140 = vsel %vm4282, %v6108, %v5548
      %v6141 = vsel %vm4282, %v6109, %v5550
      %v6142 = vsel %vm4282, %v6110, %v5552
      %v6143 = vsel %vm4282, %v6111, %v5554
      %v6144 = vsel %vm4282, %v6112, %v5556
      %v6145 = vsel %vm4282, %v6113, %v5558
      %v6146 = vsel %vm4282, %v6114, %v5560
      %v6147 = vsel %vm4282, %v6115, %v5562
      %v6148 = vsel %vm4282, %v6116, %v5564
      %v6149 = vsel %vm4282, %v6117, %v5566
      %v6150 = vsel %vm4282, %v6118, %v5568
      %v6151 = vsel %vm4282, %v6119, %v5570
      %v6152 = vsel %vm4282, %v6120, %v5572
      %v6153 = vsel %vm4282, %v6121, %v5574
      %v6154 = vsel %vm4282, %v6122, %v5576
      %v6155 = vsel %vm4282, %v6123, %v5578
      %v6156 = vsel %vm4282, %v6124, %v5580
      %v6157 = vsel %vm4282, %v6125, %v5582
      %vm6158 = vcmask 80896
      %v6159 = vsel %vm6158, %v6126, %v5625
      %v6160 = vsel %vm6158, %v6127, %v5627
      %v6161 = vsel %vm6158, %v6128, %v5629
      %v6162 = vsel %vm6158, %v6129, %v5631
      %v6163 = vsel %vm6158, %v6130, %v5633
      %v6164 = vsel %vm6158, %v6131, %v5635
      %v6165 = vsel %vm6158, %v6132, %v5637
      %v6166 = vsel %vm6158, %v6133, %v5639
      %v6167 = vsel %vm6158, %v6134, %v5641
      %v6168 = vsel %vm6158, %v6135, %v5643
      %v6169 = vsel %vm6158, %v6136, %v5645
      %v6170 = vsel %vm6158, %v6137, %v5647
      %v6171 = vsel %vm6158, %v6138, %v5649
      %v6172 = vsel %vm6158, %v6139, %v5651
      %v6173 = vsel %vm6158, %v6140, %v5653
      %v6174 = vsel %vm6158, %v6141, %v5655
      %v6175 = vsel %vm6158, %v6142, %v5657
      %v6176 = vsel %vm6158, %v6143, %v5659
      %v6177 = vsel %vm6158, %v6144, %v5661
      %v6178 = vsel %vm6158, %v6145, %v5663
      %v6179 = vsel %vm6158, %v6146, %v5665
      %v6180 = vsel %vm6158, %v6147, %v5667
      %v6181 = vsel %vm6158, %v6148, %v5669
      %v6182 = vsel %vm6158, %v6149, %v5671
      %v6183 = vsel %vm6158, %v6150, %v5673
      %v6184 = vsel %vm6158, %v6151, %v5675
      %v6185 = vsel %vm6158, %v6152, %v5677
      %v6186 = vsel %vm6158, %v6153, %v5679
      %v6187 = vsel %vm6158, %v6154, %v5681
      %v6188 = vsel %vm6158, %v6155, %v5683
      %v6189 = vsel %vm6158, %v6156, %v5685
      %v6190 = vsel %vm6158, %v6157, %v5687
      %v6191 = vsel %vm4323, %v6159, %v5722
      %v6192 = vsel %vm4323, %v6160, %v5724
      %v6193 = vsel %vm4323, %v6161, %v5726
      %v6194 = vsel %vm4323, %v6162, %v5728
      %v6195 = vsel %vm4323, %v6163, %v5730
      %v6196 = vsel %vm4323, %v6164, %v5732
      %v6197 = vsel %vm4323, %v6165, %v5734
      %v6198 = vsel %vm4323, %v6166, %v5736
      %v6199 = vsel %vm4323, %v6167, %v5738
      %v6200 = vsel %vm4323, %v6168, %v5740
      %v6201 = vsel %vm4323, %v6169, %v5742
      %v6202 = vsel %vm4323, %v6170, %v5744
      %v6203 = vsel %vm4323, %v6171, %v5746
      %v6204 = vsel %vm4323, %v6172, %v5748
      %v6205 = vsel %vm4323, %v6173, %v5750
      %v6206 = vsel %vm4323, %v6174, %v5752
      %v6207 = vsel %vm4323, %v6175, %v5754
      %v6208 = vsel %vm4323, %v6176, %v5756
      %v6209 = vsel %vm4323, %v6177, %v5758
      %v6210 = vsel %vm4323, %v6178, %v5760
      %v6211 = vsel %vm4323, %v6179, %v5762
      %v6212 = vsel %vm4323, %v6180, %v5764
      %v6213 = vsel %vm4323, %v6181, %v5766
      %v6214 = vsel %vm4323, %v6182, %v5768
      %v6215 = vsel %vm4323, %v6183, %v5770
      %v6216 = vsel %vm4323, %v6184, %v5772
      %v6217 = vsel %vm4323, %v6185, %v5774
      %v6218 = vsel %vm4323, %v6186, %v5776
      %v6219 = vsel %vm4323, %v6187, %v5778
      %v6220 = vsel %vm4323, %v6188, %v5780
      %v6221 = vsel %vm4323, %v6189, %v5782
      %v6222 = vsel %vm4323, %v6190, %v5784
      %vm6223 = vcmask 113664
      %v6224 = vsel %vm6223, %v6191, %v5828
      %v6225 = vsel %vm6223, %v6192, %v5830
      %v6226 = vsel %vm6223, %v6193, %v5832
      %v6227 = vsel %vm6223, %v6194, %v5834
      %v6228 = vsel %vm6223, %v6195, %v5836
      %v6229 = vsel %vm6223, %v6196, %v5838
      %v6230 = vsel %vm6223, %v6197, %v5840
      %v6231 = vsel %vm6223, %v6198, %v5842
      %v6232 = vsel %vm6223, %v6199, %v5844
      %v6233 = vsel %vm6223, %v6200, %v5846
      %v6234 = vsel %vm6223, %v6201, %v5848
      %v6235 = vsel %vm6223, %v6202, %v5850
      %v6236 = vsel %vm6223, %v6203, %v5852
      %v6237 = vsel %vm6223, %v6204, %v5854
      %v6238 = vsel %vm6223, %v6205, %v5856
      %v6239 = vsel %vm6223, %v6206, %v5858
      %v6240 = vsel %vm6223, %v6207, %v5860
      %v6241 = vsel %vm6223, %v6208, %v5862
      %v6242 = vsel %vm6223, %v6209, %v5864
      %v6243 = vsel %vm6223, %v6210, %v5866
      %v6244 = vsel %vm6223, %v6211, %v5868
      %v6245 = vsel %vm6223, %v6212, %v5870
      %v6246 = vsel %vm6223, %v6213, %v5872
      %v6247 = vsel %vm6223, %v6214, %v5874
      %v6248 = vsel %vm6223, %v6215, %v5876
      %v6249 = vsel %vm6223, %v6216, %v5878
      %v6250 = vsel %vm6223, %v6217, %v5880
      %v6251 = vsel %vm6223, %v6218, %v5882
      %v6252 = vsel %vm6223, %v6219, %v5884
      %v6253 = vsel %vm6223, %v6220, %v5886
      %v6254 = vsel %vm6223, %v6221, %v5888
      %v6255 = vsel %vm6223, %v6222, %v5890
      %v6256 = vsel %vm4364, %v6224, %v5933
      %v6257 = vsel %vm4364, %v6225, %v5935
      %v6258 = vsel %vm4364, %v6226, %v5937
      %v6259 = vsel %vm4364, %v6227, %v5939
      %v6260 = vsel %vm4364, %v6228, %v5941
      %v6261 = vsel %vm4364, %v6229, %v5943
      %v6262 = vsel %vm4364, %v6230, %v5945
      %v6263 = vsel %vm4364, %v6231, %v5947
      %v6264 = vsel %vm4364, %v6232, %v5949
      %v6265 = vsel %vm4364, %v6233, %v5951
      %v6266 = vsel %vm4364, %v6234, %v5953
      %v6267 = vsel %vm4364, %v6235, %v5955
      %v6268 = vsel %vm4364, %v6236, %v5957
      %v6269 = vsel %vm4364, %v6237, %v5959
      %v6270 = vsel %vm4364, %v6238, %v5961
      %v6271 = vsel %vm4364, %v6239, %v5963
      %v6272 = vsel %vm4364, %v6240, %v5965
      %v6273 = vsel %vm4364, %v6241, %v5967
      %v6274 = vsel %vm4364, %v6242, %v5969
      %v6275 = vsel %vm4364, %v6243, %v5971
      %v6276 = vsel %vm4364, %v6244, %v5973
      %v6277 = vsel %vm4364, %v6245, %v5975
      %v6278 = vsel %vm4364, %v6246, %v5977
      %v6279 = vsel %vm4364, %v6247, %v5979
      %v6280 = vsel %vm4364, %v6248, %v5981
      %v6281 = vsel %vm4364, %v6249, %v5983
      %v6282 = vsel %vm4364, %v6250, %v5985
      %v6283 = vsel %vm4364, %v6251, %v5987
      %v6284 = vsel %vm4364, %v6252, %v5989
      %v6285 = vsel %vm4364, %v6253, %v5991
      %v6286 = vsel %vm4364, %v6254, %v5993
      %v6287 = vsel %vm4364, %v6255, %v5995
      %v6289 = vperm.slane %v5059, 0
      %vm6291 = vcmask 146432
      %v6293 = vsel %vm6291, %v6256, 0
      %v6296 = vsel %vm6291, %v6257, 0
      %v6299 = vsel %vm6291, %v6258, 0
      %v6302 = vsel %vm6291, %v6259, 0
      %v6305 = vsel %vm6291, %v6260, 0
      %v6308 = vsel %vm6291, %v6261, 0
      %v6311 = vsel %vm6291, %v6262, 0
      %v6314 = vsel %vm6291, %v6263, 0
      %v6317 = vsel %vm6291, %v6264, 0
      %v6320 = vsel %vm6291, %v6265, 0
      %v6323 = vsel %vm6291, %v6266, 0
      %v6326 = vsel %vm6291, %v6267, 0
      %v6329 = vsel %vm6291, %v6268, 0
      %v6332 = vsel %vm6291, %v6269, 0
      %v6335 = vsel %vm6291, %v6270, 0
      %v6338 = vsel %vm6291, %v6271, 0
      %v6341 = vsel %vm6291, %v6272, 0
      %v6344 = vsel %vm6291, %v6273, 0
      %v6347 = vsel %vm6291, %v6274, 0
      %v6350 = vsel %vm6291, %v6275, 0
      %v6353 = vsel %vm6291, %v6276, 0
      %v6356 = vsel %vm6291, %v6277, 0
      %v6359 = vsel %vm6291, %v6278, 0
      %v6362 = vsel %vm6291, %v6279, 0
      %v6365 = vsel %vm6291, %v6280, 0
      %v6368 = vsel %vm6291, %v6281, 0
      %v6371 = vsel %vm6291, %v6282, 0
      %v6374 = vsel %vm6291, %v6283, 0
      %v6377 = vsel %vm6291, %v6284, 0
      %v6380 = vsel %vm6291, %v6285, 0
      %v6383 = vsel %vm6291, %v6286, 0
      %v6386 = vsel %vm6291, %v6287, 0
      %vm6388 = vcmask 1041408
      %v6390 = vsel %vm6388, %v5058, 0
      %6392 = vmatpush.msra.mxu0 0.0
      %6393 = vmatpush.msra.mxu0 0.0
      %6394 = vmatpush.msra.mxu0 0.0
      %6395 = vmatpush.msra.mxu0 0.0
      %6396 = vmatpush.msra.mxu0 0.0
      %6397 = vmatpush.msra.mxu0 0.0
      %6398 = vmatpush.msra.mxu0 0.0
      %6399 = vmatpush.msra.mxu0 0.0
      %6400 = vmatpush.msra.mxu0 0.0
      %6401 = vmatpush.msra.mxu0 0.0
      %6402 = vmatpush.msra.mxu0 0.0
      %6403 = vmatpush.msra.mxu0 0.0
      %6404 = vmatpush.msra.mxu0 0.0
      %6405 = vmatpush.msra.mxu0 %v6390
      %6406 = vmatpush.msra.mxu0 %v5057
      %6407 = vmatpush.msra.mxu0 %v5056
      %6408 = vmatmul.f32.gmra.mxu0 %v6293
      %v6409 = vpop.f32.mrf.mxu0
      %v6410 = vadd.f32 %v6289, %v6409
      %6411 = vmatmul.f32.gmra.mxu0 %v6296
      %v6412 = vpop.f32.mrf.mxu0
      %v6413 = vadd.f32 %v6289, %v6412
      %6414 = vmatmul.f32.gmra.mxu0 %v6299
      %v6415 = vpop.f32.mrf.mxu0
      %v6416 = vadd.f32 %v6289, %v6415
      %6417 = vmatmul.f32.gmra.mxu0 %v6302
      %v6418 = vpop.f32.mrf.mxu0
      %v6419 = vadd.f32 %v6289, %v6418
      %6420 = vmatmul.f32.gmra.mxu0 %v6305
      %v6421 = vpop.f32.mrf.mxu0
      %v6422 = vadd.f32 %v6289, %v6421
      %6423 = vmatmul.f32.gmra.mxu0 %v6308
      %v6424 = vpop.f32.mrf.mxu0
      %v6425 = vadd.f32 %v6289, %v6424
      %6426 = vmatmul.f32.gmra.mxu0 %v6311
      %v6427 = vpop.f32.mrf.mxu0
      %v6428 = vadd.f32 %v6289, %v6427
      %6429 = vmatmul.f32.gmra.mxu0 %v6314
      %v6430 = vpop.f32.mrf.mxu0
      %v6431 = vadd.f32 %v6289, %v6430
      %6432 = vmatmul.f32.gmra.mxu0 %v6317
      %v6433 = vpop.f32.mrf.mxu0
      %v6434 = vadd.f32 %v6289, %v6433
      %6435 = vmatmul.f32.gmra.mxu0 %v6320
      %v6436 = vpop.f32.mrf.mxu0
      %v6437 = vadd.f32 %v6289, %v6436
      %6438 = vmatmul.f32.gmra.mxu0 %v6323
      %v6439 = vpop.f32.mrf.mxu0
      %v6440 = vadd.f32 %v6289, %v6439
      %6441 = vmatmul.f32.gmra.mxu0 %v6326
      %v6442 = vpop.f32.mrf.mxu0
      %v6443 = vadd.f32 %v6289, %v6442
      %6444 = vmatmul.f32.gmra.mxu0 %v6329
      %v6445 = vpop.f32.mrf.mxu0
      %v6446 = vadd.f32 %v6289, %v6445
      %6447 = vmatmul.f32.gmra.mxu0 %v6332
      %v6448 = vpop.f32.mrf.mxu0
      %v6449 = vadd.f32 %v6289, %v6448
      %6450 = vmatmul.f32.gmra.mxu0 %v6335
      %v6451 = vpop.f32.mrf.mxu0
      %v6452 = vadd.f32 %v6289, %v6451
      %6453 = vmatmul.f32.gmra.mxu0 %v6338
      %v6454 = vpop.f32.mrf.mxu0
      %v6455 = vadd.f32 %v6289, %v6454
      %6456 = vmatmul.f32.gmra.mxu0 %v6341
      %v6457 = vpop.f32.mrf.mxu0
      %v6458 = vadd.f32 %v6289, %v6457
      %6459 = vmatmul.f32.gmra.mxu0 %v6344
      %v6460 = vpop.f32.mrf.mxu0
      %v6461 = vadd.f32 %v6289, %v6460
      %6462 = vmatmul.f32.gmra.mxu0 %v6347
      %v6463 = vpop.f32.mrf.mxu0
      %v6464 = vadd.f32 %v6289, %v6463
      %6465 = vmatmul.f32.gmra.mxu0 %v6350
      %v6466 = vpop.f32.mrf.mxu0
      %v6467 = vadd.f32 %v6289, %v6466
      %6468 = vmatmul.f32.gmra.mxu0 %v6353
      %v6469 = vpop.f32.mrf.mxu0
      %v6470 = vadd.f32 %v6289, %v6469
      %6471 = vmatmul.f32.gmra.mxu0 %v6356
      %v6472 = vpop.f32.mrf.mxu0
      %v6473 = vadd.f32 %v6289, %v6472
      %6474 = vmatmul.f32.gmra.mxu0 %v6359
      %v6475 = vpop.f32.mrf.mxu0
      %v6476 = vadd.f32 %v6289, %v6475
      %6477 = vmatmul.f32.gmra.mxu0 %v6362
      %v6478 = vpop.f32.mrf.mxu0
      %v6479 = vadd.f32 %v6289, %v6478
      %6480 = vmatmul.f32.gmra.mxu0 %v6365
      %v6481 = vpop.f32.mrf.mxu0
      %v6482 = vadd.f32 %v6289, %v6481
      %6483 = vmatmul.f32.gmra.mxu0 %v6368
      %v6484 = vpop.f32.mrf.mxu0
      %v6485 = vadd.f32 %v6289, %v6484
      %6486 = vmatmul.f32.gmra.mxu0 %v6371
      %v6487 = vpop.f32.mrf.mxu0
      %v6488 = vadd.f32 %v6289, %v6487
      %6489 = vmatmul.f32.gmra.mxu0 %v6374
      %v6490 = vpop.f32.mrf.mxu0
      %v6491 = vadd.f32 %v6289, %v6490
      %6492 = vmatmul.f32.gmra.mxu0 %v6377
      %v6493 = vpop.f32.mrf.mxu0
      %v6494 = vadd.f32 %v6289, %v6493
      %6495 = vmatmul.f32.gmra.mxu0 %v6380
      %v6496 = vpop.f32.mrf.mxu0
      %v6497 = vadd.f32 %v6289, %v6496
      %6498 = vmatmul.f32.gmra.mxu0 %v6383
      %v6499 = vpop.f32.mrf.mxu0
      %v6500 = vadd.f32 %v6289, %v6499
      %6501 = vmatmul.f32.gmra.mxu0 %v6386
      %v6502 = vpop.f32.mrf.mxu0
      %v6503 = vadd.f32 %v6289, %v6502
      %6504 = vdwg.mxu0
      %v6505 = vmax.f32 %v6410, 0.0
      %v6506 = vmax.f32 %v6413, 0.0
      %v6507 = vmax.f32 %v6416, 0.0
      %v6508 = vmax.f32 %v6419, 0.0
      %v6509 = vmax.f32 %v6422, 0.0
      %v6510 = vmax.f32 %v6425, 0.0
      %v6511 = vmax.f32 %v6428, 0.0
      %v6512 = vmax.f32 %v6431, 0.0
      %v6513 = vmax.f32 %v6434, 0.0
      %v6514 = vmax.f32 %v6437, 0.0
      %v6515 = vmax.f32 %v6440, 0.0
      %v6516 = vmax.f32 %v6443, 0.0
      %v6517 = vmax.f32 %v6446, 0.0
      %v6518 = vmax.f32 %v6449, 0.0
      %v6519 = vmax.f32 %v6452, 0.0
      %v6520 = vmax.f32 %v6455, 0.0
      %v6521 = vmax.f32 %v6458, 0.0
      %v6522 = vmax.f32 %v6461, 0.0
      %v6523 = vmax.f32 %v6464, 0.0
      %v6524 = vmax.f32 %v6467, 0.0
      %v6525 = vmax.f32 %v6470, 0.0
      %v6526 = vmax.f32 %v6473, 0.0
      %v6527 = vmax.f32 %v6476, 0.0
      %v6528 = vmax.f32 %v6479, 0.0
      %v6529 = vmax.f32 %v6482, 0.0
      %v6530 = vmax.f32 %v6485, 0.0
      %v6531 = vmax.f32 %v6488, 0.0
      %v6532 = vmax.f32 %v6491, 0.0
      %v6533 = vmax.f32 %v6494, 0.0
      %v6534 = vmax.f32 %v6497, 0.0
      %v6535 = vmax.f32 %v6500, 0.0
      %v6536 = vmax.f32 %v6503, 0.0
      %6537 = vst.msk [vmem:[%s623] sm:$0xff] %vm4282, %v6505
      %6538 = vst.msk [vmem:[%s623 + $0x8] sm:$0xff] %vm4282, %v6506
      %6539 = vst.msk [vmem:[%s623 + $0x10] sm:$0xff] %vm4282, %v6507
      %6540 = vst.msk [vmem:[%s623 + $0x18] sm:$0xff] %vm4282, %v6508
      %6541 = vst.msk [vmem:[%s623 + $0x20] sm:$0xff] %vm4282, %v6509
      %6542 = vst.msk [vmem:[%s623 + $0x28] sm:$0xff] %vm4282, %v6510
      %6543 = vst.msk [vmem:[%s623 + $0x30] sm:$0xff] %vm4282, %v6511
      %6544 = vst.msk [vmem:[%s623 + $0x38] sm:$0xff] %vm4282, %v6512
      %6545 = vst.msk [vmem:[%s623 + $0x40] sm:$0xff] %vm4282, %v6513
      %6546 = vst.msk [vmem:[%s623 + $0x48] sm:$0xff] %vm4282, %v6514
      %6547 = vst.msk [vmem:[%s623 + $0x50] sm:$0xff] %vm4282, %v6515
      %6548 = vst.msk [vmem:[%s623 + $0x58] sm:$0xff] %vm4282, %v6516
      %6549 = vst.msk [vmem:[%s623 + $0x60] sm:$0xff] %vm4282, %v6517
      %6550 = vst.msk [vmem:[%s623 + $0x68] sm:$0xff] %vm4282, %v6518
      %6551 = vst.msk [vmem:[%s623 + $0x70] sm:$0xff] %vm4282, %v6519
      %6552 = vst.msk [vmem:[%s623 + $0x78] sm:$0xff] %vm4282, %v6520
      %6553 = vst.msk [vmem:[%s623 + $0x80] sm:$0xff] %vm4282, %v6521
      %6554 = vst.msk [vmem:[%s623 + $0x88] sm:$0xff] %vm4282, %v6522
      %6555 = vst.msk [vmem:[%s623 + $0x90] sm:$0xff] %vm4282, %v6523
      %6556 = vst.msk [vmem:[%s623 + $0x98] sm:$0xff] %vm4282, %v6524
      %6557 = vst.msk [vmem:[%s623 + $0xa0] sm:$0xff] %vm4282, %v6525
      %6558 = vst.msk [vmem:[%s623 + $0xa8] sm:$0xff] %vm4282, %v6526
      %6559 = vst.msk [vmem:[%s623 + $0xb0] sm:$0xff] %vm4282, %v6527
      %6560 = vst.msk [vmem:[%s623 + $0xb8] sm:$0xff] %vm4282, %v6528
      %6561 = vst.msk [vmem:[%s623 + $0xc0] sm:$0xff] %vm4282, %v6529
      %6562 = vst.msk [vmem:[%s623 + $0xc8] sm:$0xff] %vm4282, %v6530
      %6563 = vst.msk [vmem:[%s623 + $0xd0] sm:$0xff] %vm4282, %v6531
      %6564 = vst.msk [vmem:[%s623 + $0xd8] sm:$0xff] %vm4282, %v6532
      %6565 = vst.msk [vmem:[%s623 + $0xe0] sm:$0xff] %vm4282, %v6533
      %6566 = vst.msk [vmem:[%s623 + $0xe8] sm:$0xff] %vm4282, %v6534
      %6567 = vst.msk [vmem:[%s623 + $0xf0] sm:$0xff] %vm4282, %v6535
      %6568 = vst.msk [vmem:[%s623 + $0xf8] sm:$0xff] %vm4282, %v6536
      %s6569 = smul.u32 8, %s25
      %p6570 = scmp.lt.s32.totalorder %s24, 1
      %s6571 = scalar_select %p6570, %s24, 1
      %p6572 = scmp.lt.s32.totalorder %s6569, 31
      %s6573 = scalar_select %p6572, %s6569, 31
      %s6574 = smul.addr %s6573, 4
      %s6575 = smul.addr %s6571, 128
      %s6576 = sadd.s32 %s6574, %s6575
      %s6577 = smul.addr %s6576, 8
      %s6578 = scalar_lea.vmem %s9, %s6577
      // Predicated region
      $region57: #{upsample_forward.1} parent=55 // pred_check
        %p6579 = pneg %p308
      $region58: #{upsample_forward.1} parent=55 // pred_check_branch
        %6581 = sbr.rel (%p6579) target = $region60
      $region59: #{upsample_forward.1} parent=55 // pred_region
        %s6582 = smul.u32 8, %s25
      $region60: #{upsample_forward.1} parent=55 // pred_fallthru
        _
    $region56: #{upsample_forward.1} parent=5 // pred_fallthru
      _
    %p6583 = scmp.le.s32.totalorder 2, %s15
    // Predicated region
    $region61: #{upsample_forward.1} parent=5 // pred_check
      %p6584 = pneg %p6583
    $region62: #{upsample_forward.1} parent=5 // pred_check_branch
      %6586 = sbr.rel (%p6584) target = $region64
    $region63: #{upsample_forward.1} parent=5 // pred_region
      %s6587 = ssub.s32 %s15, 2
      // Predicated region
      $region65: #{upsample_forward.1} parent=63 // pred_check
        %p6588 = pneg %p314
      $region66: #{upsample_forward.1} parent=63 // pred_check_branch
        %6590 = sbr.rel (%p6588) target = $region68
      $region67: #{upsample_forward.1} parent=63 // pred_region
        %s6591 = smul.u32 8, %s27
        %p6592 = scmp.lt.s32.totalorder %s26, 1
        %s6593 = scalar_select %p6592, %s26, 1
        %p6594 = scmp.lt.s32.totalorder %s6591, 31
        %s6595 = scalar_select %p6594, %s6591, 31
        %s6596 = smul.addr %s6595, 4
        %s6597 = smul.addr %s6593, 128
        %s6598 = sadd.s32 %s6596, %s6597
        %s6599 = smul.addr %s6598, 8
        %s6600 = scalar_lea.vmem %s9, %s6599
      $region68: #{upsample_forward.1} parent=63 // pred_fallthru
        _
    $region64: #{upsample_forward.1} parent=5 // pred_fallthru
      _
  $region6: #{upsample_forward.1} parent=0 // loop_footer
    %s19 = sadd.s32 1, %s15
  $region7: #{upsample_forward.1} parent=0 // loop_footer_branch
    %14 = sbr.rel target = $region3
  $region8: #{upsample_forward.1} parent=0 // loop_exit
    _

</llo_original>
